<compile_context>
chip_gen: v5e
topology: v5e:2x2
jax: 0.10.0
libtpu: 0.0.40
codegen_flags: <defaults>
</compile_context>

<pallas_src>
import jax
import jax.numpy as jnp
from jax.experimental import pallas as pl
from jax.experimental.pallas import tpu as pltpu

IN_FEATURES = 28 * 28     # 784
HID = 512
OUT_FEATURES = 10
OUT_PAD = 128             # lane-dense output block, slice [:, :10] outside


def _round_up(x, m):
    return (x + m - 1) // m * m


def _pick_batch_tile(b_pad, tb):
    """Largest multiple of 128 that divides b_pad and is <= tb, capped at
    b_pad // 2 (when possible) so the grid has >= 2 steps for v7x's 2 TCs."""
    tb = max(128, (tb // 128) * 128)        # defensive: caller-supplied tb
    cap = min(tb, b_pad)
    if b_pad >= 256:
        cap = min(cap, b_pad // 2)
    best = 128
    t = 128
    while t <= cap:
        if b_pad % t == 0:
            best = t
        t += 128
    return best


def mlp_kernel(x_ref, w0_ref, b0_ref, w1_ref, b1_ref, w2_ref, b2_ref, o_ref):
    # x tile arrives as f32 (no wrapper-side pad/cast copy); cast on-core.
    x = x_ref[...].astype(jnp.bfloat16)
    # fc0 + relu: bf16 operands on the MXU, f32 accumulation, f32 bias/ReLU.
    h = jnp.dot(x, w0_ref[...], preferred_element_type=jnp.float32)
    h = jnp.maximum(h + b0_ref[...], 0.0)
    # fc1 + relu
    h = jnp.dot(h.astype(jnp.bfloat16), w1_ref[...],
                preferred_element_type=jnp.float32)
    h = jnp.maximum(h + b1_ref[...], 0.0)
    # fc2 (no activation), lane-dense (TB, 128) bf16 store
    h = jnp.dot(h.astype(jnp.bfloat16), w2_ref[...],
                preferred_element_type=jnp.float32)
    o_ref[...] = (h + b2_ref[...]).astype(o_ref.dtype)


def prepare_params(params):
    """One-time (outside the jitted forward) pad + bf16-cast of the weights.
    w2/b2 are lane-padded 10 -> 128 with zeros (exact; sliced away later)."""
    w0, b0, w1, b1, w2, b2 = params
    w0_p = w0.astype(jnp.bfloat16)                      # (784, 512)
    w1_p = w1.astype(jnp.bfloat16)                      # (512, 512)
    w2_p = jnp.zeros((HID, OUT_PAD), jnp.bfloat16)
    w2_p = w2_p.at[:, :OUT_FEATURES].set(w2.astype(jnp.bfloat16))
    b0_p = b0.astype(jnp.float32).reshape(1, HID)
    b1_p = b1.astype(jnp.float32).reshape(1, HID)
    b2_p = jnp.zeros((1, OUT_PAD), jnp.float32)
    b2_p = b2_p.at[:, :OUT_FEATURES].set(b2.astype(jnp.float32).reshape(1, -1))
    return (w0_p, b0_p, w1_p, b1_p, w2_p, b2_p)


def mlp_forward(x, prepped_params, tb=1024):
    """x: any shape whose trailing dims flatten to 784 (e.g. [B,1,28,28]).
    prepped_params: output of prepare_params(); returns f32 [B, 10] logits."""
    w0_p, b0_p, w1_p, b1_p, w2_p, b2_p = prepped_params

    x2d = x.reshape(-1, IN_FEATURES)
    B = x2d.shape[0]

    # Pad batch only to a multiple of 128 (not of TB) to minimize zero rows.
    B_pad = _round_up(max(B, 1), 128)
    if B_pad != B:
        x2d = jnp.pad(x2d, ((0, B_pad - B), (0, 0)))

    TB = _pick_batch_tile(B_pad, tb)
    grid = (B_pad // TB,)

    out = pl.pallas_call(
        mlp_kernel,
        out_shape=jax.ShapeDtypeStruct((B_pad, OUT_PAD), jnp.bfloat16),
        grid_spec=pltpu.PrefetchScalarGridSpec(
            num_scalar_prefetch=0,
            grid=grid,
            in_specs=[
                # x tile: full-extent 784 last dim (== array dim, legal),
                # streamed per batch tile.
                pl.BlockSpec((TB, IN_FEATURES), lambda i: (i, 0)),
                pl.BlockSpec((IN_FEATURES, HID), lambda i: (0, 0)),  # w0 resident
                pl.BlockSpec((1, HID), lambda i: (0, 0)),            # b0 resident
                pl.BlockSpec((HID, HID), lambda i: (0, 0)),          # w1 resident
                pl.BlockSpec((1, HID), lambda i: (0, 0)),            # b1 resident
                pl.BlockSpec((HID, OUT_PAD), lambda i: (0, 0)),      # w2 resident
                pl.BlockSpec((1, OUT_PAD), lambda i: (0, 0)),        # b2 resident
            ],
            out_specs=pl.BlockSpec((TB, OUT_PAD), lambda i: (i, 0)),
        ),
        compiler_params=pltpu.CompilerParams(
            # batch axis -> megacore / v7x 2-TC sharding
            dimension_semantics=("parallel",),
            # headroom above v5e's 16 MiB scoped default; still < v7x physical
            vmem_limit_bytes=48 * 1024 * 1024,
        ),
    )(x2d, w0_p, b0_p, w1_p, b1_p, w2_p, b2_p)

    # Slice away batch padding and the fc2 lane padding; return f32 logits.
    return out[:B, :OUT_FEATURES].astype(jnp.float32)


def init_params(key):
    """Deterministic init mimicking PyTorch's default Linear init:
    U(-1/sqrt(fan_in), 1/sqrt(fan_in)) for both weight and bias.
    Weights stored as [in, out] so the kernel computes x @ W + b."""
    dims = [(IN_FEATURES, HID), (HID, HID), (HID, OUT_FEATURES)]
    params = []
    for (fan_in, fan_out) in dims:
        key, kw, kb = jax.random.split(key, 3)
        bound = 1.0 / jnp.sqrt(jnp.float32(fan_in))
        w = jax.random.uniform(kw, (fan_in, fan_out), jnp.float32, -bound, bound)
        b = jax.random.uniform(kb, (1, fan_out), jnp.float32, -bound, bound)
        params += [w, b]
    return tuple(params)


def ref_forward(x, params):
    """Pure-JAX reference with the same numerics as the kernel
    (bf16 operands, f32 accumulation)."""
    w0, b0, w1, b1, w2, b2 = params
    xf = x.reshape(-1, IN_FEATURES).astype(jnp.bfloat16)
    h = jnp.dot(xf, w0.astype(jnp.bfloat16),
                preferred_element_type=jnp.float32) + b0
    h = jnp.maximum(h, 0.0)
    h = jnp.dot(h.astype(jnp.bfloat16), w1.astype(jnp.bfloat16),
                preferred_element_type=jnp.float32) + b1
    h = jnp.maximum(h, 0.0)
    h = jnp.dot(h.astype(jnp.bfloat16), w2.astype(jnp.bfloat16),
                preferred_element_type=jnp.float32) + b2
    return h


if __name__ == "__main__":
    key = jax.random.PRNGKey(0)
    key, kx = jax.random.split(key)

    # Small MNIST-like batch: [B, 1, 28, 28] (NCHW), flattened inside wrapper.
    x = jax.random.normal(kx, (2, 1, 28, 28), jnp.float32)
    params = init_params(key)

    # One-time weight prep (pad + bf16 cast) hoisted out of the forward pass.
    prepped = prepare_params(params)

    fwd = jax.jit(mlp_forward)
    out = jax.block_until_ready(fwd(x, prepped))

    ref = ref_forward(x, params)
    assert out.shape == (2, OUT_FEATURES)
    assert jnp.allclose(out, ref, atol=1e-2, rtol=1e-2), (
        f"max abs diff {jnp.max(jnp.abs(out - ref))}")

    print("KERNEL_OK")
</pallas_src>

<mosaic_0001>
module attributes {stable_mosaic.version = 11 : i64} {
  func.func @mlp_kernel(%arg0: i32, %arg1: memref<128x784xf32, #tpu.memory_space<vmem>>, %arg2: memref<784x512xbf16, #tpu.memory_space<vmem>>, %arg3: memref<1x512xf32, #tpu.memory_space<vmem>>, %arg4: memref<512x512xbf16, #tpu.memory_space<vmem>>, %arg5: memref<1x512xf32, #tpu.memory_space<vmem>>, %arg6: memref<512x128xbf16, #tpu.memory_space<vmem>>, %arg7: memref<1x128xf32, #tpu.memory_space<vmem>>, %arg8: memref<128x128xbf16, #tpu.memory_space<vmem>>) attributes {dimension_semantics = [#tpu.dimension_semantics<parallel>], iteration_bounds = array<i64: 1>, scalar_prefetch = 0 : i64, scratch_operands = 0 : i64, tpu.core_type = #tpu.core_type<tc>, window_params = [{transform_indices = @transform_0, window_bounds = array<i64: 128, 784>}, {pipeline_mode = #tpu.pipeline_mode<synchronous>, transform_indices = @transform_1, window_bounds = array<i64: 784, 512>}, {pipeline_mode = #tpu.pipeline_mode<synchronous>, transform_indices = @transform_2, window_bounds = array<i64: 1, 512>}, {pipeline_mode = #tpu.pipeline_mode<synchronous>, transform_indices = @transform_3, window_bounds = array<i64: 512, 512>}, {pipeline_mode = #tpu.pipeline_mode<synchronous>, transform_indices = @transform_4, window_bounds = array<i64: 1, 512>}, {pipeline_mode = #tpu.pipeline_mode<synchronous>, transform_indices = @transform_5, window_bounds = array<i64: 512, 128>}, {pipeline_mode = #tpu.pipeline_mode<synchronous>, transform_indices = @transform_6, window_bounds = array<i64: 1, 128>}, {transform_indices = @transform_7, window_bounds = array<i64: 128, 128>}]} {
    %c0 = arith.constant 0 : index
    %c0_0 = arith.constant 0 : index
    %0 = vector.load %arg1[%c0, %c0_0] : memref<128x784xf32, #tpu.memory_space<vmem>>, vector<128x784xf32>
    %1 = arith.truncf %0 : vector<128x784xf32> to vector<128x784xbf16>
    %c0_1 = arith.constant 0 : index
    %c0_2 = arith.constant 0 : index
    %2 = vector.load %arg2[%c0_1, %c0_2] : memref<784x512xbf16, #tpu.memory_space<vmem>>, vector<784x512xbf16>
    %cst = arith.constant dense<0.000000e+00> : vector<128x512xf32>
    %3 = tpu.matmul %1, %2, %cst {dimension_numbers = #tpu.dot_dimension_numbers<[1], [0], [0], [1], [0, 0, 1, 1], [], []>} : vector<128x784xbf16>, vector<784x512xbf16>, vector<128x512xf32> -> vector<128x512xf32>
    %c0_3 = arith.constant 0 : index
    %c0_4 = arith.constant 0 : index
    %4 = vector.load %arg3[%c0_3, %c0_4] : memref<1x512xf32, #tpu.memory_space<vmem>>, vector<1x512xf32>
    %5 = vector.broadcast %4 : vector<1x512xf32> to vector<128x512xf32>
    %6 = arith.addf %3, %5 : vector<128x512xf32>
    %cst_5 = arith.constant 0.000000e+00 : f32
    %7 = vector.broadcast %cst_5 : f32 to vector<128x512xf32>
    %8 = arith.maximumf %6, %7 : vector<128x512xf32>
    %9 = arith.truncf %8 : vector<128x512xf32> to vector<128x512xbf16>
    %c0_6 = arith.constant 0 : index
    %c0_7 = arith.constant 0 : index
    %10 = vector.load %arg4[%c0_6, %c0_7] : memref<512x512xbf16, #tpu.memory_space<vmem>>, vector<512x512xbf16>
    %cst_8 = arith.constant dense<0.000000e+00> : vector<128x512xf32>
    %11 = tpu.matmul %9, %10, %cst_8 {dimension_numbers = #tpu.dot_dimension_numbers<[1], [0], [0], [1], [0, 0, 1, 1], [], []>} : vector<128x512xbf16>, vector<512x512xbf16>, vector<128x512xf32> -> vector<128x512xf32>
    %c0_9 = arith.constant 0 : index
    %c0_10 = arith.constant 0 : index
    %12 = vector.load %arg5[%c0_9, %c0_10] : memref<1x512xf32, #tpu.memory_space<vmem>>, vector<1x512xf32>
    %13 = vector.broadcast %12 : vector<1x512xf32> to vector<128x512xf32>
    %14 = arith.addf %11, %13 : vector<128x512xf32>
    %cst_11 = arith.constant 0.000000e+00 : f32
    %15 = vector.broadcast %cst_11 : f32 to vector<128x512xf32>
    %16 = arith.maximumf %14, %15 : vector<128x512xf32>
    %17 = arith.truncf %16 : vector<128x512xf32> to vector<128x512xbf16>
    %c0_12 = arith.constant 0 : index
    %c0_13 = arith.constant 0 : index
    %18 = vector.load %arg6[%c0_12, %c0_13] : memref<512x128xbf16, #tpu.memory_space<vmem>>, vector<512x128xbf16>
    %cst_14 = arith.constant dense<0.000000e+00> : vector<128x128xf32>
    %19 = tpu.matmul %17, %18, %cst_14 {dimension_numbers = #tpu.dot_dimension_numbers<[1], [0], [0], [1], [0, 0, 1, 1], [], []>} : vector<128x512xbf16>, vector<512x128xbf16>, vector<128x128xf32> -> vector<128x128xf32>
    %c0_15 = arith.constant 0 : index
    %c0_16 = arith.constant 0 : index
    %20 = vector.load %arg7[%c0_15, %c0_16] : memref<1x128xf32, #tpu.memory_space<vmem>>, vector<1x128xf32>
    %21 = vector.broadcast %20 : vector<1x128xf32> to vector<128x128xf32>
    %22 = arith.addf %19, %21 : vector<128x128xf32>
    %23 = arith.truncf %22 : vector<128x128xf32> to vector<128x128xbf16>
    %c0_17 = arith.constant 0 : index
    %c0_18 = arith.constant 0 : index
    %24 = vector.load %arg8[%c0_17, %c0_18] : memref<128x128xbf16, #tpu.memory_space<vmem>>, vector<128x128xbf16>
    tpu.vector_store %arg8[%c0_17, %c0_18], %23 {strides = array<i32>} : memref<128x128xbf16, #tpu.memory_space<vmem>>, vector<128x128xbf16>,
    return
  }
  func.func @transform_0(%arg0: i32) -> (i32, i32) {
    %c0_i32 = arith.constant 0 : i32
    %c0_i32_0 = arith.constant 0 : i32
    return %arg0, %c0_i32 : i32, i32
  }
  func.func @transform_1(%arg0: i32) -> (i32, i32) {
    %c0_i32 = arith.constant 0 : i32
    %c0_i32_0 = arith.constant 0 : i32
    %c0_i32_1 = arith.constant 0 : i32
    return %c0_i32, %c0_i32_0 : i32, i32
  }
  func.func @transform_2(%arg0: i32) -> (i32, i32) {
    %c0_i32 = arith.constant 0 : i32
    %c0_i32_0 = arith.constant 0 : i32
    %c0_i32_1 = arith.constant 0 : i32
    return %c0_i32, %c0_i32_0 : i32, i32
  }
  func.func @transform_3(%arg0: i32) -> (i32, i32) {
    %c0_i32 = arith.constant 0 : i32
    %c0_i32_0 = arith.constant 0 : i32
    %c0_i32_1 = arith.constant 0 : i32
    return %c0_i32, %c0_i32_0 : i32, i32
  }
  func.func @transform_4(%arg0: i32) -> (i32, i32) {
    %c0_i32 = arith.constant 0 : i32
    %c0_i32_0 = arith.constant 0 : i32
    %c0_i32_1 = arith.constant 0 : i32
    return %c0_i32, %c0_i32_0 : i32, i32
  }
  func.func @transform_5(%arg0: i32) -> (i32, i32) {
    %c0_i32 = arith.constant 0 : i32
    %c0_i32_0 = arith.constant 0 : i32
    %c0_i32_1 = arith.constant 0 : i32
    return %c0_i32, %c0_i32_0 : i32, i32
  }
  func.func @transform_6(%arg0: i32) -> (i32, i32) {
    %c0_i32 = arith.constant 0 : i32
    %c0_i32_0 = arith.constant 0 : i32
    %c0_i32_1 = arith.constant 0 : i32
    return %c0_i32, %c0_i32_0 : i32, i32
  }
  func.func @transform_7(%arg0: i32) -> (i32, i32) {
    %c0_i32 = arith.constant 0 : i32
    %c0_i32_0 = arith.constant 0 : i32
    return %arg0, %c0_i32 : i32, i32
  }
}

</mosaic_0001>

<llo_original>
// kernel: mlp_forward.1
$region0: #{mlp_forward.1}
  #allocation0 [shape = 'u32[]', space=smem, size = 0x4, offset = 0x4, fixed_abs, tag = 'smem constant byte address 0x4 - core index']
  #allocation1 [shape = 'u32[72,128]{1,0:T(1,128)}', space=vmem, size = 0x9000, scoped, tag = 'internal scratch']
  %s0 = inlined_call_operand.vmem [shape: f32[128,784], index: 0, kind: input, shape index: {}]
  %s1 = inlined_call_operand.hbm [shape: bf16[784,512], index: 1, kind: input, shape index: {}]
  %s2 = inlined_call_operand.vmem [shape: f32[1,512], index: 2, kind: input, shape index: {}]
  %s3 = inlined_call_operand.vmem [shape: bf16[512,512], index: 3, kind: input, shape index: {}]
  %s4 = inlined_call_operand.vmem [shape: f32[1,512], index: 4, kind: input, shape index: {}]
  %s5 = inlined_call_operand.hbm [shape: bf16[512,128], index: 5, kind: input, shape index: {}]
  %s6 = inlined_call_operand.vmem [shape: f32[1,128], index: 6, kind: input, shape index: {}]
  %s7 = inlined_call_operand.vmem [shape: bf16[128,128], index: 7, kind: output, shape index: {}]
  %s8 = sld [smem:[#allocation0]]
  $region46: #{mlp_forward.1} parent=0
    _
  %s10 = ssub.s32 1, %s8
  %s11 = scalar_select 0, %s10, %s8
  $region1: #{mlp_forward.1} parent=0
    #allocation2 [shape = 'u8[802816]{0}', space=vmem, size = 0xc4000, scoped, tag = 'input window, operand 1, single buffered']
    #allocation3 [shape = 's32[1]{0}', space=sflag, size = 0x4, scoped, tag = 'scoped memory for mlp_forward.1']
    #allocation4 [shape = 'u8[131072]{0}', space=vmem, size = 0x20000, scoped, tag = 'input window, operand 5, single buffered']
    #allocation5 [shape = 's32[1]{0}', space=sflag, size = 0x4, scoped, tag = 'scoped memory for mlp_forward.1']
    %12 = vsyncpa [#allocation3], 0
    %13 = vsyncpa [#allocation5], 0
    // Predicated region
    $region2: #{mlp_forward.1} parent=1 // pred_check
      _
    $region3: #{mlp_forward.1} parent=1 // pred_check_branch
      %15 = sbr.rel (0) target = $region5
    $region4: #{mlp_forward.1} parent=1 // pred_region
      _
    $region5: #{mlp_forward.1} parent=1 // pred_fallthru
      _
    // Predicated region
    $region6: #{mlp_forward.1} parent=1 // pred_check
      _
    $region7: #{mlp_forward.1} parent=1 // pred_check_branch
      %17 = sbr.rel (0) target = $region9
    $region8: #{mlp_forward.1} parent=1 // pred_region
      %19 = vsyncadd [#allocation3], 0
      %s20 = sshll.u32 %s1, 4
      %s21 = int_to_ptr.hbm [resolvable:$true] %s20
      %s22 = sshll.u32 [#allocation2], 4
      %s23 = int_to_ptr.vmem [resolvable:$true] %s22
      %28 = dma.hbm_to_vmem [thread:$0]  %s21, 25088, %s23, [#allocation3], 256, 256, 16
    $region9: #{mlp_forward.1} parent=1 // pred_fallthru
      _
    // Predicated region
    $region10: #{mlp_forward.1} parent=1 // pred_check
      _
    $region11: #{mlp_forward.1} parent=1 // pred_check_branch
      %30 = sbr.rel (0) target = $region13
    $region12: #{mlp_forward.1} parent=1 // pred_region
      _
    $region13: #{mlp_forward.1} parent=1 // pred_fallthru
      _
    // Predicated region
    $region14: #{mlp_forward.1} parent=1 // pred_check
      _
    $region15: #{mlp_forward.1} parent=1 // pred_check_branch
      %32 = sbr.rel (0) target = $region17
    $region16: #{mlp_forward.1} parent=1 // pred_region
      _
    $region17: #{mlp_forward.1} parent=1 // pred_fallthru
      _
    // Predicated region
    $region18: #{mlp_forward.1} parent=1 // pred_check
      _
    $region19: #{mlp_forward.1} parent=1 // pred_check_branch
      %34 = sbr.rel (0) target = $region21
    $region20: #{mlp_forward.1} parent=1 // pred_region
      _
    $region21: #{mlp_forward.1} parent=1 // pred_fallthru
      _
    // Predicated region
    $region22: #{mlp_forward.1} parent=1 // pred_check
      _
    $region23: #{mlp_forward.1} parent=1 // pred_check_branch
      %36 = sbr.rel (0) target = $region25
    $region24: #{mlp_forward.1} parent=1 // pred_region
      %38 = vsyncadd [#allocation5], 0
      %s39 = sshll.u32 %s5, 4
      %s40 = int_to_ptr.hbm [resolvable:$true] %s39
      %s41 = sshll.u32 [#allocation4], 4
      %s42 = int_to_ptr.vmem [resolvable:$true] %s41
      %47 = dma.hbm_to_vmem [thread:$0]  %s40, 4096, %s42, [#allocation5], 64, 64, 4
    $region25: #{mlp_forward.1} parent=1 // pred_fallthru
      _
    // Predicated region
    $region26: #{mlp_forward.1} parent=1 // pred_check
      _
    $region27: #{mlp_forward.1} parent=1 // pred_check_branch
      %49 = sbr.rel (0) target = $region29
    $region28: #{mlp_forward.1} parent=1 // pred_region
      _
    $region29: #{mlp_forward.1} parent=1 // pred_fallthru
      _
    // Predicated region
    $region30: #{mlp_forward.1} parent=1 // pred_check
      _
    $region31: #{mlp_forward.1} parent=1 // pred_check_branch
      %51 = sbr.rel (0) target = $region33
    $region32: #{mlp_forward.1} parent=1 // pred_region
      %53 = dma.done [#allocation3], 25088
    $region33: #{mlp_forward.1} parent=1 // pred_fallthru
      _
    // Predicated region
    $region34: #{mlp_forward.1} parent=1 // pred_check
      _
    $region35: #{mlp_forward.1} parent=1 // pred_check_branch
      %55 = sbr.rel (0) target = $region37
    $region36: #{mlp_forward.1} parent=1 // pred_region
      %57 = dma.done [#allocation5], 4096
    $region37: #{mlp_forward.1} parent=1 // pred_fallthru
      _
    %v59 = vld [vmem:[%s0] sm:$0xff]
    %v60 = vld [vmem:[%s0 + $0x8] sm:$0xff]
    %v61 = vld [vmem:[%s0 + $0x10] sm:$0xff]
    %v62 = vld [vmem:[%s0 + $0x18] sm:$0xff]
    %v63 = vld [vmem:[%s0 + $0x20] sm:$0xff]
    %v64 = vld [vmem:[%s0 + $0x28] sm:$0xff]
    %v65 = vld [vmem:[%s0 + $0x30] sm:$0xff]
    %v66 = vld [vmem:[%s0 + $0x38] sm:$0xff]
    %v67 = vld [vmem:[%s0 + $0x40] sm:$0xff]
    %v68 = vld [vmem:[%s0 + $0x48] sm:$0xff]
    %v69 = vld [vmem:[%s0 + $0x50] sm:$0xff]
    %v70 = vld [vmem:[%s0 + $0x58] sm:$0xff]
    %v71 = vld [vmem:[%s0 + $0x60] sm:$0xff]
    %v72 = vld [vmem:[%s0 + $0x68] sm:$0xff]
    %v73 = vld [vmem:[%s0 + $0x70] sm:$0xff]
    %v74 = vld [vmem:[%s0 + $0x78] sm:$0xff]
    %v75 = vld [vmem:[%s0 + $0x80] sm:$0xff]
    %v76 = vld [vmem:[%s0 + $0x88] sm:$0xff]
    %v77 = vld [vmem:[%s0 + $0x90] sm:$0xff]
    %v78 = vld [vmem:[%s0 + $0x98] sm:$0xff]
    %v79 = vld [vmem:[%s0 + $0xa0] sm:$0xff]
    %v80 = vld [vmem:[%s0 + $0xa8] sm:$0xff]
    %v81 = vld [vmem:[%s0 + $0xb0] sm:$0xff]
    %v82 = vld [vmem:[%s0 + $0xb8] sm:$0xff]
    %v83 = vld [vmem:[%s0 + $0xc0] sm:$0xff]
    %v84 = vld [vmem:[%s0 + $0xc8] sm:$0xff]
    %v85 = vld [vmem:[%s0 + $0xd0] sm:$0xff]
    %v86 = vld [vmem:[%s0 + $0xd8] sm:$0xff]
    %v87 = vld [vmem:[%s0 + $0xe0] sm:$0xff]
    %v88 = vld [vmem:[%s0 + $0xe8] sm:$0xff]
    %v89 = vld [vmem:[%s0 + $0xf0] sm:$0xff]
    %v90 = vld [vmem:[%s0 + $0xf8] sm:$0xff]
    %v91 = vld [vmem:[%s0 + $0x100] sm:$0xff]
    %v92 = vld [vmem:[%s0 + $0x108] sm:$0xff]
    %v93 = vld [vmem:[%s0 + $0x110] sm:$0xff]
    %v94 = vld [vmem:[%s0 + $0x118] sm:$0xff]
    %v95 = vld [vmem:[%s0 + $0x120] sm:$0xff]
    %v96 = vld [vmem:[%s0 + $0x128] sm:$0xff]
    %v97 = vld [vmem:[%s0 + $0x130] sm:$0xff]
    %v98 = vld [vmem:[%s0 + $0x138] sm:$0xff]
    %v99 = vld [vmem:[%s0 + $0x140] sm:$0xff]
    %v100 = vld [vmem:[%s0 + $0x148] sm:$0xff]
    %v101 = vld [vmem:[%s0 + $0x150] sm:$0xff]
    %v102 = vld [vmem:[%s0 + $0x158] sm:$0xff]
    %v103 = vld [vmem:[%s0 + $0x160] sm:$0xff]
    %v104 = vld [vmem:[%s0 + $0x168] sm:$0xff]
    %v105 = vld [vmem:[%s0 + $0x170] sm:$0xff]
    %v106 = vld [vmem:[%s0 + $0x178] sm:$0xff]
    %v107 = vld [vmem:[%s0 + $0x180] sm:$0xff]
    %v108 = vld [vmem:[%s0 + $0x188] sm:$0xff]
    %v109 = vld [vmem:[%s0 + $0x190] sm:$0xff]
    %v110 = vld [vmem:[%s0 + $0x198] sm:$0xff]
    %v111 = vld [vmem:[%s0 + $0x1a0] sm:$0xff]
    %v112 = vld [vmem:[%s0 + $0x1a8] sm:$0xff]
    %v113 = vld [vmem:[%s0 + $0x1b0] sm:$0xff]
    %v114 = vld [vmem:[%s0 + $0x1b8] sm:$0xff]
    %v115 = vld [vmem:[%s0 + $0x1c0] sm:$0xff]
    %v116 = vld [vmem:[%s0 + $0x1c8] sm:$0xff]
    %v117 = vld [vmem:[%s0 + $0x1d0] sm:$0xff]
    %v118 = vld [vmem:[%s0 + $0x1d8] sm:$0xff]
    %v119 = vld [vmem:[%s0 + $0x1e0] sm:$0xff]
    %v120 = vld [vmem:[%s0 + $0x1e8] sm:$0xff]
    %v121 = vld [vmem:[%s0 + $0x1f0] sm:$0xff]
    %v122 = vld [vmem:[%s0 + $0x1f8] sm:$0xff]
    %v123 = vld [vmem:[%s0 + $0x200] sm:$0xff]
    %v124 = vld [vmem:[%s0 + $0x208] sm:$0xff]
    %v125 = vld [vmem:[%s0 + $0x210] sm:$0xff]
    %v126 = vld [vmem:[%s0 + $0x218] sm:$0xff]
    %v127 = vld [vmem:[%s0 + $0x220] sm:$0xff]
    %v128 = vld [vmem:[%s0 + $0x228] sm:$0xff]
    %v129 = vld [vmem:[%s0 + $0x230] sm:$0xff]
    %v130 = vld [vmem:[%s0 + $0x238] sm:$0xff]
    %v131 = vld [vmem:[%s0 + $0x240] sm:$0xff]
    %v132 = vld [vmem:[%s0 + $0x248] sm:$0xff]
    %v133 = vld [vmem:[%s0 + $0x250] sm:$0xff]
    %v134 = vld [vmem:[%s0 + $0x258] sm:$0xff]
    %v135 = vld [vmem:[%s0 + $0x260] sm:$0xff]
    %v136 = vld [vmem:[%s0 + $0x268] sm:$0xff]
    %v137 = vld [vmem:[%s0 + $0x270] sm:$0xff]
    %v138 = vld [vmem:[%s0 + $0x278] sm:$0xff]
    %v139 = vld [vmem:[%s0 + $0x280] sm:$0xff]
    %v140 = vld [vmem:[%s0 + $0x288] sm:$0xff]
    %v141 = vld [vmem:[%s0 + $0x290] sm:$0xff]
    %v142 = vld [vmem:[%s0 + $0x298] sm:$0xff]
    %v143 = vld [vmem:[%s0 + $0x2a0] sm:$0xff]
    %v144 = vld [vmem:[%s0 + $0x2a8] sm:$0xff]
    %v145 = vld [vmem:[%s0 + $0x2b0] sm:$0xff]
    %v146 = vld [vmem:[%s0 + $0x2b8] sm:$0xff]
    %v147 = vld [vmem:[%s0 + $0x2c0] sm:$0xff]
    %v148 = vld [vmem:[%s0 + $0x2c8] sm:$0xff]
    %v149 = vld [vmem:[%s0 + $0x2d0] sm:$0xff]
    %v150 = vld [vmem:[%s0 + $0x2d8] sm:$0xff]
    %v151 = vld [vmem:[%s0 + $0x2e0] sm:$0xff]
    %v152 = vld [vmem:[%s0 + $0x2e8] sm:$0xff]
    %v153 = vld [vmem:[%s0 + $0x2f0] sm:$0xff]
    %v154 = vld [vmem:[%s0 + $0x2f8] sm:$0xff]
    %v155 = vld [vmem:[%s0 + $0x300] sm:$0xff]
    %v156 = vld [vmem:[%s0 + $0x308] sm:$0xff]
    %v157 = vld [vmem:[%s0 + $0x310] sm:$0xff]
    %v158 = vld [vmem:[%s0 + $0x318] sm:$0xff]
    %v159 = vld [vmem:[%s0 + $0x320] sm:$0xff]
    %v160 = vld [vmem:[%s0 + $0x328] sm:$0xff]
    %v161 = vld [vmem:[%s0 + $0x330] sm:$0xff]
    %v162 = vld [vmem:[%s0 + $0x338] sm:$0xff]
    %v163 = vld [vmem:[%s0 + $0x340] sm:$0xff]
    %v164 = vld [vmem:[%s0 + $0x348] sm:$0xff]
    %v165 = vld [vmem:[%s0 + $0x350] sm:$0xff]
    %v166 = vld [vmem:[%s0 + $0x358] sm:$0xff]
    %v167 = vld [vmem:[%s0 + $0x360] sm:$0xff]
    %v168 = vld [vmem:[%s0 + $0x368] sm:$0xff]
    %v169 = vld [vmem:[%s0 + $0x370] sm:$0xff]
    %v170 = vld [vmem:[%s0 + $0x378] sm:$0xff]
    %v171 = vpack.c.bf16 %v66, %v59
    %v172 = vpack.c.bf16 %v67, %v60
    %v173 = vpack.c.bf16 %v68, %v61
    %v174 = vpack.c.bf16 %v69, %v62
    %v175 = vpack.c.bf16 %v70, %v63
    %v176 = vpack.c.bf16 %v71, %v64
    %v177 = vpack.c.bf16 %v72, %v65
    %v178 = vpack.c.bf16 %v80, %v73
    %v179 = vpack.c.bf16 %v81, %v74
    %v180 = vpack.c.bf16 %v82, %v75
    %v181 = vpack.c.bf16 %v83, %v76
    %v182 = vpack.c.bf16 %v84, %v77
    %v183 = vpack.c.bf16 %v85, %v78
    %v184 = vpack.c.bf16 %v86, %v79
    %v185 = vpack.c.bf16 %v94, %v87
    %v186 = vpack.c.bf16 %v95, %v88
    %v187 = vpack.c.bf16 %v96, %v89
    %v188 = vpack.c.bf16 %v97, %v90
    %v189 = vpack.c.bf16 %v98, %v91
    %v190 = vpack.c.bf16 %v99, %v92
    %v191 = vpack.c.bf16 %v100, %v93
    %v192 = vpack.c.bf16 %v108, %v101
    %v193 = vpack.c.bf16 %v109, %v102
    %v194 = vpack.c.bf16 %v110, %v103
    %v195 = vpack.c.bf16 %v111, %v104
    %v196 = vpack.c.bf16 %v112, %v105
    %v197 = vpack.c.bf16 %v113, %v106
    %v198 = vpack.c.bf16 %v114, %v107
    %v199 = vpack.c.bf16 %v122, %v115
    %v200 = vpack.c.bf16 %v123, %v116
    %v201 = vpack.c.bf16 %v124, %v117
    %v202 = vpack.c.bf16 %v125, %v118
    %v203 = vpack.c.bf16 %v126, %v119
    %v204 = vpack.c.bf16 %v127, %v120
    %v205 = vpack.c.bf16 %v128, %v121
    %v206 = vpack.c.bf16 %v136, %v129
    %v207 = vpack.c.bf16 %v137, %v130
    %v208 = vpack.c.bf16 %v138, %v131
    %v209 = vpack.c.bf16 %v139, %v132
    %v210 = vpack.c.bf16 %v140, %v133
    %v211 = vpack.c.bf16 %v141, %v134
    %v212 = vpack.c.bf16 %v142, %v135
    %v213 = vpack.c.bf16 %v150, %v143
    %v214 = vpack.c.bf16 %v151, %v144
    %v215 = vpack.c.bf16 %v152, %v145
    %v216 = vpack.c.bf16 %v153, %v146
    %v217 = vpack.c.bf16 %v154, %v147
    %v218 = vpack.c.bf16 %v155, %v148
    %v219 = vpack.c.bf16 %v156, %v149
    %v220 = vpack.c.bf16 %v164, %v157
    %v221 = vpack.c.bf16 %v165, %v158
    %v222 = vpack.c.bf16 %v166, %v159
    %v223 = vpack.c.bf16 %v167, %v160
    %v224 = vpack.c.bf16 %v168, %v161
    %v225 = vpack.c.bf16 %v169, %v162
    %v226 = vpack.c.bf16 %v170, %v163
    %v227 = vld [vmem:[#allocation2] sm:$0xff]
    %v228 = vld [vmem:[#allocation2 + $0x8] sm:$0xff]
    %v229 = vld [vmem:[#allocation2 + $0x10] sm:$0xff]
    %v230 = vld [vmem:[#allocation2 + $0x18] sm:$0xff]
    %v231 = vld [vmem:[#allocation2 + $0x20] sm:$0xff]
    %v232 = vld [vmem:[#allocation2 + $0x28] sm:$0xff]
    %v233 = vld [vmem:[#allocation2 + $0x30] sm:$0xff]
    %v234 = vld [vmem:[#allocation2 + $0x38] sm:$0xff]
    %v235 = vld [vmem:[#allocation2 + $0x40] sm:$0xff]
    %v236 = vld [vmem:[#allocation2 + $0x48] sm:$0xff]
    %v237 = vld [vmem:[#allocation2 + $0x50] sm:$0xff]
    %v238 = vld [vmem:[#allocation2 + $0x58] sm:$0xff]
    %v239 = vld [vmem:[#allocation2 + $0x60] sm:$0xff]
    %v240 = vld [vmem:[#allocation2 + $0x68] sm:$0xff]
    %v241 = vld [vmem:[#allocation2 + $0x70] sm:$0xff]
    %v242 = vld [vmem:[#allocation2 + $0x78] sm:$0xff]
    %v243 = vld [vmem:[#allocation2 + $0x80] sm:$0xff]
    %v244 = vld [vmem:[#allocation2 + $0x88] sm:$0xff]
    %v245 = vld [vmem:[#allocation2 + $0x90] sm:$0xff]
    %v246 = vld [vmem:[#allocation2 + $0x98] sm:$0xff]
    %v247 = vld [vmem:[#allocation2 + $0xa0] sm:$0xff]
    %v248 = vld [vmem:[#allocation2 + $0xa8] sm:$0xff]
    %v249 = vld [vmem:[#allocation2 + $0xb0] sm:$0xff]
    %v250 = vld [vmem:[#allocation2 + $0xb8] sm:$0xff]
    %v251 = vld [vmem:[#allocation2 + $0xc0] sm:$0xff]
    %v252 = vld [vmem:[#allocation2 + $0xc8] sm:$0xff]
    %v253 = vld [vmem:[#allocation2 + $0xd0] sm:$0xff]
    %v254 = vld [vmem:[#allocation2 + $0xd8] sm:$0xff]
    %v255 = vld [vmem:[#allocation2 + $0xe0] sm:$0xff]
    %v256 = vld [vmem:[#allocation2 + $0xe8] sm:$0xff]
    %v257 = vld [vmem:[#allocation2 + $0xf0] sm:$0xff]
    %v258 = vld [vmem:[#allocation2 + $0xf8] sm:$0xff]
    %v259 = vld [vmem:[#allocation2 + $0x100] sm:$0xff]
    %v260 = vld [vmem:[#allocation2 + $0x108] sm:$0xff]
    %v261 = vld [vmem:[#allocation2 + $0x110] sm:$0xff]
    %v262 = vld [vmem:[#allocation2 + $0x118] sm:$0xff]
    %v263 = vld [vmem:[#allocation2 + $0x120] sm:$0xff]
    %v264 = vld [vmem:[#allocation2 + $0x128] sm:$0xff]
    %v265 = vld [vmem:[#allocation2 + $0x130] sm:$0xff]
    %v266 = vld [vmem:[#allocation2 + $0x138] sm:$0xff]
    %v267 = vld [vmem:[#allocation2 + $0x140] sm:$0xff]
    %v268 = vld [vmem:[#allocation2 + $0x148] sm:$0xff]
    %v269 = vld [vmem:[#allocation2 + $0x150] sm:$0xff]
    %v270 = vld [vmem:[#allocation2 + $0x158] sm:$0xff]
    %v271 = vld [vmem:[#allocation2 + $0x160] sm:$0xff]
    %v272 = vld [vmem:[#allocation2 + $0x168] sm:$0xff]
    %v273 = vld [vmem:[#allocation2 + $0x170] sm:$0xff]
    %v274 = vld [vmem:[#allocation2 + $0x178] sm:$0xff]
    %v275 = vld [vmem:[#allocation2 + $0x180] sm:$0xff]
    %v276 = vld [vmem:[#allocation2 + $0x188] sm:$0xff]
    %v277 = vld [vmem:[#allocation2 + $0x190] sm:$0xff]
    %v278 = vld [vmem:[#allocation2 + $0x198] sm:$0xff]
    %v279 = vld [vmem:[#allocation2 + $0x1a0] sm:$0xff]
    %v280 = vld [vmem:[#allocation2 + $0x1a8] sm:$0xff]
    %v281 = vld [vmem:[#allocation2 + $0x1b0] sm:$0xff]
    %v282 = vld [vmem:[#allocation2 + $0x1b8] sm:$0xff]
    %v283 = vld [vmem:[#allocation2 + $0x1c0] sm:$0xff]
    %v284 = vld [vmem:[#allocation2 + $0x1c8] sm:$0xff]
    %v285 = vld [vmem:[#allocation2 + $0x1d0] sm:$0xff]
    %v286 = vld [vmem:[#allocation2 + $0x1d8] sm:$0xff]
    %v287 = vld [vmem:[#allocation2 + $0x1e0] sm:$0xff]
    %v288 = vld [vmem:[#allocation2 + $0x1e8] sm:$0xff]
    %v289 = vld [vmem:[#allocation2 + $0x1f0] sm:$0xff]
    %v290 = vld [vmem:[#allocation2 + $0x1f8] sm:$0xff]
    %v291 = vld [vmem:[#allocation2 + $0x200] sm:$0xff]
    %v292 = vld [vmem:[#allocation2 + $0x208] sm:$0xff]
    %v293 = vld [vmem:[#allocation2 + $0x210] sm:$0xff]
    %v294 = vld [vmem:[#allocation2 + $0x218] sm:$0xff]
    %v295 = vld [vmem:[#allocation2 + $0x220] sm:$0xff]
    %v296 = vld [vmem:[#allocation2 + $0x228] sm:$0xff]
    %v297 = vld [vmem:[#allocation2 + $0x230] sm:$0xff]
    %v298 = vld [vmem:[#allocation2 + $0x238] sm:$0xff]
    %v299 = vld [vmem:[#allocation2 + $0x240] sm:$0xff]
    %v300 = vld [vmem:[#allocation2 + $0x248] sm:$0xff]
    %v301 = vld [vmem:[#allocation2 + $0x250] sm:$0xff]
    %v302 = vld [vmem:[#allocation2 + $0x258] sm:$0xff]
    %v303 = vld [vmem:[#allocation2 + $0x260] sm:$0xff]
    %v304 = vld [vmem:[#allocation2 + $0x268] sm:$0xff]
    %v305 = vld [vmem:[#allocation2 + $0x270] sm:$0xff]
    %v306 = vld [vmem:[#allocation2 + $0x278] sm:$0xff]
    %v307 = vld [vmem:[#allocation2 + $0x280] sm:$0xff]
    %v308 = vld [vmem:[#allocation2 + $0x288] sm:$0xff]
    %v309 = vld [vmem:[#allocation2 + $0x290] sm:$0xff]
    %v310 = vld [vmem:[#allocation2 + $0x298] sm:$0xff]
    %v311 = vld [vmem:[#allocation2 + $0x2a0] sm:$0xff]
    %v312 = vld [vmem:[#allocation2 + $0x2a8] sm:$0xff]
    %v313 = vld [vmem:[#allocation2 + $0x2b0] sm:$0xff]
    %v314 = vld [vmem:[#allocation2 + $0x2b8] sm:$0xff]
    %v315 = vld [vmem:[#allocation2 + $0x2c0] sm:$0xff]
    %v316 = vld [vmem:[#allocation2 + $0x2c8] sm:$0xff]
    %v317 = vld [vmem:[#allocation2 + $0x2d0] sm:$0xff]
    %v318 = vld [vmem:[#allocation2 + $0x2d8] sm:$0xff]
    %v319 = vld [vmem:[#allocation2 + $0x2e0] sm:$0xff]
    %v320 = vld [vmem:[#allocation2 + $0x2e8] sm:$0xff]
    %v321 = vld [vmem:[#allocation2 + $0x2f0] sm:$0xff]
    %v322 = vld [vmem:[#allocation2 + $0x2f8] sm:$0xff]
    %v323 = vld [vmem:[#allocation2 + $0x300] sm:$0xff]
    %v324 = vld [vmem:[#allocation2 + $0x308] sm:$0xff]
    %v325 = vld [vmem:[#allocation2 + $0x310] sm:$0xff]
    %v326 = vld [vmem:[#allocation2 + $0x318] sm:$0xff]
    %v327 = vld [vmem:[#allocation2 + $0x320] sm:$0xff]
    %v328 = vld [vmem:[#allocation2 + $0x328] sm:$0xff]
    %v329 = vld [vmem:[#allocation2 + $0x330] sm:$0xff]
    %v330 = vld [vmem:[#allocation2 + $0x338] sm:$0xff]
    %v331 = vld [vmem:[#allocation2 + $0x340] sm:$0xff]
    %v332 = vld [vmem:[#allocation2 + $0x348] sm:$0xff]
    %v333 = vld [vmem:[#allocation2 + $0x350] sm:$0xff]
    %v334 = vld [vmem:[#allocation2 + $0x358] sm:$0xff]
    %v335 = vld [vmem:[#allocation2 + $0x360] sm:$0xff]
    %v336 = vld [vmem:[#allocation2 + $0x368] sm:$0xff]
    %v337 = vld [vmem:[#allocation2 + $0x370] sm:$0xff]
    %v338 = vld [vmem:[#allocation2 + $0x378] sm:$0xff]
    %v339 = vld [vmem:[#allocation2 + $0x380] sm:$0xff]
    %v340 = vld [vmem:[#allocation2 + $0x388] sm:$0xff]
    %v341 = vld [vmem:[#allocation2 + $0x390] sm:$0xff]
    %v342 = vld [vmem:[#allocation2 + $0x398] sm:$0xff]
    %v343 = vld [vmem:[#allocation2 + $0x3a0] sm:$0xff]
    %v344 = vld [vmem:[#allocation2 + $0x3a8] sm:$0xff]
    %v345 = vld [vmem:[#allocation2 + $0x3b0] sm:$0xff]
    %v346 = vld [vmem:[#allocation2 + $0x3b8] sm:$0xff]
    %v347 = vld [vmem:[#allocation2 + $0x3c0] sm:$0xff]
    %v348 = vld [vmem:[#allocation2 + $0x3c8] sm:$0xff]
    %v349 = vld [vmem:[#allocation2 + $0x3d0] sm:$0xff]
    %v350 = vld [vmem:[#allocation2 + $0x3d8] sm:$0xff]
    %v351 = vld [vmem:[#allocation2 + $0x3e0] sm:$0xff]
    %v352 = vld [vmem:[#allocation2 + $0x3e8] sm:$0xff]
    %v353 = vld [vmem:[#allocation2 + $0x3f0] sm:$0xff]
    %v354 = vld [vmem:[#allocation2 + $0x3f8] sm:$0xff]
    %v355 = vld [vmem:[#allocation2 + $0x400] sm:$0xff]
    %v356 = vld [vmem:[#allocation2 + $0x408] sm:$0xff]
    %v357 = vld [vmem:[#allocation2 + $0x410] sm:$0xff]
    %v358 = vld [vmem:[#allocation2 + $0x418] sm:$0xff]
    %v359 = vld [vmem:[#allocation2 + $0x420] sm:$0xff]
    %v360 = vld [vmem:[#allocation2 + $0x428] sm:$0xff]
    %v361 = vld [vmem:[#allocation2 + $0x430] sm:$0xff]
    %v362 = vld [vmem:[#allocation2 + $0x438] sm:$0xff]
    %v363 = vld [vmem:[#allocation2 + $0x440] sm:$0xff]
    %v364 = vld [vmem:[#allocation2 + $0x448] sm:$0xff]
    %v365 = vld [vmem:[#allocation2 + $0x450] sm:$0xff]
    %v366 = vld [vmem:[#allocation2 + $0x458] sm:$0xff]
    %v367 = vld [vmem:[#allocation2 + $0x460] sm:$0xff]
    %v368 = vld [vmem:[#allocation2 + $0x468] sm:$0xff]
    %v369 = vld [vmem:[#allocation2 + $0x470] sm:$0xff]
    %v370 = vld [vmem:[#allocation2 + $0x478] sm:$0xff]
    %v371 = vld [vmem:[#allocation2 + $0x480] sm:$0xff]
    %v372 = vld [vmem:[#allocation2 + $0x488] sm:$0xff]
    %v373 = vld [vmem:[#allocation2 + $0x490] sm:$0xff]
    %v374 = vld [vmem:[#allocation2 + $0x498] sm:$0xff]
    %v375 = vld [vmem:[#allocation2 + $0x4a0] sm:$0xff]
    %v376 = vld [vmem:[#allocation2 + $0x4a8] sm:$0xff]
    %v377 = vld [vmem:[#allocation2 + $0x4b0] sm:$0xff]
    %v378 = vld [vmem:[#allocation2 + $0x4b8] sm:$0xff]
    %v379 = vld [vmem:[#allocation2 + $0x4c0] sm:$0xff]
    %v380 = vld [vmem:[#allocation2 + $0x4c8] sm:$0xff]
    %v381 = vld [vmem:[#allocation2 + $0x4d0] sm:$0xff]
    %v382 = vld [vmem:[#allocation2 + $0x4d8] sm:$0xff]
    %v383 = vld [vmem:[#allocation2 + $0x4e0] sm:$0xff]
    %v384 = vld [vmem:[#allocation2 + $0x4e8] sm:$0xff]
    %v385 = vld [vmem:[#allocation2 + $0x4f0] sm:$0xff]
    %v386 = vld [vmem:[#allocation2 + $0x4f8] sm:$0xff]
    %v387 = vld [vmem:[#allocation2 + $0x500] sm:$0xff]
    %v388 = vld [vmem:[#allocation2 + $0x508] sm:$0xff]
    %v389 = vld [vmem:[#allocation2 + $0x510] sm:$0xff]
    %v390 = vld [vmem:[#allocation2 + $0x518] sm:$0xff]
    %v391 = vld [vmem:[#allocation2 + $0x520] sm:$0xff]
    %v392 = vld [vmem:[#allocation2 + $0x528] sm:$0xff]
    %v393 = vld [vmem:[#allocation2 + $0x530] sm:$0xff]
    %v394 = vld [vmem:[#allocation2 + $0x538] sm:$0xff]
    %v395 = vld [vmem:[#allocation2 + $0x540] sm:$0xff]
    %v396 = vld [vmem:[#allocation2 + $0x548] sm:$0xff]
    %v397 = vld [vmem:[#allocation2 + $0x550] sm:$0xff]
    %v398 = vld [vmem:[#allocation2 + $0x558] sm:$0xff]
    %v399 = vld [vmem:[#allocation2 + $0x560] sm:$0xff]
    %v400 = vld [vmem:[#allocation2 + $0x568] sm:$0xff]
    %v401 = vld [vmem:[#allocation2 + $0x570] sm:$0xff]
    %v402 = vld [vmem:[#allocation2 + $0x578] sm:$0xff]
    %v403 = vld [vmem:[#allocation2 + $0x580] sm:$0xff]
    %v404 = vld [vmem:[#allocation2 + $0x588] sm:$0xff]
    %v405 = vld [vmem:[#allocation2 + $0x590] sm:$0xff]
    %v406 = vld [vmem:[#allocation2 + $0x598] sm:$0xff]
    %v407 = vld [vmem:[#allocation2 + $0x5a0] sm:$0xff]
    %v408 = vld [vmem:[#allocation2 + $0x5a8] sm:$0xff]
    %v409 = vld [vmem:[#allocation2 + $0x5b0] sm:$0xff]
    %v410 = vld [vmem:[#allocation2 + $0x5b8] sm:$0xff]
    %v411 = vld [vmem:[#allocation2 + $0x5c0] sm:$0xff]
    %v412 = vld [vmem:[#allocation2 + $0x5c8] sm:$0xff]
    %v413 = vld [vmem:[#allocation2 + $0x5d0] sm:$0xff]
    %v414 = vld [vmem:[#allocation2 + $0x5d8] sm:$0xff]
    %v415 = vld [vmem:[#allocation2 + $0x5e0] sm:$0xff]
    %v416 = vld [vmem:[#allocation2 + $0x5e8] sm:$0xff]
    %v417 = vld [vmem:[#allocation2 + $0x5f0] sm:$0xff]
    %v418 = vld [vmem:[#allocation2 + $0x5f8] sm:$0xff]
    %v419 = vld [vmem:[#allocation2 + $0x600] sm:$0xff]
    %v420 = vld [vmem:[#allocation2 + $0x608] sm:$0xff]
    %v421 = vld [vmem:[#allocation2 + $0x610] sm:$0xff]
    %v422 = vld [vmem:[#allocation2 + $0x618] sm:$0xff]
    %v423 = vld [vmem:[%s2] sm:$0xf]
    %v425 = vperm.slane %v423, 0
    %v426 = vperm.slane %v423, 1
    %v427 = vperm.slane %v423, 2
    %v428 = vperm.slane %v423, 3
    %v629 = vunpack.c.l.b16 %v227
    %v630 = vunpack.c.h.b16 %v227
    %v631 = vunpack.c.l.b16 %v228
    %v632 = vunpack.c.h.b16 %v228
    %v633 = vunpack.c.l.b16 %v229
    %v634 = vunpack.c.h.b16 %v229
    %v635 = vunpack.c.l.b16 %v230
    %v636 = vunpack.c.h.b16 %v230
    %v637 = vunpack.c.l.b16 %v231
    %v638 = vunpack.c.h.b16 %v231
    %v639 = vunpack.c.l.b16 %v232
    %v640 = vunpack.c.h.b16 %v232
    %v641 = vunpack.c.l.b16 %v233
    %v642 = vunpack.c.h.b16 %v233
    %v643 = vunpack.c.l.b16 %v234
    %v644 = vunpack.c.h.b16 %v234
    %v645 = vunpack.c.l.b16 %v235
    %v646 = vunpack.c.h.b16 %v235
    %v647 = vunpack.c.l.b16 %v236
    %v648 = vunpack.c.h.b16 %v236
    %v649 = vunpack.c.l.b16 %v237
    %v650 = vunpack.c.h.b16 %v237
    %v651 = vunpack.c.l.b16 %v238
    %v652 = vunpack.c.h.b16 %v238
    %v653 = vunpack.c.l.b16 %v239
    %v654 = vunpack.c.h.b16 %v239
    %v655 = vunpack.c.l.b16 %v240
    %v656 = vunpack.c.h.b16 %v240
    %v657 = vunpack.c.l.b16 %v241
    %v658 = vunpack.c.h.b16 %v241
    %v659 = vunpack.c.l.b16 %v242
    %v660 = vunpack.c.h.b16 %v242
    %v661 = vunpack.c.l.b16 %v243
    %v662 = vunpack.c.h.b16 %v243
    %v663 = vunpack.c.l.b16 %v244
    %v664 = vunpack.c.h.b16 %v244
    %v665 = vunpack.c.l.b16 %v245
    %v666 = vunpack.c.h.b16 %v245
    %v667 = vunpack.c.l.b16 %v246
    %v668 = vunpack.c.h.b16 %v246
    %v669 = vunpack.c.l.b16 %v247
    %v670 = vunpack.c.h.b16 %v247
    %v671 = vunpack.c.l.b16 %v248
    %v672 = vunpack.c.h.b16 %v248
    %v673 = vunpack.c.l.b16 %v249
    %v674 = vunpack.c.h.b16 %v249
    %v675 = vunpack.c.l.b16 %v250
    %v676 = vunpack.c.h.b16 %v250
    %v677 = vunpack.c.l.b16 %v251
    %v678 = vunpack.c.h.b16 %v251
    %v679 = vunpack.c.l.b16 %v252
    %v680 = vunpack.c.h.b16 %v252
    %v681 = vunpack.c.l.b16 %v253
    %v682 = vunpack.c.h.b16 %v253
    %v683 = vunpack.c.l.b16 %v254
    %v684 = vunpack.c.h.b16 %v254
    %v685 = vunpack.c.l.b16 %v255
    %v686 = vunpack.c.h.b16 %v255
    %v687 = vunpack.c.l.b16 %v256
    %v688 = vunpack.c.h.b16 %v256
    %v689 = vunpack.c.l.b16 %v257
    %v690 = vunpack.c.h.b16 %v257
    %v691 = vunpack.c.l.b16 %v258
    %v692 = vunpack.c.h.b16 %v258
    %v693 = vunpack.c.l.b16 %v259
    %v694 = vunpack.c.h.b16 %v259
    %v695 = vunpack.c.l.b16 %v260
    %v696 = vunpack.c.h.b16 %v260
    %v697 = vunpack.c.l.b16 %v261
    %v698 = vunpack.c.h.b16 %v261
    %v699 = vunpack.c.l.b16 %v262
    %v700 = vunpack.c.h.b16 %v262
    %v701 = vunpack.c.l.b16 %v263
    %v702 = vunpack.c.h.b16 %v263
    %v703 = vunpack.c.l.b16 %v264
    %v704 = vunpack.c.h.b16 %v264
    %v705 = vunpack.c.l.b16 %v265
    %v706 = vunpack.c.h.b16 %v265
    %v707 = vunpack.c.l.b16 %v266
    %v708 = vunpack.c.h.b16 %v266
    %v709 = vunpack.c.l.b16 %v267
    %v710 = vunpack.c.h.b16 %v267
    %v711 = vunpack.c.l.b16 %v268
    %v712 = vunpack.c.h.b16 %v268
    %v713 = vunpack.c.l.b16 %v269
    %v714 = vunpack.c.h.b16 %v269
    %v715 = vunpack.c.l.b16 %v270
    %v716 = vunpack.c.h.b16 %v270
    %v717 = vunpack.c.l.b16 %v271
    %v718 = vunpack.c.h.b16 %v271
    %v719 = vunpack.c.l.b16 %v272
    %v720 = vunpack.c.h.b16 %v272
    %v721 = vunpack.c.l.b16 %v273
    %v722 = vunpack.c.h.b16 %v273
    %v723 = vunpack.c.l.b16 %v274
    %v724 = vunpack.c.h.b16 %v274
    %v725 = vunpack.c.l.b16 %v275
    %v726 = vunpack.c.h.b16 %v275
    %v727 = vunpack.c.l.b16 %v276
    %v728 = vunpack.c.h.b16 %v276
    %v729 = vunpack.c.l.b16 %v277
    %v730 = vunpack.c.h.b16 %v277
    %v731 = vunpack.c.l.b16 %v278
    %v732 = vunpack.c.h.b16 %v278
    %v733 = vunpack.c.l.b16 %v279
    %v734 = vunpack.c.h.b16 %v279
    %v735 = vunpack.c.l.b16 %v280
    %v736 = vunpack.c.h.b16 %v280
    %v737 = vunpack.c.l.b16 %v281
    %v738 = vunpack.c.h.b16 %v281
    %v739 = vunpack.c.l.b16 %v282
    %v740 = vunpack.c.h.b16 %v282
    %v741 = vunpack.c.l.b16 %v283
    %v742 = vunpack.c.h.b16 %v283
    %v743 = vunpack.c.l.b16 %v284
    %v744 = vunpack.c.h.b16 %v284
    %v745 = vunpack.c.l.b16 %v285
    %v746 = vunpack.c.h.b16 %v285
    %v747 = vunpack.c.l.b16 %v286
    %v748 = vunpack.c.h.b16 %v286
    %v749 = vunpack.c.l.b16 %v287
    %v750 = vunpack.c.h.b16 %v287
    %v751 = vunpack.c.l.b16 %v288
    %v752 = vunpack.c.h.b16 %v288
    %v753 = vunpack.c.l.b16 %v289
    %v754 = vunpack.c.h.b16 %v289
    %v755 = vunpack.c.l.b16 %v290
    %v756 = vunpack.c.h.b16 %v290
    %v757 = vunpack.c.l.b16 %v291
    %v758 = vunpack.c.h.b16 %v291
    %v759 = vunpack.c.l.b16 %v292
    %v760 = vunpack.c.h.b16 %v292
    %v761 = vunpack.c.l.b16 %v293
    %v762 = vunpack.c.h.b16 %v293
    %v763 = vunpack.c.l.b16 %v294
    %v764 = vunpack.c.h.b16 %v294
    %v765 = vunpack.c.l.b16 %v295
    %v766 = vunpack.c.h.b16 %v295
    %v767 = vunpack.c.l.b16 %v296
    %v768 = vunpack.c.h.b16 %v296
    %v769 = vunpack.c.l.b16 %v297
    %v770 = vunpack.c.h.b16 %v297
    %v771 = vunpack.c.l.b16 %v298
    %v772 = vunpack.c.h.b16 %v298
    %v773 = vunpack.c.l.b16 %v299
    %v774 = vunpack.c.h.b16 %v299
    %v775 = vunpack.c.l.b16 %v300
    %v776 = vunpack.c.h.b16 %v300
    %v777 = vunpack.c.l.b16 %v301
    %v778 = vunpack.c.h.b16 %v301
    %v779 = vunpack.c.l.b16 %v302
    %v780 = vunpack.c.h.b16 %v302
    %v781 = vunpack.c.l.b16 %v303
    %v782 = vunpack.c.h.b16 %v303
    %v783 = vunpack.c.l.b16 %v304
    %v784 = vunpack.c.h.b16 %v304
    %v785 = vunpack.c.l.b16 %v305
    %v786 = vunpack.c.h.b16 %v305
    %v787 = vunpack.c.l.b16 %v306
    %v788 = vunpack.c.h.b16 %v306
    %v789 = vunpack.c.l.b16 %v307
    %v790 = vunpack.c.h.b16 %v307
    %v791 = vunpack.c.l.b16 %v308
    %v792 = vunpack.c.h.b16 %v308
    %v793 = vunpack.c.l.b16 %v309
    %v794 = vunpack.c.h.b16 %v309
    %v795 = vunpack.c.l.b16 %v310
    %v796 = vunpack.c.h.b16 %v310
    %v797 = vunpack.c.l.b16 %v311
    %v798 = vunpack.c.h.b16 %v311
    %v799 = vunpack.c.l.b16 %v312
    %v800 = vunpack.c.h.b16 %v312
    %v801 = vunpack.c.l.b16 %v313
    %v802 = vunpack.c.h.b16 %v313
    %v803 = vunpack.c.l.b16 %v314
    %v804 = vunpack.c.h.b16 %v314
    %v805 = vunpack.c.l.b16 %v315
    %v806 = vunpack.c.h.b16 %v315
    %v807 = vunpack.c.l.b16 %v316
    %v808 = vunpack.c.h.b16 %v316
    %v809 = vunpack.c.l.b16 %v317
    %v810 = vunpack.c.h.b16 %v317
    %v811 = vunpack.c.l.b16 %v318
    %v812 = vunpack.c.h.b16 %v318
    %v813 = vunpack.c.l.b16 %v319
    %v814 = vunpack.c.h.b16 %v319
    %v815 = vunpack.c.l.b16 %v320
    %v816 = vunpack.c.h.b16 %v320
    %v817 = vunpack.c.l.b16 %v321
    %v818 = vunpack.c.h.b16 %v321
    %v819 = vunpack.c.l.b16 %v322
    %v820 = vunpack.c.h.b16 %v322
    %v821 = vunpack.c.l.b16 %v323
    %v822 = vunpack.c.h.b16 %v323
    %v823 = vunpack.c.l.b16 %v324
    %v824 = vunpack.c.h.b16 %v324
    %v825 = vunpack.c.l.b16 %v325
    %v826 = vunpack.c.h.b16 %v325
    %v827 = vunpack.c.l.b16 %v326
    %v828 = vunpack.c.h.b16 %v326
    %v829 = vunpack.c.l.b16 %v327
    %v830 = vunpack.c.h.b16 %v327
    %v831 = vunpack.c.l.b16 %v328
    %v832 = vunpack.c.h.b16 %v328
    %v833 = vunpack.c.l.b16 %v329
    %v834 = vunpack.c.h.b16 %v329
    %v835 = vunpack.c.l.b16 %v330
    %v836 = vunpack.c.h.b16 %v330
    %v837 = vunpack.c.l.b16 %v331
    %v838 = vunpack.c.h.b16 %v331
    %v839 = vunpack.c.l.b16 %v332
    %v840 = vunpack.c.h.b16 %v332
    %v841 = vunpack.c.l.b16 %v333
    %v842 = vunpack.c.h.b16 %v333
    %v843 = vunpack.c.l.b16 %v334
    %v844 = vunpack.c.h.b16 %v334
    %v845 = vunpack.c.l.b16 %v335
    %v846 = vunpack.c.h.b16 %v335
    %v847 = vunpack.c.l.b16 %v336
    %v848 = vunpack.c.h.b16 %v336
    %v849 = vunpack.c.l.b16 %v337
    %v850 = vunpack.c.h.b16 %v337
    %v851 = vunpack.c.l.b16 %v338
    %v852 = vunpack.c.h.b16 %v338
    %v853 = vunpack.c.l.b16 %v339
    %v854 = vunpack.c.h.b16 %v339
    %v855 = vunpack.c.l.b16 %v340
    %v856 = vunpack.c.h.b16 %v340
    %v857 = vunpack.c.l.b16 %v341
    %v858 = vunpack.c.h.b16 %v341
    %v859 = vunpack.c.l.b16 %v342
    %v860 = vunpack.c.h.b16 %v342
    %v861 = vunpack.c.l.b16 %v343
    %v862 = vunpack.c.h.b16 %v343
    %v863 = vunpack.c.l.b16 %v344
    %v864 = vunpack.c.h.b16 %v344
    %v865 = vunpack.c.l.b16 %v345
    %v866 = vunpack.c.h.b16 %v345
    %v867 = vunpack.c.l.b16 %v346
    %v868 = vunpack.c.h.b16 %v346
    %v869 = vunpack.c.l.b16 %v347
    %v870 = vunpack.c.h.b16 %v347
    %v871 = vunpack.c.l.b16 %v348
    %v872 = vunpack.c.h.b16 %v348
    %v873 = vunpack.c.l.b16 %v349
    %v874 = vunpack.c.h.b16 %v349
    %v875 = vunpack.c.l.b16 %v350
    %v876 = vunpack.c.h.b16 %v350
    %v877 = vunpack.c.l.b16 %v351
    %v878 = vunpack.c.h.b16 %v351
    %v879 = vunpack.c.l.b16 %v352
    %v880 = vunpack.c.h.b16 %v352
    %v881 = vunpack.c.l.b16 %v353
    %v882 = vunpack.c.h.b16 %v353
    %v883 = vunpack.c.l.b16 %v354
    %v884 = vunpack.c.h.b16 %v354
    %v885 = vunpack.c.l.b16 %v355
    %v886 = vunpack.c.h.b16 %v355
    %v887 = vunpack.c.l.b16 %v356
    %v888 = vunpack.c.h.b16 %v356
    %v889 = vunpack.c.l.b16 %v357
    %v890 = vunpack.c.h.b16 %v357
    %v891 = vunpack.c.l.b16 %v358
    %v892 = vunpack.c.h.b16 %v358
    %v893 = vunpack.c.l.b16 %v359
    %v894 = vunpack.c.h.b16 %v359
    %v895 = vunpack.c.l.b16 %v360
    %v896 = vunpack.c.h.b16 %v360
    %v897 = vunpack.c.l.b16 %v361
    %v898 = vunpack.c.h.b16 %v361
    %v899 = vunpack.c.l.b16 %v362
    %v900 = vunpack.c.h.b16 %v362
    %v901 = vunpack.c.l.b16 %v363
    %v902 = vunpack.c.h.b16 %v363
    %v903 = vunpack.c.l.b16 %v364
    %v904 = vunpack.c.h.b16 %v364
    %v905 = vunpack.c.l.b16 %v365
    %v906 = vunpack.c.h.b16 %v365
    %v907 = vunpack.c.l.b16 %v366
    %v908 = vunpack.c.h.b16 %v366
    %v909 = vunpack.c.l.b16 %v367
    %v910 = vunpack.c.h.b16 %v367
    %v911 = vunpack.c.l.b16 %v368
    %v912 = vunpack.c.h.b16 %v368
    %v913 = vunpack.c.l.b16 %v369
    %v914 = vunpack.c.h.b16 %v369
    %v915 = vunpack.c.l.b16 %v370
    %v916 = vunpack.c.h.b16 %v370
    %v917 = vunpack.c.l.b16 %v371
    %v918 = vunpack.c.h.b16 %v371
    %v919 = vunpack.c.l.b16 %v372
    %v920 = vunpack.c.h.b16 %v372
    %v921 = vunpack.c.l.b16 %v373
    %v922 = vunpack.c.h.b16 %v373
    %v923 = vunpack.c.l.b16 %v374
    %v924 = vunpack.c.h.b16 %v374
    %v925 = vunpack.c.l.b16 %v375
    %v926 = vunpack.c.h.b16 %v375
    %v927 = vunpack.c.l.b16 %v376
    %v928 = vunpack.c.h.b16 %v376
    %v929 = vunpack.c.l.b16 %v377
    %v930 = vunpack.c.h.b16 %v377
    %v931 = vunpack.c.l.b16 %v378
    %v932 = vunpack.c.h.b16 %v378
    %v933 = vunpack.c.l.b16 %v379
    %v934 = vunpack.c.h.b16 %v379
    %v935 = vunpack.c.l.b16 %v380
    %v936 = vunpack.c.h.b16 %v380
    %v937 = vunpack.c.l.b16 %v381
    %v938 = vunpack.c.h.b16 %v381
    %v939 = vunpack.c.l.b16 %v382
    %v940 = vunpack.c.h.b16 %v382
    %v941 = vunpack.c.l.b16 %v383
    %v942 = vunpack.c.h.b16 %v383
    %v943 = vunpack.c.l.b16 %v384
    %v944 = vunpack.c.h.b16 %v384
    %v945 = vunpack.c.l.b16 %v385
    %v946 = vunpack.c.h.b16 %v385
    %v947 = vunpack.c.l.b16 %v386
    %v948 = vunpack.c.h.b16 %v386
    %v949 = vunpack.c.l.b16 %v387
    %v950 = vunpack.c.h.b16 %v387
    %v951 = vunpack.c.l.b16 %v388
    %v952 = vunpack.c.h.b16 %v388
    %v953 = vunpack.c.l.b16 %v389
    %v954 = vunpack.c.h.b16 %v389
    %v955 = vunpack.c.l.b16 %v390
    %v956 = vunpack.c.h.b16 %v390
    %v957 = vunpack.c.l.b16 %v391
    %v958 = vunpack.c.h.b16 %v391
    %v959 = vunpack.c.l.b16 %v392
    %v960 = vunpack.c.h.b16 %v392
    %v961 = vunpack.c.l.b16 %v393
    %v962 = vunpack.c.h.b16 %v393
    %v963 = vunpack.c.l.b16 %v394
    %v964 = vunpack.c.h.b16 %v394
    %v965 = vunpack.c.l.b16 %v395
    %v966 = vunpack.c.h.b16 %v395
    %v967 = vunpack.c.l.b16 %v396
    %v968 = vunpack.c.h.b16 %v396
    %v969 = vunpack.c.l.b16 %v397
    %v970 = vunpack.c.h.b16 %v397
    %v971 = vunpack.c.l.b16 %v398
    %v972 = vunpack.c.h.b16 %v398
    %v973 = vunpack.c.l.b16 %v399
    %v974 = vunpack.c.h.b16 %v399
    %v975 = vunpack.c.l.b16 %v400
    %v976 = vunpack.c.h.b16 %v400
    %v977 = vunpack.c.l.b16 %v401
    %v978 = vunpack.c.h.b16 %v401
    %v979 = vunpack.c.l.b16 %v402
    %v980 = vunpack.c.h.b16 %v402
    %v981 = vunpack.c.l.b16 %v403
    %v982 = vunpack.c.h.b16 %v403
    %v983 = vunpack.c.l.b16 %v404
    %v984 = vunpack.c.h.b16 %v404
    %v985 = vunpack.c.l.b16 %v405
    %v986 = vunpack.c.h.b16 %v405
    %v987 = vunpack.c.l.b16 %v406
    %v988 = vunpack.c.h.b16 %v406
    %v989 = vunpack.c.l.b16 %v407
    %v990 = vunpack.c.h.b16 %v407
    %v991 = vunpack.c.l.b16 %v408
    %v992 = vunpack.c.h.b16 %v408
    %v993 = vunpack.c.l.b16 %v409
    %v994 = vunpack.c.h.b16 %v409
    %v995 = vunpack.c.l.b16 %v410
    %v996 = vunpack.c.h.b16 %v410
    %v997 = vunpack.c.l.b16 %v411
    %v998 = vunpack.c.h.b16 %v411
    %v999 = vunpack.c.l.b16 %v412
    %v1000 = vunpack.c.h.b16 %v412
    %v1001 = vunpack.c.l.b16 %v413
    %v1002 = vunpack.c.h.b16 %v413
    %v1003 = vunpack.c.l.b16 %v414
    %v1004 = vunpack.c.h.b16 %v414
    %v1005 = vunpack.c.l.b16 %v415
    %v1006 = vunpack.c.h.b16 %v415
    %v1007 = vunpack.c.l.b16 %v416
    %v1008 = vunpack.c.h.b16 %v416
    %v1009 = vunpack.c.l.b16 %v417
    %v1010 = vunpack.c.h.b16 %v417
    %v1011 = vunpack.c.l.b16 %v418
    %v1012 = vunpack.c.h.b16 %v418
    %v1013 = vunpack.c.l.b16 %v419
    %v1014 = vunpack.c.h.b16 %v419
    %v1015 = vunpack.c.l.b16 %v420
    %v1016 = vunpack.c.h.b16 %v420
    %v1017 = vunpack.c.l.b16 %v421
    %v1018 = vunpack.c.h.b16 %v421
    %v1019 = vunpack.c.l.b16 %v422
    %v1020 = vunpack.c.h.b16 %v422
    %v1021 = vpack.c.b16 %v633, %v629
    %v1022 = vpack.c.b16 %v634, %v630
    %v1023 = vpack.c.b16 %v635, %v631
    %v1024 = vpack.c.b16 %v636, %v632
    %v1025 = vpack.c.b16 %v641, %v637
    %v1026 = vpack.c.b16 %v642, %v638
    %v1027 = vpack.c.b16 %v643, %v639
    %v1028 = vpack.c.b16 %v644, %v640
    %v1029 = vpack.c.b16 %v649, %v645
    %v1030 = vpack.c.b16 %v650, %v646
    %v1031 = vpack.c.b16 %v651, %v647
    %v1032 = vpack.c.b16 %v652, %v648
    %v1033 = vpack.c.b16 %v657, %v653
    %v1034 = vpack.c.b16 %v658, %v654
    %v1035 = vpack.c.b16 %v659, %v655
    %v1036 = vpack.c.b16 %v660, %v656
    %v1037 = vpack.c.b16 %v665, %v661
    %v1038 = vpack.c.b16 %v666, %v662
    %v1039 = vpack.c.b16 %v667, %v663
    %v1040 = vpack.c.b16 %v668, %v664
    %v1041 = vpack.c.b16 %v673, %v669
    %v1042 = vpack.c.b16 %v674, %v670
    %v1043 = vpack.c.b16 %v675, %v671
    %v1044 = vpack.c.b16 %v676, %v672
    %v1045 = vpack.c.b16 %v681, %v677
    %v1046 = vpack.c.b16 %v682, %v678
    %v1047 = vpack.c.b16 %v683, %v679
    %v1048 = vpack.c.b16 %v684, %v680
    %v1049 = vpack.c.b16 %v689, %v685
    %v1050 = vpack.c.b16 %v690, %v686
    %v1051 = vpack.c.b16 %v691, %v687
    %v1052 = vpack.c.b16 %v692, %v688
    %v1053 = vpack.c.b16 %v697, %v693
    %v1054 = vpack.c.b16 %v698, %v694
    %v1055 = vpack.c.b16 %v699, %v695
    %v1056 = vpack.c.b16 %v700, %v696
    %v1057 = vpack.c.b16 %v705, %v701
    %v1058 = vpack.c.b16 %v706, %v702
    %v1059 = vpack.c.b16 %v707, %v703
    %v1060 = vpack.c.b16 %v708, %v704
    %v1061 = vpack.c.b16 %v713, %v709
    %v1062 = vpack.c.b16 %v714, %v710
    %v1063 = vpack.c.b16 %v715, %v711
    %v1064 = vpack.c.b16 %v716, %v712
    %v1065 = vpack.c.b16 %v721, %v717
    %v1066 = vpack.c.b16 %v722, %v718
    %v1067 = vpack.c.b16 %v723, %v719
    %v1068 = vpack.c.b16 %v724, %v720
    %v1069 = vpack.c.b16 %v729, %v725
    %v1070 = vpack.c.b16 %v730, %v726
    %v1071 = vpack.c.b16 %v731, %v727
    %v1072 = vpack.c.b16 %v732, %v728
    %v1073 = vpack.c.b16 %v737, %v733
    %v1074 = vpack.c.b16 %v738, %v734
    %v1075 = vpack.c.b16 %v739, %v735
    %v1076 = vpack.c.b16 %v740, %v736
    %v1077 = vpack.c.b16 %v745, %v741
    %v1078 = vpack.c.b16 %v746, %v742
    %v1079 = vpack.c.b16 %v747, %v743
    %v1080 = vpack.c.b16 %v748, %v744
    %v1081 = vpack.c.b16 %v753, %v749
    %v1082 = vpack.c.b16 %v754, %v750
    %v1083 = vpack.c.b16 %v755, %v751
    %v1084 = vpack.c.b16 %v756, %v752
    %v1085 = vpack.c.b16 %v761, %v757
    %v1086 = vpack.c.b16 %v762, %v758
    %v1087 = vpack.c.b16 %v763, %v759
    %v1088 = vpack.c.b16 %v764, %v760
    %v1089 = vpack.c.b16 %v769, %v765
    %v1090 = vpack.c.b16 %v770, %v766
    %v1091 = vpack.c.b16 %v771, %v767
    %v1092 = vpack.c.b16 %v772, %v768
    %v1093 = vpack.c.b16 %v777, %v773
    %v1094 = vpack.c.b16 %v778, %v774
    %v1095 = vpack.c.b16 %v779, %v775
    %v1096 = vpack.c.b16 %v780, %v776
    %v1097 = vpack.c.b16 %v785, %v781
    %v1098 = vpack.c.b16 %v786, %v782
    %v1099 = vpack.c.b16 %v787, %v783
    %v1100 = vpack.c.b16 %v788, %v784
    %v1101 = vpack.c.b16 %v793, %v789
    %v1102 = vpack.c.b16 %v794, %v790
    %v1103 = vpack.c.b16 %v795, %v791
    %v1104 = vpack.c.b16 %v796, %v792
    %v1105 = vpack.c.b16 %v801, %v797
    %v1106 = vpack.c.b16 %v802, %v798
    %v1107 = vpack.c.b16 %v803, %v799
    %v1108 = vpack.c.b16 %v804, %v800
    %v1109 = vpack.c.b16 %v809, %v805
    %v1110 = vpack.c.b16 %v810, %v806
    %v1111 = vpack.c.b16 %v811, %v807
    %v1112 = vpack.c.b16 %v812, %v808
    %v1113 = vpack.c.b16 %v817, %v813
    %v1114 = vpack.c.b16 %v818, %v814
    %v1115 = vpack.c.b16 %v819, %v815
    %v1116 = vpack.c.b16 %v820, %v816
    %v1117 = vpack.c.b16 %v825, %v821
    %v1118 = vpack.c.b16 %v826, %v822
    %v1119 = vpack.c.b16 %v827, %v823
    %v1120 = vpack.c.b16 %v828, %v824
    %v1121 = vpack.c.b16 %v833, %v829
    %v1122 = vpack.c.b16 %v834, %v830
    %v1123 = vpack.c.b16 %v835, %v831
    %v1124 = vpack.c.b16 %v836, %v832
    %v1125 = vpack.c.b16 %v841, %v837
    %v1126 = vpack.c.b16 %v842, %v838
    %v1127 = vpack.c.b16 %v843, %v839
    %v1128 = vpack.c.b16 %v844, %v840
    %v1129 = vpack.c.b16 %v849, %v845
    %v1130 = vpack.c.b16 %v850, %v846
    %v1131 = vpack.c.b16 %v851, %v847
    %v1132 = vpack.c.b16 %v852, %v848
    %v1133 = vpack.c.b16 %v857, %v853
    %v1134 = vpack.c.b16 %v858, %v854
    %v1135 = vpack.c.b16 %v859, %v855
    %v1136 = vpack.c.b16 %v860, %v856
    %v1137 = vpack.c.b16 %v865, %v861
    %v1138 = vpack.c.b16 %v866, %v862
    %v1139 = vpack.c.b16 %v867, %v863
    %v1140 = vpack.c.b16 %v868, %v864
    %v1141 = vpack.c.b16 %v873, %v869
    %v1142 = vpack.c.b16 %v874, %v870
    %v1143 = vpack.c.b16 %v875, %v871
    %v1144 = vpack.c.b16 %v876, %v872
    %v1145 = vpack.c.b16 %v881, %v877
    %v1146 = vpack.c.b16 %v882, %v878
    %v1147 = vpack.c.b16 %v883, %v879
    %v1148 = vpack.c.b16 %v884, %v880
    %v1149 = vpack.c.b16 %v889, %v885
    %v1150 = vpack.c.b16 %v890, %v886
    %v1151 = vpack.c.b16 %v891, %v887
    %v1152 = vpack.c.b16 %v892, %v888
    %v1153 = vpack.c.b16 %v897, %v893
    %v1154 = vpack.c.b16 %v898, %v894
    %v1155 = vpack.c.b16 %v899, %v895
    %v1156 = vpack.c.b16 %v900, %v896
    %v1157 = vpack.c.b16 %v905, %v901
    %v1158 = vpack.c.b16 %v906, %v902
    %v1159 = vpack.c.b16 %v907, %v903
    %v1160 = vpack.c.b16 %v908, %v904
    %v1161 = vpack.c.b16 %v913, %v909
    %v1162 = vpack.c.b16 %v914, %v910
    %v1163 = vpack.c.b16 %v915, %v911
    %v1164 = vpack.c.b16 %v916, %v912
    %v1165 = vpack.c.b16 %v921, %v917
    %v1166 = vpack.c.b16 %v922, %v918
    %v1167 = vpack.c.b16 %v923, %v919
    %v1168 = vpack.c.b16 %v924, %v920
    %v1169 = vpack.c.b16 %v929, %v925
    %v1170 = vpack.c.b16 %v930, %v926
    %v1171 = vpack.c.b16 %v931, %v927
    %v1172 = vpack.c.b16 %v932, %v928
    %v1173 = vpack.c.b16 %v937, %v933
    %v1174 = vpack.c.b16 %v938, %v934
    %v1175 = vpack.c.b16 %v939, %v935
    %v1176 = vpack.c.b16 %v940, %v936
    %v1177 = vpack.c.b16 %v945, %v941
    %v1178 = vpack.c.b16 %v946, %v942
    %v1179 = vpack.c.b16 %v947, %v943
    %v1180 = vpack.c.b16 %v948, %v944
    %v1181 = vpack.c.b16 %v953, %v949
    %v1182 = vpack.c.b16 %v954, %v950
    %v1183 = vpack.c.b16 %v955, %v951
    %v1184 = vpack.c.b16 %v956, %v952
    %v1185 = vpack.c.b16 %v961, %v957
    %v1186 = vpack.c.b16 %v962, %v958
    %v1187 = vpack.c.b16 %v963, %v959
    %v1188 = vpack.c.b16 %v964, %v960
    %v1189 = vpack.c.b16 %v969, %v965
    %v1190 = vpack.c.b16 %v970, %v966
    %v1191 = vpack.c.b16 %v971, %v967
    %v1192 = vpack.c.b16 %v972, %v968
    %v1193 = vpack.c.b16 %v977, %v973
    %v1194 = vpack.c.b16 %v978, %v974
    %v1195 = vpack.c.b16 %v979, %v975
    %v1196 = vpack.c.b16 %v980, %v976
    %v1197 = vpack.c.b16 %v985, %v981
    %v1198 = vpack.c.b16 %v986, %v982
    %v1199 = vpack.c.b16 %v987, %v983
    %v1200 = vpack.c.b16 %v988, %v984
    %v1201 = vpack.c.b16 %v993, %v989
    %v1202 = vpack.c.b16 %v994, %v990
    %v1203 = vpack.c.b16 %v995, %v991
    %v1204 = vpack.c.b16 %v996, %v992
    %v1205 = vpack.c.b16 %v1001, %v997
    %v1206 = vpack.c.b16 %v1002, %v998
    %v1207 = vpack.c.b16 %v1003, %v999
    %v1208 = vpack.c.b16 %v1004, %v1000
    %v1209 = vpack.c.b16 %v1009, %v1005
    %v1210 = vpack.c.b16 %v1010, %v1006
    %v1211 = vpack.c.b16 %v1011, %v1007
    %v1212 = vpack.c.b16 %v1012, %v1008
    %v1213 = vpack.c.b16 %v1017, %v1013
    %v1214 = vpack.c.b16 %v1018, %v1014
    %v1215 = vpack.c.b16 %v1019, %v1015
    %v1216 = vpack.c.b16 %v1020, %v1016
    %vm1413 = vcmask 130048
    %v1415 = vsel %vm1413, %v177, 0
    %v1418 = vsel %vm1413, %v184, 0
    %v1421 = vsel %vm1413, %v191, 0
    %v1424 = vsel %vm1413, %v198, 0
    %v1427 = vsel %vm1413, %v205, 0
    %v1430 = vsel %vm1413, %v212, 0
    %v1433 = vsel %vm1413, %v219, 0
    %v1436 = vsel %vm1413, %v226, 0
    %1438 = vmatpush.bf16.msra.mxu0 %v1049
    %1439 = vmatpush.bf16.msra.mxu0 %v1045
    %1440 = vmatpush.bf16.msra.mxu0 %v1041
    %1441 = vmatpush.bf16.msra.mxu0 %v1037
    %1442 = vmatpush.bf16.msra.mxu0 %v1033
    %1443 = vmatpush.bf16.msra.mxu0 %v1029
    %1444 = vmatpush.bf16.msra.mxu0 %v1025
    %1445 = vmatpush.bf16.msra.mxu0 %v1021
    %1446 = vmatmul.bf16.gmra.mxu0 %v171
    %v1447 = vpop.f32.mrf.mxu0
    %v1448 = vadd.f32 %v425, %v1447
    %v1449 = vpop.f32.mrf.mxu0
    %v1450 = vadd.f32 %v425, %v1449
    %1451 = vmatmul.bf16.gmra.mxu0 %v178
    %v1452 = vpop.f32.mrf.mxu0
    %v1453 = vadd.f32 %v425, %v1452
    %v1454 = vpop.f32.mrf.mxu0
    %v1455 = vadd.f32 %v425, %v1454
    %1456 = vmatmul.bf16.gmra.mxu0 %v185
    %v1457 = vpop.f32.mrf.mxu0
    %v1458 = vadd.f32 %v425, %v1457
    %v1459 = vpop.f32.mrf.mxu0
    %v1460 = vadd.f32 %v425, %v1459
    %1461 = vmatmul.bf16.gmra.mxu0 %v192
    %v1462 = vpop.f32.mrf.mxu0
    %v1463 = vadd.f32 %v425, %v1462
    %v1464 = vpop.f32.mrf.mxu0
    %v1465 = vadd.f32 %v425, %v1464
    %1466 = vmatmul.bf16.gmra.mxu0 %v199
    %v1467 = vpop.f32.mrf.mxu0
    %v1468 = vadd.f32 %v425, %v1467
    %v1469 = vpop.f32.mrf.mxu0
    %v1470 = vadd.f32 %v425, %v1469
    %1471 = vmatmul.bf16.gmra.mxu0 %v206
    %v1472 = vpop.f32.mrf.mxu0
    %v1473 = vadd.f32 %v425, %v1472
    %v1474 = vpop.f32.mrf.mxu0
    %v1475 = vadd.f32 %v425, %v1474
    %1476 = vmatmul.bf16.gmra.mxu0 %v213
    %v1477 = vpop.f32.mrf.mxu0
    %v1478 = vadd.f32 %v425, %v1477
    %v1479 = vpop.f32.mrf.mxu0
    %v1480 = vadd.f32 %v425, %v1479
    %1481 = vmatmul.bf16.gmra.mxu0 %v220
    %v1482 = vpop.f32.mrf.mxu0
    %v1483 = vadd.f32 %v425, %v1482
    %v1484 = vpop.f32.mrf.mxu0
    %v1485 = vadd.f32 %v425, %v1484
    %1486 = vdwg.mxu0
    %1487 = vmatpush.bf16.msra.mxu0 %v1081
    %1488 = vmatpush.bf16.msra.mxu0 %v1077
    %1489 = vmatpush.bf16.msra.mxu0 %v1073
    %1490 = vmatpush.bf16.msra.mxu0 %v1069
    %1491 = vmatpush.bf16.msra.mxu0 %v1065
    %1492 = vmatpush.bf16.msra.mxu0 %v1061
    %1493 = vmatpush.bf16.msra.mxu0 %v1057
    %1494 = vmatpush.bf16.msra.mxu0 %v1053
    %1495 = vmatmul.bf16.gmra.mxu0 %v172
    %v1496 = vpop.f32.mrf.mxu0
    %v1497 = vadd.f32 %v1448, %v1496
    %v1498 = vpop.f32.mrf.mxu0
    %v1499 = vadd.f32 %v1450, %v1498
    %1500 = vmatmul.bf16.gmra.mxu0 %v179
    %v1501 = vpop.f32.mrf.mxu0
    %v1502 = vadd.f32 %v1453, %v1501
    %v1503 = vpop.f32.mrf.mxu0
    %v1504 = vadd.f32 %v1455, %v1503
    %1505 = vmatmul.bf16.gmra.mxu0 %v186
    %v1506 = vpop.f32.mrf.mxu0
    %v1507 = vadd.f32 %v1458, %v1506
    %v1508 = vpop.f32.mrf.mxu0
    %v1509 = vadd.f32 %v1460, %v1508
    %1510 = vmatmul.bf16.gmra.mxu0 %v193
    %v1511 = vpop.f32.mrf.mxu0
    %v1512 = vadd.f32 %v1463, %v1511
    %v1513 = vpop.f32.mrf.mxu0
    %v1514 = vadd.f32 %v1465, %v1513
    %1515 = vmatmul.bf16.gmra.mxu0 %v200
    %v1516 = vpop.f32.mrf.mxu0
    %v1517 = vadd.f32 %v1468, %v1516
    %v1518 = vpop.f32.mrf.mxu0
    %v1519 = vadd.f32 %v1470, %v1518
    %1520 = vmatmul.bf16.gmra.mxu0 %v207
    %v1521 = vpop.f32.mrf.mxu0
    %v1522 = vadd.f32 %v1473, %v1521
    %v1523 = vpop.f32.mrf.mxu0
    %v1524 = vadd.f32 %v1475, %v1523
    %1525 = vmatmul.bf16.gmra.mxu0 %v214
    %v1526 = vpop.f32.mrf.mxu0
    %v1527 = vadd.f32 %v1478, %v1526
    %v1528 = vpop.f32.mrf.mxu0
    %v1529 = vadd.f32 %v1480, %v1528
    %1530 = vmatmul.bf16.gmra.mxu0 %v221
    %v1531 = vpop.f32.mrf.mxu0
    %v1532 = vadd.f32 %v1483, %v1531
    %v1533 = vpop.f32.mrf.mxu0
    %v1534 = vadd.f32 %v1485, %v1533
    %1535 = vdwg.mxu0
    %1536 = vmatpush.bf16.msra.mxu0 %v1113
    %1537 = vmatpush.bf16.msra.mxu0 %v1109
    %1538 = vmatpush.bf16.msra.mxu0 %v1105
    %1539 = vmatpush.bf16.msra.mxu0 %v1101
    %1540 = vmatpush.bf16.msra.mxu0 %v1097
    %1541 = vmatpush.bf16.msra.mxu0 %v1093
    %1542 = vmatpush.bf16.msra.mxu0 %v1089
    %1543 = vmatpush.bf16.msra.mxu0 %v1085
    %1544 = vmatmul.bf16.gmra.mxu0 %v173
    %v1545 = vpop.f32.mrf.mxu0
    %v1546 = vadd.f32 %v1497, %v1545
    %v1547 = vpop.f32.mrf.mxu0
    %v1548 = vadd.f32 %v1499, %v1547
    %1549 = vmatmul.bf16.gmra.mxu0 %v180
    %v1550 = vpop.f32.mrf.mxu0
    %v1551 = vadd.f32 %v1502, %v1550
    %v1552 = vpop.f32.mrf.mxu0
    %v1553 = vadd.f32 %v1504, %v1552
    %1554 = vmatmul.bf16.gmra.mxu0 %v187
    %v1555 = vpop.f32.mrf.mxu0
    %v1556 = vadd.f32 %v1507, %v1555
    %v1557 = vpop.f32.mrf.mxu0
    %v1558 = vadd.f32 %v1509, %v1557
    %1559 = vmatmul.bf16.gmra.mxu0 %v194
    %v1560 = vpop.f32.mrf.mxu0
    %v1561 = vadd.f32 %v1512, %v1560
    %v1562 = vpop.f32.mrf.mxu0
    %v1563 = vadd.f32 %v1514, %v1562
    %1564 = vmatmul.bf16.gmra.mxu0 %v201
    %v1565 = vpop.f32.mrf.mxu0
    %v1566 = vadd.f32 %v1517, %v1565
    %v1567 = vpop.f32.mrf.mxu0
    %v1568 = vadd.f32 %v1519, %v1567
    %1569 = vmatmul.bf16.gmra.mxu0 %v208
    %v1570 = vpop.f32.mrf.mxu0
    %v1571 = vadd.f32 %v1522, %v1570
    %v1572 = vpop.f32.mrf.mxu0
    %v1573 = vadd.f32 %v1524, %v1572
    %1574 = vmatmul.bf16.gmra.mxu0 %v215
    %v1575 = vpop.f32.mrf.mxu0
    %v1576 = vadd.f32 %v1527, %v1575
    %v1577 = vpop.f32.mrf.mxu0
    %v1578 = vadd.f32 %v1529, %v1577
    %1579 = vmatmul.bf16.gmra.mxu0 %v222
    %v1580 = vpop.f32.mrf.mxu0
    %v1581 = vadd.f32 %v1532, %v1580
    %v1582 = vpop.f32.mrf.mxu0
    %v1583 = vadd.f32 %v1534, %v1582
    %1584 = vdwg.mxu0
    %1585 = vmatpush.bf16.msra.mxu0 %v1145
    %1586 = vmatpush.bf16.msra.mxu0 %v1141
    %1587 = vmatpush.bf16.msra.mxu0 %v1137
    %1588 = vmatpush.bf16.msra.mxu0 %v1133
    %1589 = vmatpush.bf16.msra.mxu0 %v1129
    %1590 = vmatpush.bf16.msra.mxu0 %v1125
    %1591 = vmatpush.bf16.msra.mxu0 %v1121
    %1592 = vmatpush.bf16.msra.mxu0 %v1117
    %1593 = vmatmul.bf16.gmra.mxu0 %v174
    %v1594 = vpop.f32.mrf.mxu0
    %v1595 = vadd.f32 %v1546, %v1594
    %v1596 = vpop.f32.mrf.mxu0
    %v1597 = vadd.f32 %v1548, %v1596
    %1598 = vmatmul.bf16.gmra.mxu0 %v181
    %v1599 = vpop.f32.mrf.mxu0
    %v1600 = vadd.f32 %v1551, %v1599
    %v1601 = vpop.f32.mrf.mxu0
    %v1602 = vadd.f32 %v1553, %v1601
    %1603 = vmatmul.bf16.gmra.mxu0 %v188
    %v1604 = vpop.f32.mrf.mxu0
    %v1605 = vadd.f32 %v1556, %v1604
    %v1606 = vpop.f32.mrf.mxu0
    %v1607 = vadd.f32 %v1558, %v1606
    %1608 = vmatmul.bf16.gmra.mxu0 %v195
    %v1609 = vpop.f32.mrf.mxu0
    %v1610 = vadd.f32 %v1561, %v1609
    %v1611 = vpop.f32.mrf.mxu0
    %v1612 = vadd.f32 %v1563, %v1611
    %1613 = vmatmul.bf16.gmra.mxu0 %v202
    %v1614 = vpop.f32.mrf.mxu0
    %v1615 = vadd.f32 %v1566, %v1614
    %v1616 = vpop.f32.mrf.mxu0
    %v1617 = vadd.f32 %v1568, %v1616
    %1618 = vmatmul.bf16.gmra.mxu0 %v209
    %v1619 = vpop.f32.mrf.mxu0
    %v1620 = vadd.f32 %v1571, %v1619
    %v1621 = vpop.f32.mrf.mxu0
    %v1622 = vadd.f32 %v1573, %v1621
    %1623 = vmatmul.bf16.gmra.mxu0 %v216
    %v1624 = vpop.f32.mrf.mxu0
    %v1625 = vadd.f32 %v1576, %v1624
    %v1626 = vpop.f32.mrf.mxu0
    %v1627 = vadd.f32 %v1578, %v1626
    %1628 = vmatmul.bf16.gmra.mxu0 %v223
    %v1629 = vpop.f32.mrf.mxu0
    %v1630 = vadd.f32 %v1581, %v1629
    %v1631 = vpop.f32.mrf.mxu0
    %v1632 = vadd.f32 %v1583, %v1631
    %1633 = vdwg.mxu0
    %1634 = vmatpush.bf16.msra.mxu0 %v1177
    %1635 = vmatpush.bf16.msra.mxu0 %v1173
    %1636 = vmatpush.bf16.msra.mxu0 %v1169
    %1637 = vmatpush.bf16.msra.mxu0 %v1165
    %1638 = vmatpush.bf16.msra.mxu0 %v1161
    %1639 = vmatpush.bf16.msra.mxu0 %v1157
    %1640 = vmatpush.bf16.msra.mxu0 %v1153
    %1641 = vmatpush.bf16.msra.mxu0 %v1149
    %1642 = vmatmul.bf16.gmra.mxu0 %v175
    %v1643 = vpop.f32.mrf.mxu0
    %v1644 = vadd.f32 %v1595, %v1643
    %v1645 = vpop.f32.mrf.mxu0
    %v1646 = vadd.f32 %v1597, %v1645
    %1647 = vmatmul.bf16.gmra.mxu0 %v182
    %v1648 = vpop.f32.mrf.mxu0
    %v1649 = vadd.f32 %v1600, %v1648
    %v1650 = vpop.f32.mrf.mxu0
    %v1651 = vadd.f32 %v1602, %v1650
    %1652 = vmatmul.bf16.gmra.mxu0 %v189
    %v1653 = vpop.f32.mrf.mxu0
    %v1654 = vadd.f32 %v1605, %v1653
    %v1655 = vpop.f32.mrf.mxu0
    %v1656 = vadd.f32 %v1607, %v1655
    %1657 = vmatmul.bf16.gmra.mxu0 %v196
    %v1658 = vpop.f32.mrf.mxu0
    %v1659 = vadd.f32 %v1610, %v1658
    %v1660 = vpop.f32.mrf.mxu0
    %v1661 = vadd.f32 %v1612, %v1660
    %1662 = vmatmul.bf16.gmra.mxu0 %v203
    %v1663 = vpop.f32.mrf.mxu0
    %v1664 = vadd.f32 %v1615, %v1663
    %v1665 = vpop.f32.mrf.mxu0
    %v1666 = vadd.f32 %v1617, %v1665
    %1667 = vmatmul.bf16.gmra.mxu0 %v210
    %v1668 = vpop.f32.mrf.mxu0
    %v1669 = vadd.f32 %v1620, %v1668
    %v1670 = vpop.f32.mrf.mxu0
    %v1671 = vadd.f32 %v1622, %v1670
    %1672 = vmatmul.bf16.gmra.mxu0 %v217
    %v1673 = vpop.f32.mrf.mxu0
    %v1674 = vadd.f32 %v1625, %v1673
    %v1675 = vpop.f32.mrf.mxu0
    %v1676 = vadd.f32 %v1627, %v1675
    %1677 = vmatmul.bf16.gmra.mxu0 %v224
    %v1678 = vpop.f32.mrf.mxu0
    %v1679 = vadd.f32 %v1630, %v1678
    %v1680 = vpop.f32.mrf.mxu0
    %v1681 = vadd.f32 %v1632, %v1680
    %1682 = vdwg.mxu0
    %1683 = vmatpush.bf16.msra.mxu0 %v1209
    %1684 = vmatpush.bf16.msra.mxu0 %v1205
    %1685 = vmatpush.bf16.msra.mxu0 %v1201
    %1686 = vmatpush.bf16.msra.mxu0 %v1197
    %1687 = vmatpush.bf16.msra.mxu0 %v1193
    %1688 = vmatpush.bf16.msra.mxu0 %v1189
    %1689 = vmatpush.bf16.msra.mxu0 %v1185
    %1690 = vmatpush.bf16.msra.mxu0 %v1181
    %1691 = vmatmul.bf16.gmra.mxu0 %v176
    %v1692 = vpop.f32.mrf.mxu0
    %v1693 = vadd.f32 %v1644, %v1692
    %v1694 = vpop.f32.mrf.mxu0
    %v1695 = vadd.f32 %v1646, %v1694
    %1696 = vmatmul.bf16.gmra.mxu0 %v183
    %v1697 = vpop.f32.mrf.mxu0
    %v1698 = vadd.f32 %v1649, %v1697
    %v1699 = vpop.f32.mrf.mxu0
    %v1700 = vadd.f32 %v1651, %v1699
    %1701 = vmatmul.bf16.gmra.mxu0 %v190
    %v1702 = vpop.f32.mrf.mxu0
    %v1703 = vadd.f32 %v1654, %v1702
    %v1704 = vpop.f32.mrf.mxu0
    %v1705 = vadd.f32 %v1656, %v1704
    %1706 = vmatmul.bf16.gmra.mxu0 %v197
    %v1707 = vpop.f32.mrf.mxu0
    %v1708 = vadd.f32 %v1659, %v1707
    %v1709 = vpop.f32.mrf.mxu0
    %v1710 = vadd.f32 %v1661, %v1709
    %1711 = vmatmul.bf16.gmra.mxu0 %v204
    %v1712 = vpop.f32.mrf.mxu0
    %v1713 = vadd.f32 %v1664, %v1712
    %v1714 = vpop.f32.mrf.mxu0
    %v1715 = vadd.f32 %v1666, %v1714
    %1716 = vmatmul.bf16.gmra.mxu0 %v211
    %v1717 = vpop.f32.mrf.mxu0
    %v1718 = vadd.f32 %v1669, %v1717
    %v1719 = vpop.f32.mrf.mxu0
    %v1720 = vadd.f32 %v1671, %v1719
    %1721 = vmatmul.bf16.gmra.mxu0 %v218
    %v1722 = vpop.f32.mrf.mxu0
    %v1723 = vadd.f32 %v1674, %v1722
    %v1724 = vpop.f32.mrf.mxu0
    %v1725 = vadd.f32 %v1676, %v1724
    %1726 = vmatmul.bf16.gmra.mxu0 %v225
    %v1727 = vpop.f32.mrf.mxu0
    %v1728 = vadd.f32 %v1679, %v1727
    %v1729 = vpop.f32.mrf.mxu0
    %v1730 = vadd.f32 %v1681, %v1729
    %1731 = vdwg.mxu0
    %1732 = vmatpush.bf16.msra.mxu0 0
    %1733 = vmatpush.bf16.msra.mxu0 0
    %1734 = vmatpush.bf16.msra.mxu0 0
    %1735 = vmatpush.bf16.msra.mxu0 0
    %1736 = vmatpush.bf16.msra.mxu0 0
    %1737 = vmatpush.bf16.msra.mxu0 0
    %1738 = vmatpush.bf16.msra.mxu0 0
    %1739 = vmatpush.bf16.msra.mxu0 %v1213
    %1740 = vmatmul.bf16.gmra.mxu0 %v1415
    %v1741 = vpop.f32.mrf.mxu0
    %v1742 = vadd.f32 %v1693, %v1741
    %v1743 = vpop.f32.mrf.mxu0
    %v1744 = vadd.f32 %v1695, %v1743
    %1745 = vmatmul.bf16.gmra.mxu0 %v1418
    %v1746 = vpop.f32.mrf.mxu0
    %v1747 = vadd.f32 %v1698, %v1746
    %v1748 = vpop.f32.mrf.mxu0
    %v1749 = vadd.f32 %v1700, %v1748
    %1750 = vmatmul.bf16.gmra.mxu0 %v1421
    %v1751 = vpop.f32.mrf.mxu0
    %v1752 = vadd.f32 %v1703, %v1751
    %v1753 = vpop.f32.mrf.mxu0
    %v1754 = vadd.f32 %v1705, %v1753
    %1755 = vmatmul.bf16.gmra.mxu0 %v1424
    %v1756 = vpop.f32.mrf.mxu0
    %v1757 = vadd.f32 %v1708, %v1756
    %v1758 = vpop.f32.mrf.mxu0
    %v1759 = vadd.f32 %v1710, %v1758
    %1760 = vmatmul.bf16.gmra.mxu0 %v1427
    %v1761 = vpop.f32.mrf.mxu0
    %v1762 = vadd.f32 %v1713, %v1761
    %v1763 = vpop.f32.mrf.mxu0
    %v1764 = vadd.f32 %v1715, %v1763
    %1765 = vmatmul.bf16.gmra.mxu0 %v1430
    %v1766 = vpop.f32.mrf.mxu0
    %v1767 = vadd.f32 %v1718, %v1766
    %v1768 = vpop.f32.mrf.mxu0
    %v1769 = vadd.f32 %v1720, %v1768
    %1770 = vmatmul.bf16.gmra.mxu0 %v1433
    %v1771 = vpop.f32.mrf.mxu0
    %v1772 = vadd.f32 %v1723, %v1771
    %v1773 = vpop.f32.mrf.mxu0
    %v1774 = vadd.f32 %v1725, %v1773
    %1775 = vmatmul.bf16.gmra.mxu0 %v1436
    %v1776 = vpop.f32.mrf.mxu0
    %v1777 = vadd.f32 %v1728, %v1776
    %v1778 = vpop.f32.mrf.mxu0
    %v1779 = vadd.f32 %v1730, %v1778
    %1780 = vdwg.mxu0
    %1781 = vmatpush.bf16.msra.mxu0 %v1050
    %1782 = vmatpush.bf16.msra.mxu0 %v1046
    %1783 = vmatpush.bf16.msra.mxu0 %v1042
    %1784 = vmatpush.bf16.msra.mxu0 %v1038
    %1785 = vmatpush.bf16.msra.mxu0 %v1034
    %1786 = vmatpush.bf16.msra.mxu0 %v1030
    %1787 = vmatpush.bf16.msra.mxu0 %v1026
    %1788 = vmatpush.bf16.msra.mxu0 %v1022
    %1789 = vmatmul.bf16.gmra.mxu0 %v171
    %v1790 = vpop.f32.mrf.mxu0
    %v1791 = vadd.f32 %v426, %v1790
    %v1792 = vpop.f32.mrf.mxu0
    %v1793 = vadd.f32 %v426, %v1792
    %1794 = vmatmul.bf16.gmra.mxu0 %v178
    %v1795 = vpop.f32.mrf.mxu0
    %v1796 = vadd.f32 %v426, %v1795
    %v1797 = vpop.f32.mrf.mxu0
    %v1798 = vadd.f32 %v426, %v1797
    %1799 = vmatmul.bf16.gmra.mxu0 %v185
    %v1800 = vpop.f32.mrf.mxu0
    %v1801 = vadd.f32 %v426, %v1800
    %v1802 = vpop.f32.mrf.mxu0
    %v1803 = vadd.f32 %v426, %v1802
    %1804 = vmatmul.bf16.gmra.mxu0 %v192
    %v1805 = vpop.f32.mrf.mxu0
    %v1806 = vadd.f32 %v426, %v1805
    %v1807 = vpop.f32.mrf.mxu0
    %v1808 = vadd.f32 %v426, %v1807
    %1809 = vmatmul.bf16.gmra.mxu0 %v199
    %v1810 = vpop.f32.mrf.mxu0
    %v1811 = vadd.f32 %v426, %v1810
    %v1812 = vpop.f32.mrf.mxu0
    %v1813 = vadd.f32 %v426, %v1812
    %1814 = vmatmul.bf16.gmra.mxu0 %v206
    %v1815 = vpop.f32.mrf.mxu0
    %v1816 = vadd.f32 %v426, %v1815
    %v1817 = vpop.f32.mrf.mxu0
    %v1818 = vadd.f32 %v426, %v1817
    %1819 = vmatmul.bf16.gmra.mxu0 %v213
    %v1820 = vpop.f32.mrf.mxu0
    %v1821 = vadd.f32 %v426, %v1820
    %v1822 = vpop.f32.mrf.mxu0
    %v1823 = vadd.f32 %v426, %v1822
    %1824 = vmatmul.bf16.gmra.mxu0 %v220
    %v1825 = vpop.f32.mrf.mxu0
    %v1826 = vadd.f32 %v426, %v1825
    %v1827 = vpop.f32.mrf.mxu0
    %v1828 = vadd.f32 %v426, %v1827
    %1829 = vdwg.mxu0
    %1830 = vmatpush.bf16.msra.mxu0 %v1082
    %1831 = vmatpush.bf16.msra.mxu0 %v1078
    %1832 = vmatpush.bf16.msra.mxu0 %v1074
    %1833 = vmatpush.bf16.msra.mxu0 %v1070
    %1834 = vmatpush.bf16.msra.mxu0 %v1066
    %1835 = vmatpush.bf16.msra.mxu0 %v1062
    %1836 = vmatpush.bf16.msra.mxu0 %v1058
    %1837 = vmatpush.bf16.msra.mxu0 %v1054
    %1838 = vmatmul.bf16.gmra.mxu0 %v172
    %v1839 = vpop.f32.mrf.mxu0
    %v1840 = vadd.f32 %v1791, %v1839
    %v1841 = vpop.f32.mrf.mxu0
    %v1842 = vadd.f32 %v1793, %v1841
    %1843 = vmatmul.bf16.gmra.mxu0 %v179
    %v1844 = vpop.f32.mrf.mxu0
    %v1845 = vadd.f32 %v1796, %v1844
    %v1846 = vpop.f32.mrf.mxu0
    %v1847 = vadd.f32 %v1798, %v1846
    %1848 = vmatmul.bf16.gmra.mxu0 %v186
    %v1849 = vpop.f32.mrf.mxu0
    %v1850 = vadd.f32 %v1801, %v1849
    %v1851 = vpop.f32.mrf.mxu0
    %v1852 = vadd.f32 %v1803, %v1851
    %1853 = vmatmul.bf16.gmra.mxu0 %v193
    %v1854 = vpop.f32.mrf.mxu0
    %v1855 = vadd.f32 %v1806, %v1854
    %v1856 = vpop.f32.mrf.mxu0
    %v1857 = vadd.f32 %v1808, %v1856
    %1858 = vmatmul.bf16.gmra.mxu0 %v200
    %v1859 = vpop.f32.mrf.mxu0
    %v1860 = vadd.f32 %v1811, %v1859
    %v1861 = vpop.f32.mrf.mxu0
    %v1862 = vadd.f32 %v1813, %v1861
    %1863 = vmatmul.bf16.gmra.mxu0 %v207
    %v1864 = vpop.f32.mrf.mxu0
    %v1865 = vadd.f32 %v1816, %v1864
    %v1866 = vpop.f32.mrf.mxu0
    %v1867 = vadd.f32 %v1818, %v1866
    %1868 = vmatmul.bf16.gmra.mxu0 %v214
    %v1869 = vpop.f32.mrf.mxu0
    %v1870 = vadd.f32 %v1821, %v1869
    %v1871 = vpop.f32.mrf.mxu0
    %v1872 = vadd.f32 %v1823, %v1871
    %1873 = vmatmul.bf16.gmra.mxu0 %v221
    %v1874 = vpop.f32.mrf.mxu0
    %v1875 = vadd.f32 %v1826, %v1874
    %v1876 = vpop.f32.mrf.mxu0
    %v1877 = vadd.f32 %v1828, %v1876
    %1878 = vdwg.mxu0
    %1879 = vmatpush.bf16.msra.mxu0 %v1114
    %1880 = vmatpush.bf16.msra.mxu0 %v1110
    %1881 = vmatpush.bf16.msra.mxu0 %v1106
    %1882 = vmatpush.bf16.msra.mxu0 %v1102
    %1883 = vmatpush.bf16.msra.mxu0 %v1098
    %1884 = vmatpush.bf16.msra.mxu0 %v1094
    %1885 = vmatpush.bf16.msra.mxu0 %v1090
    %1886 = vmatpush.bf16.msra.mxu0 %v1086
    %1887 = vmatmul.bf16.gmra.mxu0 %v173
    %v1888 = vpop.f32.mrf.mxu0
    %v1889 = vadd.f32 %v1840, %v1888
    %v1890 = vpop.f32.mrf.mxu0
    %v1891 = vadd.f32 %v1842, %v1890
    %1892 = vmatmul.bf16.gmra.mxu0 %v180
    %v1893 = vpop.f32.mrf.mxu0
    %v1894 = vadd.f32 %v1845, %v1893
    %v1895 = vpop.f32.mrf.mxu0
    %v1896 = vadd.f32 %v1847, %v1895
    %1897 = vmatmul.bf16.gmra.mxu0 %v187
    %v1898 = vpop.f32.mrf.mxu0
    %v1899 = vadd.f32 %v1850, %v1898
    %v1900 = vpop.f32.mrf.mxu0
    %v1901 = vadd.f32 %v1852, %v1900
    %1902 = vmatmul.bf16.gmra.mxu0 %v194
    %v1903 = vpop.f32.mrf.mxu0
    %v1904 = vadd.f32 %v1855, %v1903
    %v1905 = vpop.f32.mrf.mxu0
    %v1906 = vadd.f32 %v1857, %v1905
    %1907 = vmatmul.bf16.gmra.mxu0 %v201
    %v1908 = vpop.f32.mrf.mxu0
    %v1909 = vadd.f32 %v1860, %v1908
    %v1910 = vpop.f32.mrf.mxu0
    %v1911 = vadd.f32 %v1862, %v1910
    %1912 = vmatmul.bf16.gmra.mxu0 %v208
    %v1913 = vpop.f32.mrf.mxu0
    %v1914 = vadd.f32 %v1865, %v1913
    %v1915 = vpop.f32.mrf.mxu0
    %v1916 = vadd.f32 %v1867, %v1915
    %1917 = vmatmul.bf16.gmra.mxu0 %v215
    %v1918 = vpop.f32.mrf.mxu0
    %v1919 = vadd.f32 %v1870, %v1918
    %v1920 = vpop.f32.mrf.mxu0
    %v1921 = vadd.f32 %v1872, %v1920
    %1922 = vmatmul.bf16.gmra.mxu0 %v222
    %v1923 = vpop.f32.mrf.mxu0
    %v1924 = vadd.f32 %v1875, %v1923
    %v1925 = vpop.f32.mrf.mxu0
    %v1926 = vadd.f32 %v1877, %v1925
    %1927 = vdwg.mxu0
    %1928 = vmatpush.bf16.msra.mxu0 %v1146
    %1929 = vmatpush.bf16.msra.mxu0 %v1142
    %1930 = vmatpush.bf16.msra.mxu0 %v1138
    %1931 = vmatpush.bf16.msra.mxu0 %v1134
    %1932 = vmatpush.bf16.msra.mxu0 %v1130
    %1933 = vmatpush.bf16.msra.mxu0 %v1126
    %1934 = vmatpush.bf16.msra.mxu0 %v1122
    %1935 = vmatpush.bf16.msra.mxu0 %v1118
    %1936 = vmatmul.bf16.gmra.mxu0 %v174
    %v1937 = vpop.f32.mrf.mxu0
    %v1938 = vadd.f32 %v1889, %v1937
    %v1939 = vpop.f32.mrf.mxu0
    %v1940 = vadd.f32 %v1891, %v1939
    %1941 = vmatmul.bf16.gmra.mxu0 %v181
    %v1942 = vpop.f32.mrf.mxu0
    %v1943 = vadd.f32 %v1894, %v1942
    %v1944 = vpop.f32.mrf.mxu0
    %v1945 = vadd.f32 %v1896, %v1944
    %1946 = vmatmul.bf16.gmra.mxu0 %v188
    %v1947 = vpop.f32.mrf.mxu0
    %v1948 = vadd.f32 %v1899, %v1947
    %v1949 = vpop.f32.mrf.mxu0
    %v1950 = vadd.f32 %v1901, %v1949
    %1951 = vmatmul.bf16.gmra.mxu0 %v195
    %v1952 = vpop.f32.mrf.mxu0
    %v1953 = vadd.f32 %v1904, %v1952
    %v1954 = vpop.f32.mrf.mxu0
    %v1955 = vadd.f32 %v1906, %v1954
    %1956 = vmatmul.bf16.gmra.mxu0 %v202
    %v1957 = vpop.f32.mrf.mxu0
    %v1958 = vadd.f32 %v1909, %v1957
    %v1959 = vpop.f32.mrf.mxu0
    %v1960 = vadd.f32 %v1911, %v1959
    %1961 = vmatmul.bf16.gmra.mxu0 %v209
    %v1962 = vpop.f32.mrf.mxu0
    %v1963 = vadd.f32 %v1914, %v1962
    %v1964 = vpop.f32.mrf.mxu0
    %v1965 = vadd.f32 %v1916, %v1964
    %1966 = vmatmul.bf16.gmra.mxu0 %v216
    %v1967 = vpop.f32.mrf.mxu0
    %v1968 = vadd.f32 %v1919, %v1967
    %v1969 = vpop.f32.mrf.mxu0
    %v1970 = vadd.f32 %v1921, %v1969
    %1971 = vmatmul.bf16.gmra.mxu0 %v223
    %v1972 = vpop.f32.mrf.mxu0
    %v1973 = vadd.f32 %v1924, %v1972
    %v1974 = vpop.f32.mrf.mxu0
    %v1975 = vadd.f32 %v1926, %v1974
    %1976 = vdwg.mxu0
    %1977 = vmatpush.bf16.msra.mxu0 %v1178
    %1978 = vmatpush.bf16.msra.mxu0 %v1174
    %1979 = vmatpush.bf16.msra.mxu0 %v1170
    %1980 = vmatpush.bf16.msra.mxu0 %v1166
    %1981 = vmatpush.bf16.msra.mxu0 %v1162
    %1982 = vmatpush.bf16.msra.mxu0 %v1158
    %1983 = vmatpush.bf16.msra.mxu0 %v1154
    %1984 = vmatpush.bf16.msra.mxu0 %v1150
    %1985 = vmatmul.bf16.gmra.mxu0 %v175
    %v1986 = vpop.f32.mrf.mxu0
    %v1987 = vadd.f32 %v1938, %v1986
    %v1988 = vpop.f32.mrf.mxu0
    %v1989 = vadd.f32 %v1940, %v1988
    %1990 = vmatmul.bf16.gmra.mxu0 %v182
    %v1991 = vpop.f32.mrf.mxu0
    %v1992 = vadd.f32 %v1943, %v1991
    %v1993 = vpop.f32.mrf.mxu0
    %v1994 = vadd.f32 %v1945, %v1993
    %1995 = vmatmul.bf16.gmra.mxu0 %v189
    %v1996 = vpop.f32.mrf.mxu0
    %v1997 = vadd.f32 %v1948, %v1996
    %v1998 = vpop.f32.mrf.mxu0
    %v1999 = vadd.f32 %v1950, %v1998
    %2000 = vmatmul.bf16.gmra.mxu0 %v196
    %v2001 = vpop.f32.mrf.mxu0
    %v2002 = vadd.f32 %v1953, %v2001
    %v2003 = vpop.f32.mrf.mxu0
    %v2004 = vadd.f32 %v1955, %v2003
    %2005 = vmatmul.bf16.gmra.mxu0 %v203
    %v2006 = vpop.f32.mrf.mxu0
    %v2007 = vadd.f32 %v1958, %v2006
    %v2008 = vpop.f32.mrf.mxu0
    %v2009 = vadd.f32 %v1960, %v2008
    %2010 = vmatmul.bf16.gmra.mxu0 %v210
    %v2011 = vpop.f32.mrf.mxu0
    %v2012 = vadd.f32 %v1963, %v2011
    %v2013 = vpop.f32.mrf.mxu0
    %v2014 = vadd.f32 %v1965, %v2013
    %2015 = vmatmul.bf16.gmra.mxu0 %v217
    %v2016 = vpop.f32.mrf.mxu0
    %v2017 = vadd.f32 %v1968, %v2016
    %v2018 = vpop.f32.mrf.mxu0
    %v2019 = vadd.f32 %v1970, %v2018
    %2020 = vmatmul.bf16.gmra.mxu0 %v224
    %v2021 = vpop.f32.mrf.mxu0
    %v2022 = vadd.f32 %v1973, %v2021
    %v2023 = vpop.f32.mrf.mxu0
    %v2024 = vadd.f32 %v1975, %v2023
    %2025 = vdwg.mxu0
    %2026 = vmatpush.bf16.msra.mxu0 %v1210
    %2027 = vmatpush.bf16.msra.mxu0 %v1206
    %2028 = vmatpush.bf16.msra.mxu0 %v1202
    %2029 = vmatpush.bf16.msra.mxu0 %v1198
    %2030 = vmatpush.bf16.msra.mxu0 %v1194
    %2031 = vmatpush.bf16.msra.mxu0 %v1190
    %2032 = vmatpush.bf16.msra.mxu0 %v1186
    %2033 = vmatpush.bf16.msra.mxu0 %v1182
    %2034 = vmatmul.bf16.gmra.mxu0 %v176
    %v2035 = vpop.f32.mrf.mxu0
    %v2036 = vadd.f32 %v1987, %v2035
    %v2037 = vpop.f32.mrf.mxu0
    %v2038 = vadd.f32 %v1989, %v2037
    %2039 = vmatmul.bf16.gmra.mxu0 %v183
    %v2040 = vpop.f32.mrf.mxu0
    %v2041 = vadd.f32 %v1992, %v2040
    %v2042 = vpop.f32.mrf.mxu0
    %v2043 = vadd.f32 %v1994, %v2042
    %2044 = vmatmul.bf16.gmra.mxu0 %v190
    %v2045 = vpop.f32.mrf.mxu0
    %v2046 = vadd.f32 %v1997, %v2045
    %v2047 = vpop.f32.mrf.mxu0
    %v2048 = vadd.f32 %v1999, %v2047
    %2049 = vmatmul.bf16.gmra.mxu0 %v197
    %v2050 = vpop.f32.mrf.mxu0
    %v2051 = vadd.f32 %v2002, %v2050
    %v2052 = vpop.f32.mrf.mxu0
    %v2053 = vadd.f32 %v2004, %v2052
    %2054 = vmatmul.bf16.gmra.mxu0 %v204
    %v2055 = vpop.f32.mrf.mxu0
    %v2056 = vadd.f32 %v2007, %v2055
    %v2057 = vpop.f32.mrf.mxu0
    %v2058 = vadd.f32 %v2009, %v2057
    %2059 = vmatmul.bf16.gmra.mxu0 %v211
    %v2060 = vpop.f32.mrf.mxu0
    %v2061 = vadd.f32 %v2012, %v2060
    %v2062 = vpop.f32.mrf.mxu0
    %v2063 = vadd.f32 %v2014, %v2062
    %2064 = vmatmul.bf16.gmra.mxu0 %v218
    %v2065 = vpop.f32.mrf.mxu0
    %v2066 = vadd.f32 %v2017, %v2065
    %v2067 = vpop.f32.mrf.mxu0
    %v2068 = vadd.f32 %v2019, %v2067
    %2069 = vmatmul.bf16.gmra.mxu0 %v225
    %v2070 = vpop.f32.mrf.mxu0
    %v2071 = vadd.f32 %v2022, %v2070
    %v2072 = vpop.f32.mrf.mxu0
    %v2073 = vadd.f32 %v2024, %v2072
    %2074 = vdwg.mxu0
    %2075 = vmatpush.bf16.msra.mxu0 0
    %2076 = vmatpush.bf16.msra.mxu0 0
    %2077 = vmatpush.bf16.msra.mxu0 0
    %2078 = vmatpush.bf16.msra.mxu0 0
    %2079 = vmatpush.bf16.msra.mxu0 0
    %2080 = vmatpush.bf16.msra.mxu0 0
    %2081 = vmatpush.bf16.msra.mxu0 0
    %2082 = vmatpush.bf16.msra.mxu0 %v1214
    %2083 = vmatmul.bf16.gmra.mxu0 %v1415
    %v2084 = vpop.f32.mrf.mxu0
    %v2085 = vadd.f32 %v2036, %v2084
    %v2086 = vpop.f32.mrf.mxu0
    %v2087 = vadd.f32 %v2038, %v2086
    %2088 = vmatmul.bf16.gmra.mxu0 %v1418
    %v2089 = vpop.f32.mrf.mxu0
    %v2090 = vadd.f32 %v2041, %v2089
    %v2091 = vpop.f32.mrf.mxu0
    %v2092 = vadd.f32 %v2043, %v2091
    %2093 = vmatmul.bf16.gmra.mxu0 %v1421
    %v2094 = vpop.f32.mrf.mxu0
    %v2095 = vadd.f32 %v2046, %v2094
    %v2096 = vpop.f32.mrf.mxu0
    %v2097 = vadd.f32 %v2048, %v2096
    %2098 = vmatmul.bf16.gmra.mxu0 %v1424
    %v2099 = vpop.f32.mrf.mxu0
    %v2100 = vadd.f32 %v2051, %v2099
    %v2101 = vpop.f32.mrf.mxu0
    %v2102 = vadd.f32 %v2053, %v2101
    %2103 = vmatmul.bf16.gmra.mxu0 %v1427
    %v2104 = vpop.f32.mrf.mxu0
    %v2105 = vadd.f32 %v2056, %v2104
    %v2106 = vpop.f32.mrf.mxu0
    %v2107 = vadd.f32 %v2058, %v2106
    %2108 = vmatmul.bf16.gmra.mxu0 %v1430
    %v2109 = vpop.f32.mrf.mxu0
    %v2110 = vadd.f32 %v2061, %v2109
    %v2111 = vpop.f32.mrf.mxu0
    %v2112 = vadd.f32 %v2063, %v2111
    %2113 = vmatmul.bf16.gmra.mxu0 %v1433
    %v2114 = vpop.f32.mrf.mxu0
    %v2115 = vadd.f32 %v2066, %v2114
    %v2116 = vpop.f32.mrf.mxu0
    %v2117 = vadd.f32 %v2068, %v2116
    %2118 = vmatmul.bf16.gmra.mxu0 %v1436
    %v2119 = vpop.f32.mrf.mxu0
    %v2120 = vadd.f32 %v2071, %v2119
    %v2121 = vpop.f32.mrf.mxu0
    %v2122 = vadd.f32 %v2073, %v2121
    %2123 = vdwg.mxu0
    %2124 = vmatpush.bf16.msra.mxu0 %v1051
    %2125 = vmatpush.bf16.msra.mxu0 %v1047
    %2126 = vmatpush.bf16.msra.mxu0 %v1043
    %2127 = vmatpush.bf16.msra.mxu0 %v1039
    %2128 = vmatpush.bf16.msra.mxu0 %v1035
    %2129 = vmatpush.bf16.msra.mxu0 %v1031
    %2130 = vmatpush.bf16.msra.mxu0 %v1027
    %2131 = vmatpush.bf16.msra.mxu0 %v1023
    %2132 = vmatmul.bf16.gmra.mxu0 %v171
    %v2133 = vpop.f32.mrf.mxu0
    %v2134 = vadd.f32 %v427, %v2133
    %v2135 = vpop.f32.mrf.mxu0
    %v2136 = vadd.f32 %v427, %v2135
    %2137 = vmatmul.bf16.gmra.mxu0 %v178
    %v2138 = vpop.f32.mrf.mxu0
    %v2139 = vadd.f32 %v427, %v2138
    %v2140 = vpop.f32.mrf.mxu0
    %v2141 = vadd.f32 %v427, %v2140
    %2142 = vmatmul.bf16.gmra.mxu0 %v185
    %v2143 = vpop.f32.mrf.mxu0
    %v2144 = vadd.f32 %v427, %v2143
    %v2145 = vpop.f32.mrf.mxu0
    %v2146 = vadd.f32 %v427, %v2145
    %2147 = vmatmul.bf16.gmra.mxu0 %v192
    %v2148 = vpop.f32.mrf.mxu0
    %v2149 = vadd.f32 %v427, %v2148
    %v2150 = vpop.f32.mrf.mxu0
    %v2151 = vadd.f32 %v427, %v2150
    %2152 = vmatmul.bf16.gmra.mxu0 %v199
    %v2153 = vpop.f32.mrf.mxu0
    %v2154 = vadd.f32 %v427, %v2153
    %v2155 = vpop.f32.mrf.mxu0
    %v2156 = vadd.f32 %v427, %v2155
    %2157 = vmatmul.bf16.gmra.mxu0 %v206
    %v2158 = vpop.f32.mrf.mxu0
    %v2159 = vadd.f32 %v427, %v2158
    %v2160 = vpop.f32.mrf.mxu0
    %v2161 = vadd.f32 %v427, %v2160
    %2162 = vmatmul.bf16.gmra.mxu0 %v213
    %v2163 = vpop.f32.mrf.mxu0
    %v2164 = vadd.f32 %v427, %v2163
    %v2165 = vpop.f32.mrf.mxu0
    %v2166 = vadd.f32 %v427, %v2165
    %2167 = vmatmul.bf16.gmra.mxu0 %v220
    %v2168 = vpop.f32.mrf.mxu0
    %v2169 = vadd.f32 %v427, %v2168
    %v2170 = vpop.f32.mrf.mxu0
    %v2171 = vadd.f32 %v427, %v2170
    %2172 = vdwg.mxu0
    %2173 = vmatpush.bf16.msra.mxu0 %v1083
    %2174 = vmatpush.bf16.msra.mxu0 %v1079
    %2175 = vmatpush.bf16.msra.mxu0 %v1075
    %2176 = vmatpush.bf16.msra.mxu0 %v1071
    %2177 = vmatpush.bf16.msra.mxu0 %v1067
    %2178 = vmatpush.bf16.msra.mxu0 %v1063
    %2179 = vmatpush.bf16.msra.mxu0 %v1059
    %2180 = vmatpush.bf16.msra.mxu0 %v1055
    %2181 = vmatmul.bf16.gmra.mxu0 %v172
    %v2182 = vpop.f32.mrf.mxu0
    %v2183 = vadd.f32 %v2134, %v2182
    %v2184 = vpop.f32.mrf.mxu0
    %v2185 = vadd.f32 %v2136, %v2184
    %2186 = vmatmul.bf16.gmra.mxu0 %v179
    %v2187 = vpop.f32.mrf.mxu0
    %v2188 = vadd.f32 %v2139, %v2187
    %v2189 = vpop.f32.mrf.mxu0
    %v2190 = vadd.f32 %v2141, %v2189
    %2191 = vmatmul.bf16.gmra.mxu0 %v186
    %v2192 = vpop.f32.mrf.mxu0
    %v2193 = vadd.f32 %v2144, %v2192
    %v2194 = vpop.f32.mrf.mxu0
    %v2195 = vadd.f32 %v2146, %v2194
    %2196 = vmatmul.bf16.gmra.mxu0 %v193
    %v2197 = vpop.f32.mrf.mxu0
    %v2198 = vadd.f32 %v2149, %v2197
    %v2199 = vpop.f32.mrf.mxu0
    %v2200 = vadd.f32 %v2151, %v2199
    %2201 = vmatmul.bf16.gmra.mxu0 %v200
    %v2202 = vpop.f32.mrf.mxu0
    %v2203 = vadd.f32 %v2154, %v2202
    %v2204 = vpop.f32.mrf.mxu0
    %v2205 = vadd.f32 %v2156, %v2204
    %2206 = vmatmul.bf16.gmra.mxu0 %v207
    %v2207 = vpop.f32.mrf.mxu0
    %v2208 = vadd.f32 %v2159, %v2207
    %v2209 = vpop.f32.mrf.mxu0
    %v2210 = vadd.f32 %v2161, %v2209
    %2211 = vmatmul.bf16.gmra.mxu0 %v214
    %v2212 = vpop.f32.mrf.mxu0
    %v2213 = vadd.f32 %v2164, %v2212
    %v2214 = vpop.f32.mrf.mxu0
    %v2215 = vadd.f32 %v2166, %v2214
    %2216 = vmatmul.bf16.gmra.mxu0 %v221
    %v2217 = vpop.f32.mrf.mxu0
    %v2218 = vadd.f32 %v2169, %v2217
    %v2219 = vpop.f32.mrf.mxu0
    %v2220 = vadd.f32 %v2171, %v2219
    %2221 = vdwg.mxu0
    %2222 = vmatpush.bf16.msra.mxu0 %v1115
    %2223 = vmatpush.bf16.msra.mxu0 %v1111
    %2224 = vmatpush.bf16.msra.mxu0 %v1107
    %2225 = vmatpush.bf16.msra.mxu0 %v1103
    %2226 = vmatpush.bf16.msra.mxu0 %v1099
    %2227 = vmatpush.bf16.msra.mxu0 %v1095
    %2228 = vmatpush.bf16.msra.mxu0 %v1091
    %2229 = vmatpush.bf16.msra.mxu0 %v1087
    %2230 = vmatmul.bf16.gmra.mxu0 %v173
    %v2231 = vpop.f32.mrf.mxu0
    %v2232 = vadd.f32 %v2183, %v2231
    %v2233 = vpop.f32.mrf.mxu0
    %v2234 = vadd.f32 %v2185, %v2233
    %2235 = vmatmul.bf16.gmra.mxu0 %v180
    %v2236 = vpop.f32.mrf.mxu0
    %v2237 = vadd.f32 %v2188, %v2236
    %v2238 = vpop.f32.mrf.mxu0
    %v2239 = vadd.f32 %v2190, %v2238
    %2240 = vmatmul.bf16.gmra.mxu0 %v187
    %v2241 = vpop.f32.mrf.mxu0
    %v2242 = vadd.f32 %v2193, %v2241
    %v2243 = vpop.f32.mrf.mxu0
    %v2244 = vadd.f32 %v2195, %v2243
    %2245 = vmatmul.bf16.gmra.mxu0 %v194
    %v2246 = vpop.f32.mrf.mxu0
    %v2247 = vadd.f32 %v2198, %v2246
    %v2248 = vpop.f32.mrf.mxu0
    %v2249 = vadd.f32 %v2200, %v2248
    %2250 = vmatmul.bf16.gmra.mxu0 %v201
    %v2251 = vpop.f32.mrf.mxu0
    %v2252 = vadd.f32 %v2203, %v2251
    %v2253 = vpop.f32.mrf.mxu0
    %v2254 = vadd.f32 %v2205, %v2253
    %2255 = vmatmul.bf16.gmra.mxu0 %v208
    %v2256 = vpop.f32.mrf.mxu0
    %v2257 = vadd.f32 %v2208, %v2256
    %v2258 = vpop.f32.mrf.mxu0
    %v2259 = vadd.f32 %v2210, %v2258
    %2260 = vmatmul.bf16.gmra.mxu0 %v215
    %v2261 = vpop.f32.mrf.mxu0
    %v2262 = vadd.f32 %v2213, %v2261
    %v2263 = vpop.f32.mrf.mxu0
    %v2264 = vadd.f32 %v2215, %v2263
    %2265 = vmatmul.bf16.gmra.mxu0 %v222
    %v2266 = vpop.f32.mrf.mxu0
    %v2267 = vadd.f32 %v2218, %v2266
    %v2268 = vpop.f32.mrf.mxu0
    %v2269 = vadd.f32 %v2220, %v2268
    %2270 = vdwg.mxu0
    %2271 = vmatpush.bf16.msra.mxu0 %v1147
    %2272 = vmatpush.bf16.msra.mxu0 %v1143
    %2273 = vmatpush.bf16.msra.mxu0 %v1139
    %2274 = vmatpush.bf16.msra.mxu0 %v1135
    %2275 = vmatpush.bf16.msra.mxu0 %v1131
    %2276 = vmatpush.bf16.msra.mxu0 %v1127
    %2277 = vmatpush.bf16.msra.mxu0 %v1123
    %2278 = vmatpush.bf16.msra.mxu0 %v1119
    %2279 = vmatmul.bf16.gmra.mxu0 %v174
    %v2280 = vpop.f32.mrf.mxu0
    %v2281 = vadd.f32 %v2232, %v2280
    %v2282 = vpop.f32.mrf.mxu0
    %v2283 = vadd.f32 %v2234, %v2282
    %2284 = vmatmul.bf16.gmra.mxu0 %v181
    %v2285 = vpop.f32.mrf.mxu0
    %v2286 = vadd.f32 %v2237, %v2285
    %v2287 = vpop.f32.mrf.mxu0
    %v2288 = vadd.f32 %v2239, %v2287
    %2289 = vmatmul.bf16.gmra.mxu0 %v188
    %v2290 = vpop.f32.mrf.mxu0
    %v2291 = vadd.f32 %v2242, %v2290
    %v2292 = vpop.f32.mrf.mxu0
    %v2293 = vadd.f32 %v2244, %v2292
    %2294 = vmatmul.bf16.gmra.mxu0 %v195
    %v2295 = vpop.f32.mrf.mxu0
    %v2296 = vadd.f32 %v2247, %v2295
    %v2297 = vpop.f32.mrf.mxu0
    %v2298 = vadd.f32 %v2249, %v2297
    %2299 = vmatmul.bf16.gmra.mxu0 %v202
    %v2300 = vpop.f32.mrf.mxu0
    %v2301 = vadd.f32 %v2252, %v2300
    %v2302 = vpop.f32.mrf.mxu0
    %v2303 = vadd.f32 %v2254, %v2302
    %2304 = vmatmul.bf16.gmra.mxu0 %v209
    %v2305 = vpop.f32.mrf.mxu0
    %v2306 = vadd.f32 %v2257, %v2305
    %v2307 = vpop.f32.mrf.mxu0
    %v2308 = vadd.f32 %v2259, %v2307
    %2309 = vmatmul.bf16.gmra.mxu0 %v216
    %v2310 = vpop.f32.mrf.mxu0
    %v2311 = vadd.f32 %v2262, %v2310
    %v2312 = vpop.f32.mrf.mxu0
    %v2313 = vadd.f32 %v2264, %v2312
    %2314 = vmatmul.bf16.gmra.mxu0 %v223
    %v2315 = vpop.f32.mrf.mxu0
    %v2316 = vadd.f32 %v2267, %v2315
    %v2317 = vpop.f32.mrf.mxu0
    %v2318 = vadd.f32 %v2269, %v2317
    %2319 = vdwg.mxu0
    %2320 = vmatpush.bf16.msra.mxu0 %v1179
    %2321 = vmatpush.bf16.msra.mxu0 %v1175
    %2322 = vmatpush.bf16.msra.mxu0 %v1171
    %2323 = vmatpush.bf16.msra.mxu0 %v1167
    %2324 = vmatpush.bf16.msra.mxu0 %v1163
    %2325 = vmatpush.bf16.msra.mxu0 %v1159
    %2326 = vmatpush.bf16.msra.mxu0 %v1155
    %2327 = vmatpush.bf16.msra.mxu0 %v1151
    %2328 = vmatmul.bf16.gmra.mxu0 %v175
    %v2329 = vpop.f32.mrf.mxu0
    %v2330 = vadd.f32 %v2281, %v2329
    %v2331 = vpop.f32.mrf.mxu0
    %v2332 = vadd.f32 %v2283, %v2331
    %2333 = vmatmul.bf16.gmra.mxu0 %v182
    %v2334 = vpop.f32.mrf.mxu0
    %v2335 = vadd.f32 %v2286, %v2334
    %v2336 = vpop.f32.mrf.mxu0
    %v2337 = vadd.f32 %v2288, %v2336
    %2338 = vmatmul.bf16.gmra.mxu0 %v189
    %v2339 = vpop.f32.mrf.mxu0
    %v2340 = vadd.f32 %v2291, %v2339
    %v2341 = vpop.f32.mrf.mxu0
    %v2342 = vadd.f32 %v2293, %v2341
    %2343 = vmatmul.bf16.gmra.mxu0 %v196
    %v2344 = vpop.f32.mrf.mxu0
    %v2345 = vadd.f32 %v2296, %v2344
    %v2346 = vpop.f32.mrf.mxu0
    %v2347 = vadd.f32 %v2298, %v2346
    %2348 = vmatmul.bf16.gmra.mxu0 %v203
    %v2349 = vpop.f32.mrf.mxu0
    %v2350 = vadd.f32 %v2301, %v2349
    %v2351 = vpop.f32.mrf.mxu0
    %v2352 = vadd.f32 %v2303, %v2351
    %2353 = vmatmul.bf16.gmra.mxu0 %v210
    %v2354 = vpop.f32.mrf.mxu0
    %v2355 = vadd.f32 %v2306, %v2354
    %v2356 = vpop.f32.mrf.mxu0
    %v2357 = vadd.f32 %v2308, %v2356
    %2358 = vmatmul.bf16.gmra.mxu0 %v217
    %v2359 = vpop.f32.mrf.mxu0
    %v2360 = vadd.f32 %v2311, %v2359
    %v2361 = vpop.f32.mrf.mxu0
    %v2362 = vadd.f32 %v2313, %v2361
    %2363 = vmatmul.bf16.gmra.mxu0 %v224
    %v2364 = vpop.f32.mrf.mxu0
    %v2365 = vadd.f32 %v2316, %v2364
    %v2366 = vpop.f32.mrf.mxu0
    %v2367 = vadd.f32 %v2318, %v2366
    %2368 = vdwg.mxu0
    %2369 = vmatpush.bf16.msra.mxu0 %v1211
    %2370 = vmatpush.bf16.msra.mxu0 %v1207
    %2371 = vmatpush.bf16.msra.mxu0 %v1203
    %2372 = vmatpush.bf16.msra.mxu0 %v1199
    %2373 = vmatpush.bf16.msra.mxu0 %v1195
    %2374 = vmatpush.bf16.msra.mxu0 %v1191
    %2375 = vmatpush.bf16.msra.mxu0 %v1187
    %2376 = vmatpush.bf16.msra.mxu0 %v1183
    %2377 = vmatmul.bf16.gmra.mxu0 %v176
    %v2378 = vpop.f32.mrf.mxu0
    %v2379 = vadd.f32 %v2330, %v2378
    %v2380 = vpop.f32.mrf.mxu0
    %v2381 = vadd.f32 %v2332, %v2380
    %2382 = vmatmul.bf16.gmra.mxu0 %v183
    %v2383 = vpop.f32.mrf.mxu0
    %v2384 = vadd.f32 %v2335, %v2383
    %v2385 = vpop.f32.mrf.mxu0
    %v2386 = vadd.f32 %v2337, %v2385
    %2387 = vmatmul.bf16.gmra.mxu0 %v190
    %v2388 = vpop.f32.mrf.mxu0
    %v2389 = vadd.f32 %v2340, %v2388
    %v2390 = vpop.f32.mrf.mxu0
    %v2391 = vadd.f32 %v2342, %v2390
    %2392 = vmatmul.bf16.gmra.mxu0 %v197
    %v2393 = vpop.f32.mrf.mxu0
    %v2394 = vadd.f32 %v2345, %v2393
    %v2395 = vpop.f32.mrf.mxu0
    %v2396 = vadd.f32 %v2347, %v2395
    %2397 = vmatmul.bf16.gmra.mxu0 %v204
    %v2398 = vpop.f32.mrf.mxu0
    %v2399 = vadd.f32 %v2350, %v2398
    %v2400 = vpop.f32.mrf.mxu0
    %v2401 = vadd.f32 %v2352, %v2400
    %2402 = vmatmul.bf16.gmra.mxu0 %v211
    %v2403 = vpop.f32.mrf.mxu0
    %v2404 = vadd.f32 %v2355, %v2403
    %v2405 = vpop.f32.mrf.mxu0
    %v2406 = vadd.f32 %v2357, %v2405
    %2407 = vmatmul.bf16.gmra.mxu0 %v218
    %v2408 = vpop.f32.mrf.mxu0
    %v2409 = vadd.f32 %v2360, %v2408
    %v2410 = vpop.f32.mrf.mxu0
    %v2411 = vadd.f32 %v2362, %v2410
    %2412 = vmatmul.bf16.gmra.mxu0 %v225
    %v2413 = vpop.f32.mrf.mxu0
    %v2414 = vadd.f32 %v2365, %v2413
    %v2415 = vpop.f32.mrf.mxu0
    %v2416 = vadd.f32 %v2367, %v2415
    %2417 = vdwg.mxu0
    %2418 = vmatpush.bf16.msra.mxu0 0
    %2419 = vmatpush.bf16.msra.mxu0 0
    %2420 = vmatpush.bf16.msra.mxu0 0
    %2421 = vmatpush.bf16.msra.mxu0 0
    %2422 = vmatpush.bf16.msra.mxu0 0
    %2423 = vmatpush.bf16.msra.mxu0 0
    %2424 = vmatpush.bf16.msra.mxu0 0
    %2425 = vmatpush.bf16.msra.mxu0 %v1215
    %2426 = vmatmul.bf16.gmra.mxu0 %v1415
    %v2427 = vpop.f32.mrf.mxu0
    %v2428 = vadd.f32 %v2379, %v2427
    %v2429 = vpop.f32.mrf.mxu0
    %v2430 = vadd.f32 %v2381, %v2429
    %2431 = vmatmul.bf16.gmra.mxu0 %v1418
    %v2432 = vpop.f32.mrf.mxu0
    %v2433 = vadd.f32 %v2384, %v2432
    %v2434 = vpop.f32.mrf.mxu0
    %v2435 = vadd.f32 %v2386, %v2434
    %2436 = vmatmul.bf16.gmra.mxu0 %v1421
    %v2437 = vpop.f32.mrf.mxu0
    %v2438 = vadd.f32 %v2389, %v2437
    %v2439 = vpop.f32.mrf.mxu0
    %v2440 = vadd.f32 %v2391, %v2439
    %2441 = vmatmul.bf16.gmra.mxu0 %v1424
    %v2442 = vpop.f32.mrf.mxu0
    %v2443 = vadd.f32 %v2394, %v2442
    %v2444 = vpop.f32.mrf.mxu0
    %v2445 = vadd.f32 %v2396, %v2444
    %2446 = vmatmul.bf16.gmra.mxu0 %v1427
    %v2447 = vpop.f32.mrf.mxu0
    %v2448 = vadd.f32 %v2399, %v2447
    %v2449 = vpop.f32.mrf.mxu0
    %v2450 = vadd.f32 %v2401, %v2449
    %2451 = vmatmul.bf16.gmra.mxu0 %v1430
    %v2452 = vpop.f32.mrf.mxu0
    %v2453 = vadd.f32 %v2404, %v2452
    %v2454 = vpop.f32.mrf.mxu0
    %v2455 = vadd.f32 %v2406, %v2454
    %2456 = vmatmul.bf16.gmra.mxu0 %v1433
    %v2457 = vpop.f32.mrf.mxu0
    %v2458 = vadd.f32 %v2409, %v2457
    %v2459 = vpop.f32.mrf.mxu0
    %v2460 = vadd.f32 %v2411, %v2459
    %2461 = vmatmul.bf16.gmra.mxu0 %v1436
    %v2462 = vpop.f32.mrf.mxu0
    %v2463 = vadd.f32 %v2414, %v2462
    %v2464 = vpop.f32.mrf.mxu0
    %v2465 = vadd.f32 %v2416, %v2464
    %2466 = vdwg.mxu0
    %2467 = vmatpush.bf16.msra.mxu0 %v1052
    %2468 = vmatpush.bf16.msra.mxu0 %v1048
    %2469 = vmatpush.bf16.msra.mxu0 %v1044
    %2470 = vmatpush.bf16.msra.mxu0 %v1040
    %2471 = vmatpush.bf16.msra.mxu0 %v1036
    %2472 = vmatpush.bf16.msra.mxu0 %v1032
    %2473 = vmatpush.bf16.msra.mxu0 %v1028
    %2474 = vmatpush.bf16.msra.mxu0 %v1024
    %2475 = vmatmul.bf16.gmra.mxu0 %v171
    %v2476 = vpop.f32.mrf.mxu0
    %v2477 = vadd.f32 %v428, %v2476
    %v2478 = vpop.f32.mrf.mxu0
    %v2479 = vadd.f32 %v428, %v2478
    %2480 = vmatmul.bf16.gmra.mxu0 %v178
    %v2481 = vpop.f32.mrf.mxu0
    %v2482 = vadd.f32 %v428, %v2481
    %v2483 = vpop.f32.mrf.mxu0
    %v2484 = vadd.f32 %v428, %v2483
    %2485 = vmatmul.bf16.gmra.mxu0 %v185
    %v2486 = vpop.f32.mrf.mxu0
    %v2487 = vadd.f32 %v428, %v2486
    %v2488 = vpop.f32.mrf.mxu0
    %v2489 = vadd.f32 %v428, %v2488
    %2490 = vmatmul.bf16.gmra.mxu0 %v192
    %v2491 = vpop.f32.mrf.mxu0
    %v2492 = vadd.f32 %v428, %v2491
    %v2493 = vpop.f32.mrf.mxu0
    %v2494 = vadd.f32 %v428, %v2493
    %2495 = vmatmul.bf16.gmra.mxu0 %v199
    %v2496 = vpop.f32.mrf.mxu0
    %v2497 = vadd.f32 %v428, %v2496
    %v2498 = vpop.f32.mrf.mxu0
    %v2499 = vadd.f32 %v428, %v2498
    %2500 = vmatmul.bf16.gmra.mxu0 %v206
    %v2501 = vpop.f32.mrf.mxu0
    %v2502 = vadd.f32 %v428, %v2501
    %v2503 = vpop.f32.mrf.mxu0
    %v2504 = vadd.f32 %v428, %v2503
    %2505 = vmatmul.bf16.gmra.mxu0 %v213
    %v2506 = vpop.f32.mrf.mxu0
    %v2507 = vadd.f32 %v428, %v2506
    %v2508 = vpop.f32.mrf.mxu0
    %v2509 = vadd.f32 %v428, %v2508
    %2510 = vmatmul.bf16.gmra.mxu0 %v220
    %v2511 = vpop.f32.mrf.mxu0
    %v2512 = vadd.f32 %v428, %v2511
    %v2513 = vpop.f32.mrf.mxu0
    %v2514 = vadd.f32 %v428, %v2513
    %2515 = vdwg.mxu0
    %2516 = vmatpush.bf16.msra.mxu0 %v1084
    %2517 = vmatpush.bf16.msra.mxu0 %v1080
    %2518 = vmatpush.bf16.msra.mxu0 %v1076
    %2519 = vmatpush.bf16.msra.mxu0 %v1072
    %2520 = vmatpush.bf16.msra.mxu0 %v1068
    %2521 = vmatpush.bf16.msra.mxu0 %v1064
    %2522 = vmatpush.bf16.msra.mxu0 %v1060
    %2523 = vmatpush.bf16.msra.mxu0 %v1056
    %2524 = vmatmul.bf16.gmra.mxu0 %v172
    %v2525 = vpop.f32.mrf.mxu0
    %v2526 = vadd.f32 %v2477, %v2525
    %v2527 = vpop.f32.mrf.mxu0
    %v2528 = vadd.f32 %v2479, %v2527
    %2529 = vmatmul.bf16.gmra.mxu0 %v179
    %v2530 = vpop.f32.mrf.mxu0
    %v2531 = vadd.f32 %v2482, %v2530
    %v2532 = vpop.f32.mrf.mxu0
    %v2533 = vadd.f32 %v2484, %v2532
    %2534 = vmatmul.bf16.gmra.mxu0 %v186
    %v2535 = vpop.f32.mrf.mxu0
    %v2536 = vadd.f32 %v2487, %v2535
    %v2537 = vpop.f32.mrf.mxu0
    %v2538 = vadd.f32 %v2489, %v2537
    %2539 = vmatmul.bf16.gmra.mxu0 %v193
    %v2540 = vpop.f32.mrf.mxu0
    %v2541 = vadd.f32 %v2492, %v2540
    %v2542 = vpop.f32.mrf.mxu0
    %v2543 = vadd.f32 %v2494, %v2542
    %2544 = vmatmul.bf16.gmra.mxu0 %v200
    %v2545 = vpop.f32.mrf.mxu0
    %v2546 = vadd.f32 %v2497, %v2545
    %v2547 = vpop.f32.mrf.mxu0
    %v2548 = vadd.f32 %v2499, %v2547
    %2549 = vmatmul.bf16.gmra.mxu0 %v207
    %v2550 = vpop.f32.mrf.mxu0
    %v2551 = vadd.f32 %v2502, %v2550
    %v2552 = vpop.f32.mrf.mxu0
    %v2553 = vadd.f32 %v2504, %v2552
    %2554 = vmatmul.bf16.gmra.mxu0 %v214
    %v2555 = vpop.f32.mrf.mxu0
    %v2556 = vadd.f32 %v2507, %v2555
    %v2557 = vpop.f32.mrf.mxu0
    %v2558 = vadd.f32 %v2509, %v2557
    %2559 = vmatmul.bf16.gmra.mxu0 %v221
    %v2560 = vpop.f32.mrf.mxu0
    %v2561 = vadd.f32 %v2512, %v2560
    %v2562 = vpop.f32.mrf.mxu0
    %v2563 = vadd.f32 %v2514, %v2562
    %2564 = vdwg.mxu0
    %2565 = vmatpush.bf16.msra.mxu0 %v1116
    %2566 = vmatpush.bf16.msra.mxu0 %v1112
    %2567 = vmatpush.bf16.msra.mxu0 %v1108
    %2568 = vmatpush.bf16.msra.mxu0 %v1104
    %2569 = vmatpush.bf16.msra.mxu0 %v1100
    %2570 = vmatpush.bf16.msra.mxu0 %v1096
    %2571 = vmatpush.bf16.msra.mxu0 %v1092
    %2572 = vmatpush.bf16.msra.mxu0 %v1088
    %2573 = vmatmul.bf16.gmra.mxu0 %v173
    %v2574 = vpop.f32.mrf.mxu0
    %v2575 = vadd.f32 %v2526, %v2574
    %v2576 = vpop.f32.mrf.mxu0
    %v2577 = vadd.f32 %v2528, %v2576
    %2578 = vmatmul.bf16.gmra.mxu0 %v180
    %v2579 = vpop.f32.mrf.mxu0
    %v2580 = vadd.f32 %v2531, %v2579
    %v2581 = vpop.f32.mrf.mxu0
    %v2582 = vadd.f32 %v2533, %v2581
    %2583 = vmatmul.bf16.gmra.mxu0 %v187
    %v2584 = vpop.f32.mrf.mxu0
    %v2585 = vadd.f32 %v2536, %v2584
    %v2586 = vpop.f32.mrf.mxu0
    %v2587 = vadd.f32 %v2538, %v2586
    %2588 = vmatmul.bf16.gmra.mxu0 %v194
    %v2589 = vpop.f32.mrf.mxu0
    %v2590 = vadd.f32 %v2541, %v2589
    %v2591 = vpop.f32.mrf.mxu0
    %v2592 = vadd.f32 %v2543, %v2591
    %2593 = vmatmul.bf16.gmra.mxu0 %v201
    %v2594 = vpop.f32.mrf.mxu0
    %v2595 = vadd.f32 %v2546, %v2594
    %v2596 = vpop.f32.mrf.mxu0
    %v2597 = vadd.f32 %v2548, %v2596
    %2598 = vmatmul.bf16.gmra.mxu0 %v208
    %v2599 = vpop.f32.mrf.mxu0
    %v2600 = vadd.f32 %v2551, %v2599
    %v2601 = vpop.f32.mrf.mxu0
    %v2602 = vadd.f32 %v2553, %v2601
    %2603 = vmatmul.bf16.gmra.mxu0 %v215
    %v2604 = vpop.f32.mrf.mxu0
    %v2605 = vadd.f32 %v2556, %v2604
    %v2606 = vpop.f32.mrf.mxu0
    %v2607 = vadd.f32 %v2558, %v2606
    %2608 = vmatmul.bf16.gmra.mxu0 %v222
    %v2609 = vpop.f32.mrf.mxu0
    %v2610 = vadd.f32 %v2561, %v2609
    %v2611 = vpop.f32.mrf.mxu0
    %v2612 = vadd.f32 %v2563, %v2611
    %2613 = vdwg.mxu0
    %2614 = vmatpush.bf16.msra.mxu0 %v1148
    %2615 = vmatpush.bf16.msra.mxu0 %v1144
    %2616 = vmatpush.bf16.msra.mxu0 %v1140
    %2617 = vmatpush.bf16.msra.mxu0 %v1136
    %2618 = vmatpush.bf16.msra.mxu0 %v1132
    %2619 = vmatpush.bf16.msra.mxu0 %v1128
    %2620 = vmatpush.bf16.msra.mxu0 %v1124
    %2621 = vmatpush.bf16.msra.mxu0 %v1120
    %2622 = vmatmul.bf16.gmra.mxu0 %v174
    %v2623 = vpop.f32.mrf.mxu0
    %v2624 = vadd.f32 %v2575, %v2623
    %v2625 = vpop.f32.mrf.mxu0
    %v2626 = vadd.f32 %v2577, %v2625
    %2627 = vmatmul.bf16.gmra.mxu0 %v181
    %v2628 = vpop.f32.mrf.mxu0
    %v2629 = vadd.f32 %v2580, %v2628
    %v2630 = vpop.f32.mrf.mxu0
    %v2631 = vadd.f32 %v2582, %v2630
    %2632 = vmatmul.bf16.gmra.mxu0 %v188
    %v2633 = vpop.f32.mrf.mxu0
    %v2634 = vadd.f32 %v2585, %v2633
    %v2635 = vpop.f32.mrf.mxu0
    %v2636 = vadd.f32 %v2587, %v2635
    %2637 = vmatmul.bf16.gmra.mxu0 %v195
    %v2638 = vpop.f32.mrf.mxu0
    %v2639 = vadd.f32 %v2590, %v2638
    %v2640 = vpop.f32.mrf.mxu0
    %v2641 = vadd.f32 %v2592, %v2640
    %2642 = vmatmul.bf16.gmra.mxu0 %v202
    %v2643 = vpop.f32.mrf.mxu0
    %v2644 = vadd.f32 %v2595, %v2643
    %v2645 = vpop.f32.mrf.mxu0
    %v2646 = vadd.f32 %v2597, %v2645
    %2647 = vmatmul.bf16.gmra.mxu0 %v209
    %v2648 = vpop.f32.mrf.mxu0
    %v2649 = vadd.f32 %v2600, %v2648
    %v2650 = vpop.f32.mrf.mxu0
    %v2651 = vadd.f32 %v2602, %v2650
    %2652 = vmatmul.bf16.gmra.mxu0 %v216
    %v2653 = vpop.f32.mrf.mxu0
    %v2654 = vadd.f32 %v2605, %v2653
    %v2655 = vpop.f32.mrf.mxu0
    %v2656 = vadd.f32 %v2607, %v2655
    %2657 = vmatmul.bf16.gmra.mxu0 %v223
    %v2658 = vpop.f32.mrf.mxu0
    %v2659 = vadd.f32 %v2610, %v2658
    %v2660 = vpop.f32.mrf.mxu0
    %v2661 = vadd.f32 %v2612, %v2660
    %2662 = vdwg.mxu0
    %2663 = vmatpush.bf16.msra.mxu0 %v1180
    %2664 = vmatpush.bf16.msra.mxu0 %v1176
    %2665 = vmatpush.bf16.msra.mxu0 %v1172
    %2666 = vmatpush.bf16.msra.mxu0 %v1168
    %2667 = vmatpush.bf16.msra.mxu0 %v1164
    %2668 = vmatpush.bf16.msra.mxu0 %v1160
    %2669 = vmatpush.bf16.msra.mxu0 %v1156
    %2670 = vmatpush.bf16.msra.mxu0 %v1152
    %2671 = vmatmul.bf16.gmra.mxu0 %v175
    %v2672 = vpop.f32.mrf.mxu0
    %v2673 = vadd.f32 %v2624, %v2672
    %v2674 = vpop.f32.mrf.mxu0
    %v2675 = vadd.f32 %v2626, %v2674
    %2676 = vmatmul.bf16.gmra.mxu0 %v182
    %v2677 = vpop.f32.mrf.mxu0
    %v2678 = vadd.f32 %v2629, %v2677
    %v2679 = vpop.f32.mrf.mxu0
    %v2680 = vadd.f32 %v2631, %v2679
    %2681 = vmatmul.bf16.gmra.mxu0 %v189
    %v2682 = vpop.f32.mrf.mxu0
    %v2683 = vadd.f32 %v2634, %v2682
    %v2684 = vpop.f32.mrf.mxu0
    %v2685 = vadd.f32 %v2636, %v2684
    %2686 = vmatmul.bf16.gmra.mxu0 %v196
    %v2687 = vpop.f32.mrf.mxu0
    %v2688 = vadd.f32 %v2639, %v2687
    %v2689 = vpop.f32.mrf.mxu0
    %v2690 = vadd.f32 %v2641, %v2689
    %2691 = vmatmul.bf16.gmra.mxu0 %v203
    %v2692 = vpop.f32.mrf.mxu0
    %v2693 = vadd.f32 %v2644, %v2692
    %v2694 = vpop.f32.mrf.mxu0
    %v2695 = vadd.f32 %v2646, %v2694
    %2696 = vmatmul.bf16.gmra.mxu0 %v210
    %v2697 = vpop.f32.mrf.mxu0
    %v2698 = vadd.f32 %v2649, %v2697
    %v2699 = vpop.f32.mrf.mxu0
    %v2700 = vadd.f32 %v2651, %v2699
    %2701 = vmatmul.bf16.gmra.mxu0 %v217
    %v2702 = vpop.f32.mrf.mxu0
    %v2703 = vadd.f32 %v2654, %v2702
    %v2704 = vpop.f32.mrf.mxu0
    %v2705 = vadd.f32 %v2656, %v2704
    %2706 = vmatmul.bf16.gmra.mxu0 %v224
    %v2707 = vpop.f32.mrf.mxu0
    %v2708 = vadd.f32 %v2659, %v2707
    %v2709 = vpop.f32.mrf.mxu0
    %v2710 = vadd.f32 %v2661, %v2709
    %2711 = vdwg.mxu0
    %2712 = vmatpush.bf16.msra.mxu0 %v1212
    %2713 = vmatpush.bf16.msra.mxu0 %v1208
    %2714 = vmatpush.bf16.msra.mxu0 %v1204
    %2715 = vmatpush.bf16.msra.mxu0 %v1200
    %2716 = vmatpush.bf16.msra.mxu0 %v1196
    %2717 = vmatpush.bf16.msra.mxu0 %v1192
    %2718 = vmatpush.bf16.msra.mxu0 %v1188
    %2719 = vmatpush.bf16.msra.mxu0 %v1184
    %2720 = vmatmul.bf16.gmra.mxu0 %v176
    %v2721 = vpop.f32.mrf.mxu0
    %v2722 = vadd.f32 %v2673, %v2721
    %v2723 = vpop.f32.mrf.mxu0
    %v2724 = vadd.f32 %v2675, %v2723
    %2725 = vmatmul.bf16.gmra.mxu0 %v183
    %v2726 = vpop.f32.mrf.mxu0
    %v2727 = vadd.f32 %v2678, %v2726
    %v2728 = vpop.f32.mrf.mxu0
    %v2729 = vadd.f32 %v2680, %v2728
    %2730 = vmatmul.bf16.gmra.mxu0 %v190
    %v2731 = vpop.f32.mrf.mxu0
    %v2732 = vadd.f32 %v2683, %v2731
    %v2733 = vpop.f32.mrf.mxu0
    %v2734 = vadd.f32 %v2685, %v2733
    %2735 = vmatmul.bf16.gmra.mxu0 %v197
    %v2736 = vpop.f32.mrf.mxu0
    %v2737 = vadd.f32 %v2688, %v2736
    %v2738 = vpop.f32.mrf.mxu0
    %v2739 = vadd.f32 %v2690, %v2738
    %2740 = vmatmul.bf16.gmra.mxu0 %v204
    %v2741 = vpop.f32.mrf.mxu0
    %v2742 = vadd.f32 %v2693, %v2741
    %v2743 = vpop.f32.mrf.mxu0
    %v2744 = vadd.f32 %v2695, %v2743
    %2745 = vmatmul.bf16.gmra.mxu0 %v211
    %v2746 = vpop.f32.mrf.mxu0
    %v2747 = vadd.f32 %v2698, %v2746
    %v2748 = vpop.f32.mrf.mxu0
    %v2749 = vadd.f32 %v2700, %v2748
    %2750 = vmatmul.bf16.gmra.mxu0 %v218
    %v2751 = vpop.f32.mrf.mxu0
    %v2752 = vadd.f32 %v2703, %v2751
    %v2753 = vpop.f32.mrf.mxu0
    %v2754 = vadd.f32 %v2705, %v2753
    %2755 = vmatmul.bf16.gmra.mxu0 %v225
    %v2756 = vpop.f32.mrf.mxu0
    %v2757 = vadd.f32 %v2708, %v2756
    %v2758 = vpop.f32.mrf.mxu0
    %v2759 = vadd.f32 %v2710, %v2758
    %2760 = vdwg.mxu0
    %2761 = vmatpush.bf16.msra.mxu0 0
    %2762 = vmatpush.bf16.msra.mxu0 0
    %2763 = vmatpush.bf16.msra.mxu0 0
    %2764 = vmatpush.bf16.msra.mxu0 0
    %2765 = vmatpush.bf16.msra.mxu0 0
    %2766 = vmatpush.bf16.msra.mxu0 0
    %2767 = vmatpush.bf16.msra.mxu0 0
    %2768 = vmatpush.bf16.msra.mxu0 %v1216
    %2769 = vmatmul.bf16.gmra.mxu0 %v1415
    %v2770 = vpop.f32.mrf.mxu0
    %v2771 = vadd.f32 %v2722, %v2770
    %v2772 = vpop.f32.mrf.mxu0
    %v2773 = vadd.f32 %v2724, %v2772
    %2774 = vmatmul.bf16.gmra.mxu0 %v1418
    %v2775 = vpop.f32.mrf.mxu0
    %v2776 = vadd.f32 %v2727, %v2775
    %v2777 = vpop.f32.mrf.mxu0
    %v2778 = vadd.f32 %v2729, %v2777
    %2779 = vmatmul.bf16.gmra.mxu0 %v1421
    %v2780 = vpop.f32.mrf.mxu0
    %v2781 = vadd.f32 %v2732, %v2780
    %v2782 = vpop.f32.mrf.mxu0
    %v2783 = vadd.f32 %v2734, %v2782
    %2784 = vmatmul.bf16.gmra.mxu0 %v1424
    %v2785 = vpop.f32.mrf.mxu0
    %v2786 = vadd.f32 %v2737, %v2785
    %v2787 = vpop.f32.mrf.mxu0
    %v2788 = vadd.f32 %v2739, %v2787
    %2789 = vmatmul.bf16.gmra.mxu0 %v1427
    %v2790 = vpop.f32.mrf.mxu0
    %v2791 = vadd.f32 %v2742, %v2790
    %v2792 = vpop.f32.mrf.mxu0
    %v2793 = vadd.f32 %v2744, %v2792
    %2794 = vmatmul.bf16.gmra.mxu0 %v1430
    %v2795 = vpop.f32.mrf.mxu0
    %v2796 = vadd.f32 %v2747, %v2795
    %v2797 = vpop.f32.mrf.mxu0
    %v2798 = vadd.f32 %v2749, %v2797
    %2799 = vmatmul.bf16.gmra.mxu0 %v1433
    %v2800 = vpop.f32.mrf.mxu0
    %v2801 = vadd.f32 %v2752, %v2800
    %v2802 = vpop.f32.mrf.mxu0
    %v2803 = vadd.f32 %v2754, %v2802
    %2804 = vmatmul.bf16.gmra.mxu0 %v1436
    %v2805 = vpop.f32.mrf.mxu0
    %v2806 = vadd.f32 %v2757, %v2805
    %v2807 = vpop.f32.mrf.mxu0
    %v2808 = vadd.f32 %v2759, %v2807
    %2809 = vdwg.mxu0
    %v2810 = vmax.f32 %v1742, 0.0
    %v2811 = vmax.f32 %v2085, 0.0
    %v2812 = vmax.f32 %v2428, 0.0
    %v2813 = vmax.f32 %v2771, 0.0
    %v2814 = vmax.f32 %v1744, 0.0
    %v2815 = vmax.f32 %v2087, 0.0
    %v2816 = vmax.f32 %v2430, 0.0
    %v2817 = vmax.f32 %v2773, 0.0
    %v2818 = vmax.f32 %v1747, 0.0
    %v2819 = vmax.f32 %v2090, 0.0
    %v2820 = vmax.f32 %v2433, 0.0
    %v2821 = vmax.f32 %v2776, 0.0
    %v2822 = vmax.f32 %v1749, 0.0
    %v2823 = vmax.f32 %v2092, 0.0
    %v2824 = vmax.f32 %v2435, 0.0
    %v2825 = vmax.f32 %v2778, 0.0
    %v2826 = vmax.f32 %v1752, 0.0
    %v2827 = vmax.f32 %v2095, 0.0
    %v2828 = vmax.f32 %v2438, 0.0
    %v2829 = vmax.f32 %v2781, 0.0
    %v2830 = vmax.f32 %v1754, 0.0
    %v2831 = vmax.f32 %v2097, 0.0
    %v2832 = vmax.f32 %v2440, 0.0
    %v2833 = vmax.f32 %v2783, 0.0
    %v2834 = vmax.f32 %v1757, 0.0
    %v2835 = vmax.f32 %v2100, 0.0
    %v2836 = vmax.f32 %v2443, 0.0
    %v2837 = vmax.f32 %v2786, 0.0
    %v2838 = vmax.f32 %v1759, 0.0
    %v2839 = vmax.f32 %v2102, 0.0
    %v2840 = vmax.f32 %v2445, 0.0
    %v2841 = vmax.f32 %v2788, 0.0
    %v2842 = vmax.f32 %v1762, 0.0
    %v2843 = vmax.f32 %v2105, 0.0
    %v2844 = vmax.f32 %v2448, 0.0
    %v2845 = vmax.f32 %v2791, 0.0
    %v2846 = vmax.f32 %v1764, 0.0
    %v2847 = vmax.f32 %v2107, 0.0
    %v2848 = vmax.f32 %v2450, 0.0
    %v2849 = vmax.f32 %v2793, 0.0
    %v2850 = vmax.f32 %v1767, 0.0
    %v2851 = vmax.f32 %v2110, 0.0
    %v2852 = vmax.f32 %v2453, 0.0
    %v2853 = vmax.f32 %v2796, 0.0
    %v2854 = vmax.f32 %v1769, 0.0
    %v2855 = vmax.f32 %v2112, 0.0
    %v2856 = vmax.f32 %v2455, 0.0
    %v2857 = vmax.f32 %v2798, 0.0
    %v2858 = vmax.f32 %v1772, 0.0
    %v2859 = vmax.f32 %v2115, 0.0
    %v2860 = vmax.f32 %v2458, 0.0
    %v2861 = vmax.f32 %v2801, 0.0
    %v2862 = vmax.f32 %v1774, 0.0
    %v2863 = vmax.f32 %v2117, 0.0
    %v2864 = vmax.f32 %v2460, 0.0
    %v2865 = vmax.f32 %v2803, 0.0
    %v2866 = vmax.f32 %v1777, 0.0
    %v2867 = vmax.f32 %v2120, 0.0
    %v2868 = vmax.f32 %v2463, 0.0
    %v2869 = vmax.f32 %v2806, 0.0
    %v2870 = vmax.f32 %v1779, 0.0
    %v2871 = vmax.f32 %v2122, 0.0
    %v2872 = vmax.f32 %v2465, 0.0
    %v2873 = vmax.f32 %v2808, 0.0
    %v2874 = vpack.c.bf16 %v2814, %v2810
    %v2875 = vpack.c.bf16 %v2815, %v2811
    %v2876 = vpack.c.bf16 %v2816, %v2812
    %v2877 = vpack.c.bf16 %v2817, %v2813
    %v2878 = vpack.c.bf16 %v2822, %v2818
    %v2879 = vpack.c.bf16 %v2823, %v2819
    %v2880 = vpack.c.bf16 %v2824, %v2820
    %v2881 = vpack.c.bf16 %v2825, %v2821
    %v2882 = vpack.c.bf16 %v2830, %v2826
    %v2883 = vpack.c.bf16 %v2831, %v2827
    %v2884 = vpack.c.bf16 %v2832, %v2828
    %v2885 = vpack.c.bf16 %v2833, %v2829
    %v2886 = vpack.c.bf16 %v2838, %v2834
    %v2887 = vpack.c.bf16 %v2839, %v2835
    %v2888 = vpack.c.bf16 %v2840, %v2836
    %v2889 = vpack.c.bf16 %v2841, %v2837
    %v2890 = vpack.c.bf16 %v2846, %v2842
    %v2891 = vpack.c.bf16 %v2847, %v2843
    %v2892 = vpack.c.bf16 %v2848, %v2844
    %v2893 = vpack.c.bf16 %v2849, %v2845
    %v2894 = vpack.c.bf16 %v2854, %v2850
    %v2895 = vpack.c.bf16 %v2855, %v2851
    %v2896 = vpack.c.bf16 %v2856, %v2852
    %v2897 = vpack.c.bf16 %v2857, %v2853
    %v2898 = vpack.c.bf16 %v2862, %v2858
    %v2899 = vpack.c.bf16 %v2863, %v2859
    %v2900 = vpack.c.bf16 %v2864, %v2860
    %v2901 = vpack.c.bf16 %v2865, %v2861
    %v2902 = vpack.c.bf16 %v2870, %v2866
    %v2903 = vpack.c.bf16 %v2871, %v2867
    %v2904 = vpack.c.bf16 %v2872, %v2868
    %v2905 = vpack.c.bf16 %v2873, %v2869
    %v2906 = vld [vmem:[%s3] sm:$0xff]
    %v2907 = vld [vmem:[%s3 + $0x8] sm:$0xff]
    %v2908 = vld [vmem:[%s3 + $0x10] sm:$0xff]
    %v2909 = vld [vmem:[%s3 + $0x18] sm:$0xff]
    %v2910 = vld [vmem:[%s3 + $0x20] sm:$0xff]
    %v2911 = vld [vmem:[%s3 + $0x28] sm:$0xff]
    %v2912 = vld [vmem:[%s3 + $0x30] sm:$0xff]
    %v2913 = vld [vmem:[%s3 + $0x38] sm:$0xff]
    %v2914 = vld [vmem:[%s3 + $0x40] sm:$0xff]
    %v2915 = vld [vmem:[%s3 + $0x48] sm:$0xff]
    %v2916 = vld [vmem:[%s3 + $0x50] sm:$0xff]
    %v2917 = vld [vmem:[%s3 + $0x58] sm:$0xff]
    %v2918 = vld [vmem:[%s3 + $0x60] sm:$0xff]
    %v2919 = vld [vmem:[%s3 + $0x68] sm:$0xff]
    %v2920 = vld [vmem:[%s3 + $0x70] sm:$0xff]
    %v2921 = vld [vmem:[%s3 + $0x78] sm:$0xff]
    %v2922 = vld [vmem:[%s3 + $0x80] sm:$0xff]
    %v2923 = vld [vmem:[%s3 + $0x88] sm:$0xff]
    %v2924 = vld [vmem:[%s3 + $0x90] sm:$0xff]
    %v2925 = vld [vmem:[%s3 + $0x98] sm:$0xff]
    %v2926 = vld [vmem:[%s3 + $0xa0] sm:$0xff]
    %v2927 = vld [vmem:[%s3 + $0xa8] sm:$0xff]
    %v2928 = vld [vmem:[%s3 + $0xb0] sm:$0xff]
    %v2929 = vld [vmem:[%s3 + $0xb8] sm:$0xff]
    %v2930 = vld [vmem:[%s3 + $0xc0] sm:$0xff]
    %v2931 = vld [vmem:[%s3 + $0xc8] sm:$0xff]
    %v2932 = vld [vmem:[%s3 + $0xd0] sm:$0xff]
    %v2933 = vld [vmem:[%s3 + $0xd8] sm:$0xff]
    %v2934 = vld [vmem:[%s3 + $0xe0] sm:$0xff]
    %v2935 = vld [vmem:[%s3 + $0xe8] sm:$0xff]
    %v2936 = vld [vmem:[%s3 + $0xf0] sm:$0xff]
    %v2937 = vld [vmem:[%s3 + $0xf8] sm:$0xff]
    %v2938 = vld [vmem:[%s3 + $0x100] sm:$0xff]
    %v2939 = vld [vmem:[%s3 + $0x108] sm:$0xff]
    %v2940 = vld [vmem:[%s3 + $0x110] sm:$0xff]
    %v2941 = vld [vmem:[%s3 + $0x118] sm:$0xff]
    %v2942 = vld [vmem:[%s3 + $0x120] sm:$0xff]
    %v2943 = vld [vmem:[%s3 + $0x128] sm:$0xff]
    %v2944 = vld [vmem:[%s3 + $0x130] sm:$0xff]
    %v2945 = vld [vmem:[%s3 + $0x138] sm:$0xff]
    %v2946 = vld [vmem:[%s3 + $0x140] sm:$0xff]
    %v2947 = vld [vmem:[%s3 + $0x148] sm:$0xff]
    %v2948 = vld [vmem:[%s3 + $0x150] sm:$0xff]
    %v2949 = vld [vmem:[%s3 + $0x158] sm:$0xff]
    %v2950 = vld [vmem:[%s3 + $0x160] sm:$0xff]
    %v2951 = vld [vmem:[%s3 + $0x168] sm:$0xff]
    %v2952 = vld [vmem:[%s3 + $0x170] sm:$0xff]
    %v2953 = vld [vmem:[%s3 + $0x178] sm:$0xff]
    %v2954 = vld [vmem:[%s3 + $0x180] sm:$0xff]
    %v2955 = vld [vmem:[%s3 + $0x188] sm:$0xff]
    %v2956 = vld [vmem:[%s3 + $0x190] sm:$0xff]
    %v2957 = vld [vmem:[%s3 + $0x198] sm:$0xff]
    %v2958 = vld [vmem:[%s3 + $0x1a0] sm:$0xff]
    %v2959 = vld [vmem:[%s3 + $0x1a8] sm:$0xff]
    %v2960 = vld [vmem:[%s3 + $0x1b0] sm:$0xff]
    %v2961 = vld [vmem:[%s3 + $0x1b8] sm:$0xff]
    %v2962 = vld [vmem:[%s3 + $0x1c0] sm:$0xff]
    %v2963 = vld [vmem:[%s3 + $0x1c8] sm:$0xff]
    %v2964 = vld [vmem:[%s3 + $0x1d0] sm:$0xff]
    %v2965 = vld [vmem:[%s3 + $0x1d8] sm:$0xff]
    %v2966 = vld [vmem:[%s3 + $0x1e0] sm:$0xff]
    %v2967 = vld [vmem:[%s3 + $0x1e8] sm:$0xff]
    %v2968 = vld [vmem:[%s3 + $0x1f0] sm:$0xff]
    %v2969 = vld [vmem:[%s3 + $0x1f8] sm:$0xff]
    %v2970 = vld [vmem:[%s3 + $0x200] sm:$0xff]
    %v2971 = vld [vmem:[%s3 + $0x208] sm:$0xff]
    %v2972 = vld [vmem:[%s3 + $0x210] sm:$0xff]
    %v2973 = vld [vmem:[%s3 + $0x218] sm:$0xff]
    %v2974 = vld [vmem:[%s3 + $0x220] sm:$0xff]
    %v2975 = vld [vmem:[%s3 + $0x228] sm:$0xff]
    %v2976 = vld [vmem:[%s3 + $0x230] sm:$0xff]
    %v2977 = vld [vmem:[%s3 + $0x238] sm:$0xff]
    %v2978 = vld [vmem:[%s3 + $0x240] sm:$0xff]
    %v2979 = vld [vmem:[%s3 + $0x248] sm:$0xff]
    %v2980 = vld [vmem:[%s3 + $0x250] sm:$0xff]
    %v2981 = vld [vmem:[%s3 + $0x258] sm:$0xff]
    %v2982 = vld [vmem:[%s3 + $0x260] sm:$0xff]
    %v2983 = vld [vmem:[%s3 + $0x268] sm:$0xff]
    %v2984 = vld [vmem:[%s3 + $0x270] sm:$0xff]
    %v2985 = vld [vmem:[%s3 + $0x278] sm:$0xff]
    %v2986 = vld [vmem:[%s3 + $0x280] sm:$0xff]
    %v2987 = vld [vmem:[%s3 + $0x288] sm:$0xff]
    %v2988 = vld [vmem:[%s3 + $0x290] sm:$0xff]
    %v2989 = vld [vmem:[%s3 + $0x298] sm:$0xff]
    %v2990 = vld [vmem:[%s3 + $0x2a0] sm:$0xff]
    %v2991 = vld [vmem:[%s3 + $0x2a8] sm:$0xff]
    %v2992 = vld [vmem:[%s3 + $0x2b0] sm:$0xff]
    %v2993 = vld [vmem:[%s3 + $0x2b8] sm:$0xff]
    %v2994 = vld [vmem:[%s3 + $0x2c0] sm:$0xff]
    %v2995 = vld [vmem:[%s3 + $0x2c8] sm:$0xff]
    %v2996 = vld [vmem:[%s3 + $0x2d0] sm:$0xff]
    %v2997 = vld [vmem:[%s3 + $0x2d8] sm:$0xff]
    %v2998 = vld [vmem:[%s3 + $0x2e0] sm:$0xff]
    %v2999 = vld [vmem:[%s3 + $0x2e8] sm:$0xff]
    %v3000 = vld [vmem:[%s3 + $0x2f0] sm:$0xff]
    %v3001 = vld [vmem:[%s3 + $0x2f8] sm:$0xff]
    %v3002 = vld [vmem:[%s3 + $0x300] sm:$0xff]
    %v3003 = vld [vmem:[%s3 + $0x308] sm:$0xff]
    %v3004 = vld [vmem:[%s3 + $0x310] sm:$0xff]
    %v3005 = vld [vmem:[%s3 + $0x318] sm:$0xff]
    %v3006 = vld [vmem:[%s3 + $0x320] sm:$0xff]
    %v3007 = vld [vmem:[%s3 + $0x328] sm:$0xff]
    %v3008 = vld [vmem:[%s3 + $0x330] sm:$0xff]
    %v3009 = vld [vmem:[%s3 + $0x338] sm:$0xff]
    %v3010 = vld [vmem:[%s3 + $0x340] sm:$0xff]
    %v3011 = vld [vmem:[%s3 + $0x348] sm:$0xff]
    %v3012 = vld [vmem:[%s3 + $0x350] sm:$0xff]
    %v3013 = vld [vmem:[%s3 + $0x358] sm:$0xff]
    %v3014 = vld [vmem:[%s3 + $0x360] sm:$0xff]
    %v3015 = vld [vmem:[%s3 + $0x368] sm:$0xff]
    %v3016 = vld [vmem:[%s3 + $0x370] sm:$0xff]
    %v3017 = vld [vmem:[%s3 + $0x378] sm:$0xff]
    %v3018 = vld [vmem:[%s3 + $0x380] sm:$0xff]
    %v3019 = vld [vmem:[%s3 + $0x388] sm:$0xff]
    %v3020 = vld [vmem:[%s3 + $0x390] sm:$0xff]
    %v3021 = vld [vmem:[%s3 + $0x398] sm:$0xff]
    %v3022 = vld [vmem:[%s3 + $0x3a0] sm:$0xff]
    %v3023 = vld [vmem:[%s3 + $0x3a8] sm:$0xff]
    %v3024 = vld [vmem:[%s3 + $0x3b0] sm:$0xff]
    %v3025 = vld [vmem:[%s3 + $0x3b8] sm:$0xff]
    %v3026 = vld [vmem:[%s3 + $0x3c0] sm:$0xff]
    %v3027 = vld [vmem:[%s3 + $0x3c8] sm:$0xff]
    %v3028 = vld [vmem:[%s3 + $0x3d0] sm:$0xff]
    %v3029 = vld [vmem:[%s3 + $0x3d8] sm:$0xff]
    %v3030 = vld [vmem:[%s3 + $0x3e0] sm:$0xff]
    %v3031 = vld [vmem:[%s3 + $0x3e8] sm:$0xff]
    %v3032 = vld [vmem:[%s3 + $0x3f0] sm:$0xff]
    %v3033 = vld [vmem:[%s3 + $0x3f8] sm:$0xff]
    %v3034 = vld [vmem:[%s4] sm:$0xf]
    %v3036 = vperm.slane %v3034, 0
    %v3037 = vperm.slane %v3034, 1
    %v3038 = vperm.slane %v3034, 2
    %v3039 = vperm.slane %v3034, 3
    %v3172 = vunpack.c.l.b16 %v2906
    %v3173 = vunpack.c.h.b16 %v2906
    %v3174 = vunpack.c.l.b16 %v2907
    %v3175 = vunpack.c.h.b16 %v2907
    %v3176 = vunpack.c.l.b16 %v2908
    %v3177 = vunpack.c.h.b16 %v2908
    %v3178 = vunpack.c.l.b16 %v2909
    %v3179 = vunpack.c.h.b16 %v2909
    %v3180 = vunpack.c.l.b16 %v2910
    %v3181 = vunpack.c.h.b16 %v2910
    %v3182 = vunpack.c.l.b16 %v2911
    %v3183 = vunpack.c.h.b16 %v2911
    %v3184 = vunpack.c.l.b16 %v2912
    %v3185 = vunpack.c.h.b16 %v2912
    %v3186 = vunpack.c.l.b16 %v2913
    %v3187 = vunpack.c.h.b16 %v2913
    %v3188 = vunpack.c.l.b16 %v2914
    %v3189 = vunpack.c.h.b16 %v2914
    %v3190 = vunpack.c.l.b16 %v2915
    %v3191 = vunpack.c.h.b16 %v2915
    %v3192 = vunpack.c.l.b16 %v2916
    %v3193 = vunpack.c.h.b16 %v2916
    %v3194 = vunpack.c.l.b16 %v2917
    %v3195 = vunpack.c.h.b16 %v2917
    %v3196 = vunpack.c.l.b16 %v2918
    %v3197 = vunpack.c.h.b16 %v2918
    %v3198 = vunpack.c.l.b16 %v2919
    %v3199 = vunpack.c.h.b16 %v2919
    %v3200 = vunpack.c.l.b16 %v2920
    %v3201 = vunpack.c.h.b16 %v2920
    %v3202 = vunpack.c.l.b16 %v2921
    %v3203 = vunpack.c.h.b16 %v2921
    %v3204 = vunpack.c.l.b16 %v2922
    %v3205 = vunpack.c.h.b16 %v2922
    %v3206 = vunpack.c.l.b16 %v2923
    %v3207 = vunpack.c.h.b16 %v2923
    %v3208 = vunpack.c.l.b16 %v2924
    %v3209 = vunpack.c.h.b16 %v2924
    %v3210 = vunpack.c.l.b16 %v2925
    %v3211 = vunpack.c.h.b16 %v2925
    %v3212 = vunpack.c.l.b16 %v2926
    %v3213 = vunpack.c.h.b16 %v2926
    %v3214 = vunpack.c.l.b16 %v2927
    %v3215 = vunpack.c.h.b16 %v2927
    %v3216 = vunpack.c.l.b16 %v2928
    %v3217 = vunpack.c.h.b16 %v2928
    %v3218 = vunpack.c.l.b16 %v2929
    %v3219 = vunpack.c.h.b16 %v2929
    %v3220 = vunpack.c.l.b16 %v2930
    %v3221 = vunpack.c.h.b16 %v2930
    %v3222 = vunpack.c.l.b16 %v2931
    %v3223 = vunpack.c.h.b16 %v2931
    %v3224 = vunpack.c.l.b16 %v2932
    %v3225 = vunpack.c.h.b16 %v2932
    %v3226 = vunpack.c.l.b16 %v2933
    %v3227 = vunpack.c.h.b16 %v2933
    %v3228 = vunpack.c.l.b16 %v2934
    %v3229 = vunpack.c.h.b16 %v2934
    %v3230 = vunpack.c.l.b16 %v2935
    %v3231 = vunpack.c.h.b16 %v2935
    %v3232 = vunpack.c.l.b16 %v2936
    %v3233 = vunpack.c.h.b16 %v2936
    %v3234 = vunpack.c.l.b16 %v2937
    %v3235 = vunpack.c.h.b16 %v2937
    %v3236 = vunpack.c.l.b16 %v2938
    %v3237 = vunpack.c.h.b16 %v2938
    %v3238 = vunpack.c.l.b16 %v2939
    %v3239 = vunpack.c.h.b16 %v2939
    %v3240 = vunpack.c.l.b16 %v2940
    %v3241 = vunpack.c.h.b16 %v2940
    %v3242 = vunpack.c.l.b16 %v2941
    %v3243 = vunpack.c.h.b16 %v2941
    %v3244 = vunpack.c.l.b16 %v2942
    %v3245 = vunpack.c.h.b16 %v2942
    %v3246 = vunpack.c.l.b16 %v2943
    %v3247 = vunpack.c.h.b16 %v2943
    %v3248 = vunpack.c.l.b16 %v2944
    %v3249 = vunpack.c.h.b16 %v2944
    %v3250 = vunpack.c.l.b16 %v2945
    %v3251 = vunpack.c.h.b16 %v2945
    %v3252 = vunpack.c.l.b16 %v2946
    %v3253 = vunpack.c.h.b16 %v2946
    %v3254 = vunpack.c.l.b16 %v2947
    %v3255 = vunpack.c.h.b16 %v2947
    %v3256 = vunpack.c.l.b16 %v2948
    %v3257 = vunpack.c.h.b16 %v2948
    %v3258 = vunpack.c.l.b16 %v2949
    %v3259 = vunpack.c.h.b16 %v2949
    %v3260 = vunpack.c.l.b16 %v2950
    %v3261 = vunpack.c.h.b16 %v2950
    %v3262 = vunpack.c.l.b16 %v2951
    %v3263 = vunpack.c.h.b16 %v2951
    %v3264 = vunpack.c.l.b16 %v2952
    %v3265 = vunpack.c.h.b16 %v2952
    %v3266 = vunpack.c.l.b16 %v2953
    %v3267 = vunpack.c.h.b16 %v2953
    %v3268 = vunpack.c.l.b16 %v2954
    %v3269 = vunpack.c.h.b16 %v2954
    %v3270 = vunpack.c.l.b16 %v2955
    %v3271 = vunpack.c.h.b16 %v2955
    %v3272 = vunpack.c.l.b16 %v2956
    %v3273 = vunpack.c.h.b16 %v2956
    %v3274 = vunpack.c.l.b16 %v2957
    %v3275 = vunpack.c.h.b16 %v2957
    %v3276 = vunpack.c.l.b16 %v2958
    %v3277 = vunpack.c.h.b16 %v2958
    %v3278 = vunpack.c.l.b16 %v2959
    %v3279 = vunpack.c.h.b16 %v2959
    %v3280 = vunpack.c.l.b16 %v2960
    %v3281 = vunpack.c.h.b16 %v2960
    %v3282 = vunpack.c.l.b16 %v2961
    %v3283 = vunpack.c.h.b16 %v2961
    %v3284 = vunpack.c.l.b16 %v2962
    %v3285 = vunpack.c.h.b16 %v2962
    %v3286 = vunpack.c.l.b16 %v2963
    %v3287 = vunpack.c.h.b16 %v2963
    %v3288 = vunpack.c.l.b16 %v2964
    %v3289 = vunpack.c.h.b16 %v2964
    %v3290 = vunpack.c.l.b16 %v2965
    %v3291 = vunpack.c.h.b16 %v2965
    %v3292 = vunpack.c.l.b16 %v2966
    %v3293 = vunpack.c.h.b16 %v2966
    %v3294 = vunpack.c.l.b16 %v2967
    %v3295 = vunpack.c.h.b16 %v2967
    %v3296 = vunpack.c.l.b16 %v2968
    %v3297 = vunpack.c.h.b16 %v2968
    %v3298 = vunpack.c.l.b16 %v2969
    %v3299 = vunpack.c.h.b16 %v2969
    %v3300 = vunpack.c.l.b16 %v2970
    %v3301 = vunpack.c.h.b16 %v2970
    %v3302 = vunpack.c.l.b16 %v2971
    %v3303 = vunpack.c.h.b16 %v2971
    %v3304 = vunpack.c.l.b16 %v2972
    %v3305 = vunpack.c.h.b16 %v2972
    %v3306 = vunpack.c.l.b16 %v2973
    %v3307 = vunpack.c.h.b16 %v2973
    %v3308 = vunpack.c.l.b16 %v2974
    %v3309 = vunpack.c.h.b16 %v2974
    %v3310 = vunpack.c.l.b16 %v2975
    %v3311 = vunpack.c.h.b16 %v2975
    %v3312 = vunpack.c.l.b16 %v2976
    %v3313 = vunpack.c.h.b16 %v2976
    %v3314 = vunpack.c.l.b16 %v2977
    %v3315 = vunpack.c.h.b16 %v2977
    %v3316 = vunpack.c.l.b16 %v2978
    %v3317 = vunpack.c.h.b16 %v2978
    %v3318 = vunpack.c.l.b16 %v2979
    %v3319 = vunpack.c.h.b16 %v2979
    %v3320 = vunpack.c.l.b16 %v2980
    %v3321 = vunpack.c.h.b16 %v2980
    %v3322 = vunpack.c.l.b16 %v2981
    %v3323 = vunpack.c.h.b16 %v2981
    %v3324 = vunpack.c.l.b16 %v2982
    %v3325 = vunpack.c.h.b16 %v2982
    %v3326 = vunpack.c.l.b16 %v2983
    %v3327 = vunpack.c.h.b16 %v2983
    %v3328 = vunpack.c.l.b16 %v2984
    %v3329 = vunpack.c.h.b16 %v2984
    %v3330 = vunpack.c.l.b16 %v2985
    %v3331 = vunpack.c.h.b16 %v2985
    %v3332 = vunpack.c.l.b16 %v2986
    %v3333 = vunpack.c.h.b16 %v2986
    %v3334 = vunpack.c.l.b16 %v2987
    %v3335 = vunpack.c.h.b16 %v2987
    %v3336 = vunpack.c.l.b16 %v2988
    %v3337 = vunpack.c.h.b16 %v2988
    %v3338 = vunpack.c.l.b16 %v2989
    %v3339 = vunpack.c.h.b16 %v2989
    %v3340 = vunpack.c.l.b16 %v2990
    %v3341 = vunpack.c.h.b16 %v2990
    %v3342 = vunpack.c.l.b16 %v2991
    %v3343 = vunpack.c.h.b16 %v2991
    %v3344 = vunpack.c.l.b16 %v2992
    %v3345 = vunpack.c.h.b16 %v2992
    %v3346 = vunpack.c.l.b16 %v2993
    %v3347 = vunpack.c.h.b16 %v2993
    %v3348 = vunpack.c.l.b16 %v2994
    %v3349 = vunpack.c.h.b16 %v2994
    %v3350 = vunpack.c.l.b16 %v2995
    %v3351 = vunpack.c.h.b16 %v2995
    %v3352 = vunpack.c.l.b16 %v2996
    %v3353 = vunpack.c.h.b16 %v2996
    %v3354 = vunpack.c.l.b16 %v2997
    %v3355 = vunpack.c.h.b16 %v2997
    %v3356 = vunpack.c.l.b16 %v2998
    %v3357 = vunpack.c.h.b16 %v2998
    %v3358 = vunpack.c.l.b16 %v2999
    %v3359 = vunpack.c.h.b16 %v2999
    %v3360 = vunpack.c.l.b16 %v3000
    %v3361 = vunpack.c.h.b16 %v3000
    %v3362 = vunpack.c.l.b16 %v3001
    %v3363 = vunpack.c.h.b16 %v3001
    %v3364 = vunpack.c.l.b16 %v3002
    %v3365 = vunpack.c.h.b16 %v3002
    %v3366 = vunpack.c.l.b16 %v3003
    %v3367 = vunpack.c.h.b16 %v3003
    %v3368 = vunpack.c.l.b16 %v3004
    %v3369 = vunpack.c.h.b16 %v3004
    %v3370 = vunpack.c.l.b16 %v3005
    %v3371 = vunpack.c.h.b16 %v3005
    %v3372 = vunpack.c.l.b16 %v3006
    %v3373 = vunpack.c.h.b16 %v3006
    %v3374 = vunpack.c.l.b16 %v3007
    %v3375 = vunpack.c.h.b16 %v3007
    %v3376 = vunpack.c.l.b16 %v3008
    %v3377 = vunpack.c.h.b16 %v3008
    %v3378 = vunpack.c.l.b16 %v3009
    %v3379 = vunpack.c.h.b16 %v3009
    %v3380 = vunpack.c.l.b16 %v3010
    %v3381 = vunpack.c.h.b16 %v3010
    %v3382 = vunpack.c.l.b16 %v3011
    %v3383 = vunpack.c.h.b16 %v3011
    %v3384 = vunpack.c.l.b16 %v3012
    %v3385 = vunpack.c.h.b16 %v3012
    %v3386 = vunpack.c.l.b16 %v3013
    %v3387 = vunpack.c.h.b16 %v3013
    %v3388 = vunpack.c.l.b16 %v3014
    %v3389 = vunpack.c.h.b16 %v3014
    %v3390 = vunpack.c.l.b16 %v3015
    %v3391 = vunpack.c.h.b16 %v3015
    %v3392 = vunpack.c.l.b16 %v3016
    %v3393 = vunpack.c.h.b16 %v3016
    %v3394 = vunpack.c.l.b16 %v3017
    %v3395 = vunpack.c.h.b16 %v3017
    %v3396 = vunpack.c.l.b16 %v3018
    %v3397 = vunpack.c.h.b16 %v3018
    %v3398 = vunpack.c.l.b16 %v3019
    %v3399 = vunpack.c.h.b16 %v3019
    %v3400 = vunpack.c.l.b16 %v3020
    %v3401 = vunpack.c.h.b16 %v3020
    %v3402 = vunpack.c.l.b16 %v3021
    %v3403 = vunpack.c.h.b16 %v3021
    %v3404 = vunpack.c.l.b16 %v3022
    %v3405 = vunpack.c.h.b16 %v3022
    %v3406 = vunpack.c.l.b16 %v3023
    %v3407 = vunpack.c.h.b16 %v3023
    %v3408 = vunpack.c.l.b16 %v3024
    %v3409 = vunpack.c.h.b16 %v3024
    %v3410 = vunpack.c.l.b16 %v3025
    %v3411 = vunpack.c.h.b16 %v3025
    %v3412 = vunpack.c.l.b16 %v3026
    %v3413 = vunpack.c.h.b16 %v3026
    %v3414 = vunpack.c.l.b16 %v3027
    %v3415 = vunpack.c.h.b16 %v3027
    %v3416 = vunpack.c.l.b16 %v3028
    %v3417 = vunpack.c.h.b16 %v3028
    %v3418 = vunpack.c.l.b16 %v3029
    %v3419 = vunpack.c.h.b16 %v3029
    %v3420 = vunpack.c.l.b16 %v3030
    %v3421 = vunpack.c.h.b16 %v3030
    %v3422 = vunpack.c.l.b16 %v3031
    %v3423 = vunpack.c.h.b16 %v3031
    %v3424 = vunpack.c.l.b16 %v3032
    %v3425 = vunpack.c.h.b16 %v3032
    %v3426 = vunpack.c.l.b16 %v3033
    %v3427 = vunpack.c.h.b16 %v3033
    %v3428 = vpack.c.b16 %v3176, %v3172
    %v3429 = vpack.c.b16 %v3177, %v3173
    %v3430 = vpack.c.b16 %v3178, %v3174
    %v3431 = vpack.c.b16 %v3179, %v3175
    %v3432 = vpack.c.b16 %v3184, %v3180
    %v3433 = vpack.c.b16 %v3185, %v3181
    %v3434 = vpack.c.b16 %v3186, %v3182
    %v3435 = vpack.c.b16 %v3187, %v3183
    %v3436 = vpack.c.b16 %v3192, %v3188
    %v3437 = vpack.c.b16 %v3193, %v3189
    %v3438 = vpack.c.b16 %v3194, %v3190
    %v3439 = vpack.c.b16 %v3195, %v3191
    %v3440 = vpack.c.b16 %v3200, %v3196
    %v3441 = vpack.c.b16 %v3201, %v3197
    %v3442 = vpack.c.b16 %v3202, %v3198
    %v3443 = vpack.c.b16 %v3203, %v3199
    %v3444 = vpack.c.b16 %v3208, %v3204
    %v3445 = vpack.c.b16 %v3209, %v3205
    %v3446 = vpack.c.b16 %v3210, %v3206
    %v3447 = vpack.c.b16 %v3211, %v3207
    %v3448 = vpack.c.b16 %v3216, %v3212
    %v3449 = vpack.c.b16 %v3217, %v3213
    %v3450 = vpack.c.b16 %v3218, %v3214
    %v3451 = vpack.c.b16 %v3219, %v3215
    %v3452 = vpack.c.b16 %v3224, %v3220
    %v3453 = vpack.c.b16 %v3225, %v3221
    %v3454 = vpack.c.b16 %v3226, %v3222
    %v3455 = vpack.c.b16 %v3227, %v3223
    %v3456 = vpack.c.b16 %v3232, %v3228
    %v3457 = vpack.c.b16 %v3233, %v3229
    %v3458 = vpack.c.b16 %v3234, %v3230
    %v3459 = vpack.c.b16 %v3235, %v3231
    %v3460 = vpack.c.b16 %v3240, %v3236
    %v3461 = vpack.c.b16 %v3241, %v3237
    %v3462 = vpack.c.b16 %v3242, %v3238
    %v3463 = vpack.c.b16 %v3243, %v3239
    %v3464 = vpack.c.b16 %v3248, %v3244
    %v3465 = vpack.c.b16 %v3249, %v3245
    %v3466 = vpack.c.b16 %v3250, %v3246
    %v3467 = vpack.c.b16 %v3251, %v3247
    %v3468 = vpack.c.b16 %v3256, %v3252
    %v3469 = vpack.c.b16 %v3257, %v3253
    %v3470 = vpack.c.b16 %v3258, %v3254
    %v3471 = vpack.c.b16 %v3259, %v3255
    %v3472 = vpack.c.b16 %v3264, %v3260
    %v3473 = vpack.c.b16 %v3265, %v3261
    %v3474 = vpack.c.b16 %v3266, %v3262
    %v3475 = vpack.c.b16 %v3267, %v3263
    %v3476 = vpack.c.b16 %v3272, %v3268
    %v3477 = vpack.c.b16 %v3273, %v3269
    %v3478 = vpack.c.b16 %v3274, %v3270
    %v3479 = vpack.c.b16 %v3275, %v3271
    %v3480 = vpack.c.b16 %v3280, %v3276
    %v3481 = vpack.c.b16 %v3281, %v3277
    %v3482 = vpack.c.b16 %v3282, %v3278
    %v3483 = vpack.c.b16 %v3283, %v3279
    %v3484 = vpack.c.b16 %v3288, %v3284
    %v3485 = vpack.c.b16 %v3289, %v3285
    %v3486 = vpack.c.b16 %v3290, %v3286
    %v3487 = vpack.c.b16 %v3291, %v3287
    %v3488 = vpack.c.b16 %v3296, %v3292
    %v3489 = vpack.c.b16 %v3297, %v3293
    %v3490 = vpack.c.b16 %v3298, %v3294
    %v3491 = vpack.c.b16 %v3299, %v3295
    %v3492 = vpack.c.b16 %v3304, %v3300
    %v3493 = vpack.c.b16 %v3305, %v3301
    %v3494 = vpack.c.b16 %v3306, %v3302
    %v3495 = vpack.c.b16 %v3307, %v3303
    %v3496 = vpack.c.b16 %v3312, %v3308
    %v3497 = vpack.c.b16 %v3313, %v3309
    %v3498 = vpack.c.b16 %v3314, %v3310
    %v3499 = vpack.c.b16 %v3315, %v3311
    %v3500 = vpack.c.b16 %v3320, %v3316
    %v3501 = vpack.c.b16 %v3321, %v3317
    %v3502 = vpack.c.b16 %v3322, %v3318
    %v3503 = vpack.c.b16 %v3323, %v3319
    %v3504 = vpack.c.b16 %v3328, %v3324
    %v3505 = vpack.c.b16 %v3329, %v3325
    %v3506 = vpack.c.b16 %v3330, %v3326
    %v3507 = vpack.c.b16 %v3331, %v3327
    %v3508 = vpack.c.b16 %v3336, %v3332
    %v3509 = vpack.c.b16 %v3337, %v3333
    %v3510 = vpack.c.b16 %v3338, %v3334
    %v3511 = vpack.c.b16 %v3339, %v3335
    %v3512 = vpack.c.b16 %v3344, %v3340
    %v3513 = vpack.c.b16 %v3345, %v3341
    %v3514 = vpack.c.b16 %v3346, %v3342
    %v3515 = vpack.c.b16 %v3347, %v3343
    %v3516 = vpack.c.b16 %v3352, %v3348
    %v3517 = vpack.c.b16 %v3353, %v3349
    %v3518 = vpack.c.b16 %v3354, %v3350
    %v3519 = vpack.c.b16 %v3355, %v3351
    %v3520 = vpack.c.b16 %v3360, %v3356
    %v3521 = vpack.c.b16 %v3361, %v3357
    %v3522 = vpack.c.b16 %v3362, %v3358
    %v3523 = vpack.c.b16 %v3363, %v3359
    %v3524 = vpack.c.b16 %v3368, %v3364
    %v3525 = vpack.c.b16 %v3369, %v3365
    %v3526 = vpack.c.b16 %v3370, %v3366
    %v3527 = vpack.c.b16 %v3371, %v3367
    %v3528 = vpack.c.b16 %v3376, %v3372
    %v3529 = vpack.c.b16 %v3377, %v3373
    %v3530 = vpack.c.b16 %v3378, %v3374
    %v3531 = vpack.c.b16 %v3379, %v3375
    %v3532 = vpack.c.b16 %v3384, %v3380
    %v3533 = vpack.c.b16 %v3385, %v3381
    %v3534 = vpack.c.b16 %v3386, %v3382
    %v3535 = vpack.c.b16 %v3387, %v3383
    %v3536 = vpack.c.b16 %v3392, %v3388
    %v3537 = vpack.c.b16 %v3393, %v3389
    %v3538 = vpack.c.b16 %v3394, %v3390
    %v3539 = vpack.c.b16 %v3395, %v3391
    %v3540 = vpack.c.b16 %v3400, %v3396
    %v3541 = vpack.c.b16 %v3401, %v3397
    %v3542 = vpack.c.b16 %v3402, %v3398
    %v3543 = vpack.c.b16 %v3403, %v3399
    %v3544 = vpack.c.b16 %v3408, %v3404
    %v3545 = vpack.c.b16 %v3409, %v3405
    %v3546 = vpack.c.b16 %v3410, %v3406
    %v3547 = vpack.c.b16 %v3411, %v3407
    %v3548 = vpack.c.b16 %v3416, %v3412
    %v3549 = vpack.c.b16 %v3417, %v3413
    %v3550 = vpack.c.b16 %v3418, %v3414
    %v3551 = vpack.c.b16 %v3419, %v3415
    %v3552 = vpack.c.b16 %v3424, %v3420
    %v3553 = vpack.c.b16 %v3425, %v3421
    %v3554 = vpack.c.b16 %v3426, %v3422
    %v3555 = vpack.c.b16 %v3427, %v3423
    %3684 = vmatpush.bf16.msra.mxu0 %v3456
    %3685 = vmatpush.bf16.msra.mxu0 %v3452
    %3686 = vmatpush.bf16.msra.mxu0 %v3448
    %3687 = vmatpush.bf16.msra.mxu0 %v3444
    %3688 = vmatpush.bf16.msra.mxu0 %v3440
    %3689 = vmatpush.bf16.msra.mxu0 %v3436
    %3690 = vmatpush.bf16.msra.mxu0 %v3432
    %3691 = vmatpush.bf16.msra.mxu0 %v3428
    %3692 = vmatmul.bf16.gmra.mxu0 %v2874
    %v3693 = vpop.f32.mrf.mxu0
    %v3694 = vadd.f32 %v3036, %v3693
    %v3695 = vpop.f32.mrf.mxu0
    %v3696 = vadd.f32 %v3036, %v3695
    %3697 = vmatmul.bf16.gmra.mxu0 %v2878
    %v3698 = vpop.f32.mrf.mxu0
    %v3699 = vadd.f32 %v3036, %v3698
    %v3700 = vpop.f32.mrf.mxu0
    %v3701 = vadd.f32 %v3036, %v3700
    %3702 = vmatmul.bf16.gmra.mxu0 %v2882
    %v3703 = vpop.f32.mrf.mxu0
    %v3704 = vadd.f32 %v3036, %v3703
    %v3705 = vpop.f32.mrf.mxu0
    %v3706 = vadd.f32 %v3036, %v3705
    %3707 = vmatmul.bf16.gmra.mxu0 %v2886
    %v3708 = vpop.f32.mrf.mxu0
    %v3709 = vadd.f32 %v3036, %v3708
    %v3710 = vpop.f32.mrf.mxu0
    %v3711 = vadd.f32 %v3036, %v3710
    %3712 = vmatmul.bf16.gmra.mxu0 %v2890
    %v3713 = vpop.f32.mrf.mxu0
    %v3714 = vadd.f32 %v3036, %v3713
    %v3715 = vpop.f32.mrf.mxu0
    %v3716 = vadd.f32 %v3036, %v3715
    %3717 = vmatmul.bf16.gmra.mxu0 %v2894
    %v3718 = vpop.f32.mrf.mxu0
    %v3719 = vadd.f32 %v3036, %v3718
    %v3720 = vpop.f32.mrf.mxu0
    %v3721 = vadd.f32 %v3036, %v3720
    %3722 = vmatmul.bf16.gmra.mxu0 %v2898
    %v3723 = vpop.f32.mrf.mxu0
    %v3724 = vadd.f32 %v3036, %v3723
    %v3725 = vpop.f32.mrf.mxu0
    %v3726 = vadd.f32 %v3036, %v3725
    %3727 = vmatmul.bf16.gmra.mxu0 %v2902
    %v3728 = vpop.f32.mrf.mxu0
    %v3729 = vadd.f32 %v3036, %v3728
    %v3730 = vpop.f32.mrf.mxu0
    %v3731 = vadd.f32 %v3036, %v3730
    %3732 = vdwg.mxu0
    %3733 = vmatpush.bf16.msra.mxu0 %v3488
    %3734 = vmatpush.bf16.msra.mxu0 %v3484
    %3735 = vmatpush.bf16.msra.mxu0 %v3480
    %3736 = vmatpush.bf16.msra.mxu0 %v3476
    %3737 = vmatpush.bf16.msra.mxu0 %v3472
    %3738 = vmatpush.bf16.msra.mxu0 %v3468
    %3739 = vmatpush.bf16.msra.mxu0 %v3464
    %3740 = vmatpush.bf16.msra.mxu0 %v3460
    %3741 = vmatmul.bf16.gmra.mxu0 %v2875
    %v3742 = vpop.f32.mrf.mxu0
    %v3743 = vadd.f32 %v3694, %v3742
    %v3744 = vpop.f32.mrf.mxu0
    %v3745 = vadd.f32 %v3696, %v3744
    %3746 = vmatmul.bf16.gmra.mxu0 %v2879
    %v3747 = vpop.f32.mrf.mxu0
    %v3748 = vadd.f32 %v3699, %v3747
    %v3749 = vpop.f32.mrf.mxu0
    %v3750 = vadd.f32 %v3701, %v3749
    %3751 = vmatmul.bf16.gmra.mxu0 %v2883
    %v3752 = vpop.f32.mrf.mxu0
    %v3753 = vadd.f32 %v3704, %v3752
    %v3754 = vpop.f32.mrf.mxu0
    %v3755 = vadd.f32 %v3706, %v3754
    %3756 = vmatmul.bf16.gmra.mxu0 %v2887
    %v3757 = vpop.f32.mrf.mxu0
    %v3758 = vadd.f32 %v3709, %v3757
    %v3759 = vpop.f32.mrf.mxu0
    %v3760 = vadd.f32 %v3711, %v3759
    %3761 = vmatmul.bf16.gmra.mxu0 %v2891
    %v3762 = vpop.f32.mrf.mxu0
    %v3763 = vadd.f32 %v3714, %v3762
    %v3764 = vpop.f32.mrf.mxu0
    %v3765 = vadd.f32 %v3716, %v3764
    %3766 = vmatmul.bf16.gmra.mxu0 %v2895
    %v3767 = vpop.f32.mrf.mxu0
    %v3768 = vadd.f32 %v3719, %v3767
    %v3769 = vpop.f32.mrf.mxu0
    %v3770 = vadd.f32 %v3721, %v3769
    %3771 = vmatmul.bf16.gmra.mxu0 %v2899
    %v3772 = vpop.f32.mrf.mxu0
    %v3773 = vadd.f32 %v3724, %v3772
    %v3774 = vpop.f32.mrf.mxu0
    %v3775 = vadd.f32 %v3726, %v3774
    %3776 = vmatmul.bf16.gmra.mxu0 %v2903
    %v3777 = vpop.f32.mrf.mxu0
    %v3778 = vadd.f32 %v3729, %v3777
    %v3779 = vpop.f32.mrf.mxu0
    %v3780 = vadd.f32 %v3731, %v3779
    %3781 = vdwg.mxu0
    %3782 = vmatpush.bf16.msra.mxu0 %v3520
    %3783 = vmatpush.bf16.msra.mxu0 %v3516
    %3784 = vmatpush.bf16.msra.mxu0 %v3512
    %3785 = vmatpush.bf16.msra.mxu0 %v3508
    %3786 = vmatpush.bf16.msra.mxu0 %v3504
    %3787 = vmatpush.bf16.msra.mxu0 %v3500
    %3788 = vmatpush.bf16.msra.mxu0 %v3496
    %3789 = vmatpush.bf16.msra.mxu0 %v3492
    %3790 = vmatmul.bf16.gmra.mxu0 %v2876
    %v3791 = vpop.f32.mrf.mxu0
    %v3792 = vadd.f32 %v3743, %v3791
    %v3793 = vpop.f32.mrf.mxu0
    %v3794 = vadd.f32 %v3745, %v3793
    %3795 = vmatmul.bf16.gmra.mxu0 %v2880
    %v3796 = vpop.f32.mrf.mxu0
    %v3797 = vadd.f32 %v3748, %v3796
    %v3798 = vpop.f32.mrf.mxu0
    %v3799 = vadd.f32 %v3750, %v3798
    %3800 = vmatmul.bf16.gmra.mxu0 %v2884
    %v3801 = vpop.f32.mrf.mxu0
    %v3802 = vadd.f32 %v3753, %v3801
    %v3803 = vpop.f32.mrf.mxu0
    %v3804 = vadd.f32 %v3755, %v3803
    %3805 = vmatmul.bf16.gmra.mxu0 %v2888
    %v3806 = vpop.f32.mrf.mxu0
    %v3807 = vadd.f32 %v3758, %v3806
    %v3808 = vpop.f32.mrf.mxu0
    %v3809 = vadd.f32 %v3760, %v3808
    %3810 = vmatmul.bf16.gmra.mxu0 %v2892
    %v3811 = vpop.f32.mrf.mxu0
    %v3812 = vadd.f32 %v3763, %v3811
    %v3813 = vpop.f32.mrf.mxu0
    %v3814 = vadd.f32 %v3765, %v3813
    %3815 = vmatmul.bf16.gmra.mxu0 %v2896
    %v3816 = vpop.f32.mrf.mxu0
    %v3817 = vadd.f32 %v3768, %v3816
    %v3818 = vpop.f32.mrf.mxu0
    %v3819 = vadd.f32 %v3770, %v3818
    %3820 = vmatmul.bf16.gmra.mxu0 %v2900
    %v3821 = vpop.f32.mrf.mxu0
    %v3822 = vadd.f32 %v3773, %v3821
    %v3823 = vpop.f32.mrf.mxu0
    %v3824 = vadd.f32 %v3775, %v3823
    %3825 = vmatmul.bf16.gmra.mxu0 %v2904
    %v3826 = vpop.f32.mrf.mxu0
    %v3827 = vadd.f32 %v3778, %v3826
    %v3828 = vpop.f32.mrf.mxu0
    %v3829 = vadd.f32 %v3780, %v3828
    %3830 = vdwg.mxu0
    %3831 = vmatpush.bf16.msra.mxu0 %v3552
    %3832 = vmatpush.bf16.msra.mxu0 %v3548
    %3833 = vmatpush.bf16.msra.mxu0 %v3544
    %3834 = vmatpush.bf16.msra.mxu0 %v3540
    %3835 = vmatpush.bf16.msra.mxu0 %v3536
    %3836 = vmatpush.bf16.msra.mxu0 %v3532
    %3837 = vmatpush.bf16.msra.mxu0 %v3528
    %3838 = vmatpush.bf16.msra.mxu0 %v3524
    %3839 = vmatmul.bf16.gmra.mxu0 %v2877
    %v3840 = vpop.f32.mrf.mxu0
    %v3841 = vadd.f32 %v3792, %v3840
    %v3842 = vpop.f32.mrf.mxu0
    %v3843 = vadd.f32 %v3794, %v3842
    %3844 = vmatmul.bf16.gmra.mxu0 %v2881
    %v3845 = vpop.f32.mrf.mxu0
    %v3846 = vadd.f32 %v3797, %v3845
    %v3847 = vpop.f32.mrf.mxu0
    %v3848 = vadd.f32 %v3799, %v3847
    %3849 = vmatmul.bf16.gmra.mxu0 %v2885
    %v3850 = vpop.f32.mrf.mxu0
    %v3851 = vadd.f32 %v3802, %v3850
    %v3852 = vpop.f32.mrf.mxu0
    %v3853 = vadd.f32 %v3804, %v3852
    %3854 = vmatmul.bf16.gmra.mxu0 %v2889
    %v3855 = vpop.f32.mrf.mxu0
    %v3856 = vadd.f32 %v3807, %v3855
    %v3857 = vpop.f32.mrf.mxu0
    %v3858 = vadd.f32 %v3809, %v3857
    %3859 = vmatmul.bf16.gmra.mxu0 %v2893
    %v3860 = vpop.f32.mrf.mxu0
    %v3861 = vadd.f32 %v3812, %v3860
    %v3862 = vpop.f32.mrf.mxu0
    %v3863 = vadd.f32 %v3814, %v3862
    %3864 = vmatmul.bf16.gmra.mxu0 %v2897
    %v3865 = vpop.f32.mrf.mxu0
    %v3866 = vadd.f32 %v3817, %v3865
    %v3867 = vpop.f32.mrf.mxu0
    %v3868 = vadd.f32 %v3819, %v3867
    %3869 = vmatmul.bf16.gmra.mxu0 %v2901
    %v3870 = vpop.f32.mrf.mxu0
    %v3871 = vadd.f32 %v3822, %v3870
    %v3872 = vpop.f32.mrf.mxu0
    %v3873 = vadd.f32 %v3824, %v3872
    %3874 = vmatmul.bf16.gmra.mxu0 %v2905
    %v3875 = vpop.f32.mrf.mxu0
    %v3876 = vadd.f32 %v3827, %v3875
    %v3877 = vpop.f32.mrf.mxu0
    %v3878 = vadd.f32 %v3829, %v3877
    %3879 = vdwg.mxu0
    %3880 = vmatpush.bf16.msra.mxu0 %v3457
    %3881 = vmatpush.bf16.msra.mxu0 %v3453
    %3882 = vmatpush.bf16.msra.mxu0 %v3449
    %3883 = vmatpush.bf16.msra.mxu0 %v3445
    %3884 = vmatpush.bf16.msra.mxu0 %v3441
    %3885 = vmatpush.bf16.msra.mxu0 %v3437
    %3886 = vmatpush.bf16.msra.mxu0 %v3433
    %3887 = vmatpush.bf16.msra.mxu0 %v3429
    %3888 = vmatmul.bf16.gmra.mxu0 %v2874
    %v3889 = vpop.f32.mrf.mxu0
    %v3890 = vadd.f32 %v3037, %v3889
    %v3891 = vpop.f32.mrf.mxu0
    %v3892 = vadd.f32 %v3037, %v3891
    %3893 = vmatmul.bf16.gmra.mxu0 %v2878
    %v3894 = vpop.f32.mrf.mxu0
    %v3895 = vadd.f32 %v3037, %v3894
    %v3896 = vpop.f32.mrf.mxu0
    %v3897 = vadd.f32 %v3037, %v3896
    %3898 = vmatmul.bf16.gmra.mxu0 %v2882
    %v3899 = vpop.f32.mrf.mxu0
    %v3900 = vadd.f32 %v3037, %v3899
    %v3901 = vpop.f32.mrf.mxu0
    %v3902 = vadd.f32 %v3037, %v3901
    %3903 = vmatmul.bf16.gmra.mxu0 %v2886
    %v3904 = vpop.f32.mrf.mxu0
    %v3905 = vadd.f32 %v3037, %v3904
    %v3906 = vpop.f32.mrf.mxu0
    %v3907 = vadd.f32 %v3037, %v3906
    %3908 = vmatmul.bf16.gmra.mxu0 %v2890
    %v3909 = vpop.f32.mrf.mxu0
    %v3910 = vadd.f32 %v3037, %v3909
    %v3911 = vpop.f32.mrf.mxu0
    %v3912 = vadd.f32 %v3037, %v3911
    %3913 = vmatmul.bf16.gmra.mxu0 %v2894
    %v3914 = vpop.f32.mrf.mxu0
    %v3915 = vadd.f32 %v3037, %v3914
    %v3916 = vpop.f32.mrf.mxu0
    %v3917 = vadd.f32 %v3037, %v3916
    %3918 = vmatmul.bf16.gmra.mxu0 %v2898
    %v3919 = vpop.f32.mrf.mxu0
    %v3920 = vadd.f32 %v3037, %v3919
    %v3921 = vpop.f32.mrf.mxu0
    %v3922 = vadd.f32 %v3037, %v3921
    %3923 = vmatmul.bf16.gmra.mxu0 %v2902
    %v3924 = vpop.f32.mrf.mxu0
    %v3925 = vadd.f32 %v3037, %v3924
    %v3926 = vpop.f32.mrf.mxu0
    %v3927 = vadd.f32 %v3037, %v3926
    %3928 = vdwg.mxu0
    %3929 = vmatpush.bf16.msra.mxu0 %v3489
    %3930 = vmatpush.bf16.msra.mxu0 %v3485
    %3931 = vmatpush.bf16.msra.mxu0 %v3481
    %3932 = vmatpush.bf16.msra.mxu0 %v3477
    %3933 = vmatpush.bf16.msra.mxu0 %v3473
    %3934 = vmatpush.bf16.msra.mxu0 %v3469
    %3935 = vmatpush.bf16.msra.mxu0 %v3465
    %3936 = vmatpush.bf16.msra.mxu0 %v3461
    %3937 = vmatmul.bf16.gmra.mxu0 %v2875
    %v3938 = vpop.f32.mrf.mxu0
    %v3939 = vadd.f32 %v3890, %v3938
    %v3940 = vpop.f32.mrf.mxu0
    %v3941 = vadd.f32 %v3892, %v3940
    %3942 = vmatmul.bf16.gmra.mxu0 %v2879
    %v3943 = vpop.f32.mrf.mxu0
    %v3944 = vadd.f32 %v3895, %v3943
    %v3945 = vpop.f32.mrf.mxu0
    %v3946 = vadd.f32 %v3897, %v3945
    %3947 = vmatmul.bf16.gmra.mxu0 %v2883
    %v3948 = vpop.f32.mrf.mxu0
    %v3949 = vadd.f32 %v3900, %v3948
    %v3950 = vpop.f32.mrf.mxu0
    %v3951 = vadd.f32 %v3902, %v3950
    %3952 = vmatmul.bf16.gmra.mxu0 %v2887
    %v3953 = vpop.f32.mrf.mxu0
    %v3954 = vadd.f32 %v3905, %v3953
    %v3955 = vpop.f32.mrf.mxu0
    %v3956 = vadd.f32 %v3907, %v3955
    %3957 = vmatmul.bf16.gmra.mxu0 %v2891
    %v3958 = vpop.f32.mrf.mxu0
    %v3959 = vadd.f32 %v3910, %v3958
    %v3960 = vpop.f32.mrf.mxu0
    %v3961 = vadd.f32 %v3912, %v3960
    %3962 = vmatmul.bf16.gmra.mxu0 %v2895
    %v3963 = vpop.f32.mrf.mxu0
    %v3964 = vadd.f32 %v3915, %v3963
    %v3965 = vpop.f32.mrf.mxu0
    %v3966 = vadd.f32 %v3917, %v3965
    %3967 = vmatmul.bf16.gmra.mxu0 %v2899
    %v3968 = vpop.f32.mrf.mxu0
    %v3969 = vadd.f32 %v3920, %v3968
    %v3970 = vpop.f32.mrf.mxu0
    %v3971 = vadd.f32 %v3922, %v3970
    %3972 = vmatmul.bf16.gmra.mxu0 %v2903
    %v3973 = vpop.f32.mrf.mxu0
    %v3974 = vadd.f32 %v3925, %v3973
    %v3975 = vpop.f32.mrf.mxu0
    %v3976 = vadd.f32 %v3927, %v3975
    %3977 = vdwg.mxu0
    %3978 = vmatpush.bf16.msra.mxu0 %v3521
    %3979 = vmatpush.bf16.msra.mxu0 %v3517
    %3980 = vmatpush.bf16.msra.mxu0 %v3513
    %3981 = vmatpush.bf16.msra.mxu0 %v3509
    %3982 = vmatpush.bf16.msra.mxu0 %v3505
    %3983 = vmatpush.bf16.msra.mxu0 %v3501
    %3984 = vmatpush.bf16.msra.mxu0 %v3497
    %3985 = vmatpush.bf16.msra.mxu0 %v3493
    %3986 = vmatmul.bf16.gmra.mxu0 %v2876
    %v3987 = vpop.f32.mrf.mxu0
    %v3988 = vadd.f32 %v3939, %v3987
    %v3989 = vpop.f32.mrf.mxu0
    %v3990 = vadd.f32 %v3941, %v3989
    %3991 = vmatmul.bf16.gmra.mxu0 %v2880
    %v3992 = vpop.f32.mrf.mxu0
    %v3993 = vadd.f32 %v3944, %v3992
    %v3994 = vpop.f32.mrf.mxu0
    %v3995 = vadd.f32 %v3946, %v3994
    %3996 = vmatmul.bf16.gmra.mxu0 %v2884
    %v3997 = vpop.f32.mrf.mxu0
    %v3998 = vadd.f32 %v3949, %v3997
    %v3999 = vpop.f32.mrf.mxu0
    %v4000 = vadd.f32 %v3951, %v3999
    %4001 = vmatmul.bf16.gmra.mxu0 %v2888
    %v4002 = vpop.f32.mrf.mxu0
    %v4003 = vadd.f32 %v3954, %v4002
    %v4004 = vpop.f32.mrf.mxu0
    %v4005 = vadd.f32 %v3956, %v4004
    %4006 = vmatmul.bf16.gmra.mxu0 %v2892
    %v4007 = vpop.f32.mrf.mxu0
    %v4008 = vadd.f32 %v3959, %v4007
    %v4009 = vpop.f32.mrf.mxu0
    %v4010 = vadd.f32 %v3961, %v4009
    %4011 = vmatmul.bf16.gmra.mxu0 %v2896
    %v4012 = vpop.f32.mrf.mxu0
    %v4013 = vadd.f32 %v3964, %v4012
    %v4014 = vpop.f32.mrf.mxu0
    %v4015 = vadd.f32 %v3966, %v4014
    %4016 = vmatmul.bf16.gmra.mxu0 %v2900
    %v4017 = vpop.f32.mrf.mxu0
    %v4018 = vadd.f32 %v3969, %v4017
    %v4019 = vpop.f32.mrf.mxu0
    %v4020 = vadd.f32 %v3971, %v4019
    %4021 = vmatmul.bf16.gmra.mxu0 %v2904
    %v4022 = vpop.f32.mrf.mxu0
    %v4023 = vadd.f32 %v3974, %v4022
    %v4024 = vpop.f32.mrf.mxu0
    %v4025 = vadd.f32 %v3976, %v4024
    %4026 = vdwg.mxu0
    %4027 = vmatpush.bf16.msra.mxu0 %v3553
    %4028 = vmatpush.bf16.msra.mxu0 %v3549
    %4029 = vmatpush.bf16.msra.mxu0 %v3545
    %4030 = vmatpush.bf16.msra.mxu0 %v3541
    %4031 = vmatpush.bf16.msra.mxu0 %v3537
    %4032 = vmatpush.bf16.msra.mxu0 %v3533
    %4033 = vmatpush.bf16.msra.mxu0 %v3529
    %4034 = vmatpush.bf16.msra.mxu0 %v3525
    %4035 = vmatmul.bf16.gmra.mxu0 %v2877
    %v4036 = vpop.f32.mrf.mxu0
    %v4037 = vadd.f32 %v3988, %v4036
    %v4038 = vpop.f32.mrf.mxu0
    %v4039 = vadd.f32 %v3990, %v4038
    %4040 = vmatmul.bf16.gmra.mxu0 %v2881
    %v4041 = vpop.f32.mrf.mxu0
    %v4042 = vadd.f32 %v3993, %v4041
    %v4043 = vpop.f32.mrf.mxu0
    %v4044 = vadd.f32 %v3995, %v4043
    %4045 = vmatmul.bf16.gmra.mxu0 %v2885
    %v4046 = vpop.f32.mrf.mxu0
    %v4047 = vadd.f32 %v3998, %v4046
    %v4048 = vpop.f32.mrf.mxu0
    %v4049 = vadd.f32 %v4000, %v4048
    %4050 = vmatmul.bf16.gmra.mxu0 %v2889
    %v4051 = vpop.f32.mrf.mxu0
    %v4052 = vadd.f32 %v4003, %v4051
    %v4053 = vpop.f32.mrf.mxu0
    %v4054 = vadd.f32 %v4005, %v4053
    %4055 = vmatmul.bf16.gmra.mxu0 %v2893
    %v4056 = vpop.f32.mrf.mxu0
    %v4057 = vadd.f32 %v4008, %v4056
    %v4058 = vpop.f32.mrf.mxu0
    %v4059 = vadd.f32 %v4010, %v4058
    %4060 = vmatmul.bf16.gmra.mxu0 %v2897
    %v4061 = vpop.f32.mrf.mxu0
    %v4062 = vadd.f32 %v4013, %v4061
    %v4063 = vpop.f32.mrf.mxu0
    %v4064 = vadd.f32 %v4015, %v4063
    %4065 = vmatmul.bf16.gmra.mxu0 %v2901
    %v4066 = vpop.f32.mrf.mxu0
    %v4067 = vadd.f32 %v4018, %v4066
    %v4068 = vpop.f32.mrf.mxu0
    %v4069 = vadd.f32 %v4020, %v4068
    %4070 = vmatmul.bf16.gmra.mxu0 %v2905
    %v4071 = vpop.f32.mrf.mxu0
    %v4072 = vadd.f32 %v4023, %v4071
    %v4073 = vpop.f32.mrf.mxu0
    %v4074 = vadd.f32 %v4025, %v4073
    %4075 = vdwg.mxu0
    %4076 = vmatpush.bf16.msra.mxu0 %v3458
    %4077 = vmatpush.bf16.msra.mxu0 %v3454
    %4078 = vmatpush.bf16.msra.mxu0 %v3450
    %4079 = vmatpush.bf16.msra.mxu0 %v3446
    %4080 = vmatpush.bf16.msra.mxu0 %v3442
    %4081 = vmatpush.bf16.msra.mxu0 %v3438
    %4082 = vmatpush.bf16.msra.mxu0 %v3434
    %4083 = vmatpush.bf16.msra.mxu0 %v3430
    %4084 = vmatmul.bf16.gmra.mxu0 %v2874
    %v4085 = vpop.f32.mrf.mxu0
    %v4086 = vadd.f32 %v3038, %v4085
    %v4087 = vpop.f32.mrf.mxu0
    %v4088 = vadd.f32 %v3038, %v4087
    %4089 = vmatmul.bf16.gmra.mxu0 %v2878
    %v4090 = vpop.f32.mrf.mxu0
    %v4091 = vadd.f32 %v3038, %v4090
    %v4092 = vpop.f32.mrf.mxu0
    %v4093 = vadd.f32 %v3038, %v4092
    %4094 = vmatmul.bf16.gmra.mxu0 %v2882
    %v4095 = vpop.f32.mrf.mxu0
    %v4096 = vadd.f32 %v3038, %v4095
    %v4097 = vpop.f32.mrf.mxu0
    %v4098 = vadd.f32 %v3038, %v4097
    %4099 = vmatmul.bf16.gmra.mxu0 %v2886
    %v4100 = vpop.f32.mrf.mxu0
    %v4101 = vadd.f32 %v3038, %v4100
    %v4102 = vpop.f32.mrf.mxu0
    %v4103 = vadd.f32 %v3038, %v4102
    %4104 = vmatmul.bf16.gmra.mxu0 %v2890
    %v4105 = vpop.f32.mrf.mxu0
    %v4106 = vadd.f32 %v3038, %v4105
    %v4107 = vpop.f32.mrf.mxu0
    %v4108 = vadd.f32 %v3038, %v4107
    %4109 = vmatmul.bf16.gmra.mxu0 %v2894
    %v4110 = vpop.f32.mrf.mxu0
    %v4111 = vadd.f32 %v3038, %v4110
    %v4112 = vpop.f32.mrf.mxu0
    %v4113 = vadd.f32 %v3038, %v4112
    %4114 = vmatmul.bf16.gmra.mxu0 %v2898
    %v4115 = vpop.f32.mrf.mxu0
    %v4116 = vadd.f32 %v3038, %v4115
    %v4117 = vpop.f32.mrf.mxu0
    %v4118 = vadd.f32 %v3038, %v4117
    %4119 = vmatmul.bf16.gmra.mxu0 %v2902
    %v4120 = vpop.f32.mrf.mxu0
    %v4121 = vadd.f32 %v3038, %v4120
    %v4122 = vpop.f32.mrf.mxu0
    %v4123 = vadd.f32 %v3038, %v4122
    %4124 = vdwg.mxu0
    %4125 = vmatpush.bf16.msra.mxu0 %v3490
    %4126 = vmatpush.bf16.msra.mxu0 %v3486
    %4127 = vmatpush.bf16.msra.mxu0 %v3482
    %4128 = vmatpush.bf16.msra.mxu0 %v3478
    %4129 = vmatpush.bf16.msra.mxu0 %v3474
    %4130 = vmatpush.bf16.msra.mxu0 %v3470
    %4131 = vmatpush.bf16.msra.mxu0 %v3466
    %4132 = vmatpush.bf16.msra.mxu0 %v3462
    %4133 = vmatmul.bf16.gmra.mxu0 %v2875
    %v4134 = vpop.f32.mrf.mxu0
    %v4135 = vadd.f32 %v4086, %v4134
    %v4136 = vpop.f32.mrf.mxu0
    %v4137 = vadd.f32 %v4088, %v4136
    %4138 = vmatmul.bf16.gmra.mxu0 %v2879
    %v4139 = vpop.f32.mrf.mxu0
    %v4140 = vadd.f32 %v4091, %v4139
    %v4141 = vpop.f32.mrf.mxu0
    %v4142 = vadd.f32 %v4093, %v4141
    %4143 = vmatmul.bf16.gmra.mxu0 %v2883
    %v4144 = vpop.f32.mrf.mxu0
    %v4145 = vadd.f32 %v4096, %v4144
    %v4146 = vpop.f32.mrf.mxu0
    %v4147 = vadd.f32 %v4098, %v4146
    %4148 = vmatmul.bf16.gmra.mxu0 %v2887
    %v4149 = vpop.f32.mrf.mxu0
    %v4150 = vadd.f32 %v4101, %v4149
    %v4151 = vpop.f32.mrf.mxu0
    %v4152 = vadd.f32 %v4103, %v4151
    %4153 = vmatmul.bf16.gmra.mxu0 %v2891
    %v4154 = vpop.f32.mrf.mxu0
    %v4155 = vadd.f32 %v4106, %v4154
    %v4156 = vpop.f32.mrf.mxu0
    %v4157 = vadd.f32 %v4108, %v4156
    %4158 = vmatmul.bf16.gmra.mxu0 %v2895
    %v4159 = vpop.f32.mrf.mxu0
    %v4160 = vadd.f32 %v4111, %v4159
    %v4161 = vpop.f32.mrf.mxu0
    %v4162 = vadd.f32 %v4113, %v4161
    %4163 = vmatmul.bf16.gmra.mxu0 %v2899
    %v4164 = vpop.f32.mrf.mxu0
    %v4165 = vadd.f32 %v4116, %v4164
    %v4166 = vpop.f32.mrf.mxu0
    %v4167 = vadd.f32 %v4118, %v4166
    %4168 = vmatmul.bf16.gmra.mxu0 %v2903
    %v4169 = vpop.f32.mrf.mxu0
    %v4170 = vadd.f32 %v4121, %v4169
    %v4171 = vpop.f32.mrf.mxu0
    %v4172 = vadd.f32 %v4123, %v4171
    %4173 = vdwg.mxu0
    %4174 = vmatpush.bf16.msra.mxu0 %v3522
    %4175 = vmatpush.bf16.msra.mxu0 %v3518
    %4176 = vmatpush.bf16.msra.mxu0 %v3514
    %4177 = vmatpush.bf16.msra.mxu0 %v3510
    %4178 = vmatpush.bf16.msra.mxu0 %v3506
    %4179 = vmatpush.bf16.msra.mxu0 %v3502
    %4180 = vmatpush.bf16.msra.mxu0 %v3498
    %4181 = vmatpush.bf16.msra.mxu0 %v3494
    %4182 = vmatmul.bf16.gmra.mxu0 %v2876
    %v4183 = vpop.f32.mrf.mxu0
    %v4184 = vadd.f32 %v4135, %v4183
    %v4185 = vpop.f32.mrf.mxu0
    %v4186 = vadd.f32 %v4137, %v4185
    %4187 = vmatmul.bf16.gmra.mxu0 %v2880
    %v4188 = vpop.f32.mrf.mxu0
    %v4189 = vadd.f32 %v4140, %v4188
    %v4190 = vpop.f32.mrf.mxu0
    %v4191 = vadd.f32 %v4142, %v4190
    %4192 = vmatmul.bf16.gmra.mxu0 %v2884
    %v4193 = vpop.f32.mrf.mxu0
    %v4194 = vadd.f32 %v4145, %v4193
    %v4195 = vpop.f32.mrf.mxu0
    %v4196 = vadd.f32 %v4147, %v4195
    %4197 = vmatmul.bf16.gmra.mxu0 %v2888
    %v4198 = vpop.f32.mrf.mxu0
    %v4199 = vadd.f32 %v4150, %v4198
    %v4200 = vpop.f32.mrf.mxu0
    %v4201 = vadd.f32 %v4152, %v4200
    %4202 = vmatmul.bf16.gmra.mxu0 %v2892
    %v4203 = vpop.f32.mrf.mxu0
    %v4204 = vadd.f32 %v4155, %v4203
    %v4205 = vpop.f32.mrf.mxu0
    %v4206 = vadd.f32 %v4157, %v4205
    %4207 = vmatmul.bf16.gmra.mxu0 %v2896
    %v4208 = vpop.f32.mrf.mxu0
    %v4209 = vadd.f32 %v4160, %v4208
    %v4210 = vpop.f32.mrf.mxu0
    %v4211 = vadd.f32 %v4162, %v4210
    %4212 = vmatmul.bf16.gmra.mxu0 %v2900
    %v4213 = vpop.f32.mrf.mxu0
    %v4214 = vadd.f32 %v4165, %v4213
    %v4215 = vpop.f32.mrf.mxu0
    %v4216 = vadd.f32 %v4167, %v4215
    %4217 = vmatmul.bf16.gmra.mxu0 %v2904
    %v4218 = vpop.f32.mrf.mxu0
    %v4219 = vadd.f32 %v4170, %v4218
    %v4220 = vpop.f32.mrf.mxu0
    %v4221 = vadd.f32 %v4172, %v4220
    %4222 = vdwg.mxu0
    %4223 = vmatpush.bf16.msra.mxu0 %v3554
    %4224 = vmatpush.bf16.msra.mxu0 %v3550
    %4225 = vmatpush.bf16.msra.mxu0 %v3546
    %4226 = vmatpush.bf16.msra.mxu0 %v3542
    %4227 = vmatpush.bf16.msra.mxu0 %v3538
    %4228 = vmatpush.bf16.msra.mxu0 %v3534
    %4229 = vmatpush.bf16.msra.mxu0 %v3530
    %4230 = vmatpush.bf16.msra.mxu0 %v3526
    %4231 = vmatmul.bf16.gmra.mxu0 %v2877
    %v4232 = vpop.f32.mrf.mxu0
    %v4233 = vadd.f32 %v4184, %v4232
    %v4234 = vpop.f32.mrf.mxu0
    %v4235 = vadd.f32 %v4186, %v4234
    %4236 = vmatmul.bf16.gmra.mxu0 %v2881
    %v4237 = vpop.f32.mrf.mxu0
    %v4238 = vadd.f32 %v4189, %v4237
    %v4239 = vpop.f32.mrf.mxu0
    %v4240 = vadd.f32 %v4191, %v4239
    %4241 = vmatmul.bf16.gmra.mxu0 %v2885
    %v4242 = vpop.f32.mrf.mxu0
    %v4243 = vadd.f32 %v4194, %v4242
    %v4244 = vpop.f32.mrf.mxu0
    %v4245 = vadd.f32 %v4196, %v4244
    %4246 = vmatmul.bf16.gmra.mxu0 %v2889
    %v4247 = vpop.f32.mrf.mxu0
    %v4248 = vadd.f32 %v4199, %v4247
    %v4249 = vpop.f32.mrf.mxu0
    %v4250 = vadd.f32 %v4201, %v4249
    %4251 = vmatmul.bf16.gmra.mxu0 %v2893
    %v4252 = vpop.f32.mrf.mxu0
    %v4253 = vadd.f32 %v4204, %v4252
    %v4254 = vpop.f32.mrf.mxu0
    %v4255 = vadd.f32 %v4206, %v4254
    %4256 = vmatmul.bf16.gmra.mxu0 %v2897
    %v4257 = vpop.f32.mrf.mxu0
    %v4258 = vadd.f32 %v4209, %v4257
    %v4259 = vpop.f32.mrf.mxu0
    %v4260 = vadd.f32 %v4211, %v4259
    %4261 = vmatmul.bf16.gmra.mxu0 %v2901
    %v4262 = vpop.f32.mrf.mxu0
    %v4263 = vadd.f32 %v4214, %v4262
    %v4264 = vpop.f32.mrf.mxu0
    %v4265 = vadd.f32 %v4216, %v4264
    %4266 = vmatmul.bf16.gmra.mxu0 %v2905
    %v4267 = vpop.f32.mrf.mxu0
    %v4268 = vadd.f32 %v4219, %v4267
    %v4269 = vpop.f32.mrf.mxu0
    %v4270 = vadd.f32 %v4221, %v4269
    %4271 = vdwg.mxu0
    %4272 = vmatpush.bf16.msra.mxu0 %v3459
    %4273 = vmatpush.bf16.msra.mxu0 %v3455
    %4274 = vmatpush.bf16.msra.mxu0 %v3451
    %4275 = vmatpush.bf16.msra.mxu0 %v3447
    %4276 = vmatpush.bf16.msra.mxu0 %v3443
    %4277 = vmatpush.bf16.msra.mxu0 %v3439
    %4278 = vmatpush.bf16.msra.mxu0 %v3435
    %4279 = vmatpush.bf16.msra.mxu0 %v3431
    %4280 = vmatmul.bf16.gmra.mxu0 %v2874
    %v4281 = vpop.f32.mrf.mxu0
    %v4282 = vadd.f32 %v3039, %v4281
    %v4283 = vpop.f32.mrf.mxu0
    %v4284 = vadd.f32 %v3039, %v4283
    %4285 = vmatmul.bf16.gmra.mxu0 %v2878
    %v4286 = vpop.f32.mrf.mxu0
    %v4287 = vadd.f32 %v3039, %v4286
    %v4288 = vpop.f32.mrf.mxu0
    %v4289 = vadd.f32 %v3039, %v4288
    %4290 = vmatmul.bf16.gmra.mxu0 %v2882
    %v4291 = vpop.f32.mrf.mxu0
    %v4292 = vadd.f32 %v3039, %v4291
    %v4293 = vpop.f32.mrf.mxu0
    %v4294 = vadd.f32 %v3039, %v4293
    %4295 = vmatmul.bf16.gmra.mxu0 %v2886
    %v4296 = vpop.f32.mrf.mxu0
    %v4297 = vadd.f32 %v3039, %v4296
    %v4298 = vpop.f32.mrf.mxu0
    %v4299 = vadd.f32 %v3039, %v4298
    %4300 = vmatmul.bf16.gmra.mxu0 %v2890
    %v4301 = vpop.f32.mrf.mxu0
    %v4302 = vadd.f32 %v3039, %v4301
    %v4303 = vpop.f32.mrf.mxu0
    %v4304 = vadd.f32 %v3039, %v4303
    %4305 = vmatmul.bf16.gmra.mxu0 %v2894
    %v4306 = vpop.f32.mrf.mxu0
    %v4307 = vadd.f32 %v3039, %v4306
    %v4308 = vpop.f32.mrf.mxu0
    %v4309 = vadd.f32 %v3039, %v4308
    %4310 = vmatmul.bf16.gmra.mxu0 %v2898
    %v4311 = vpop.f32.mrf.mxu0
    %v4312 = vadd.f32 %v3039, %v4311
    %v4313 = vpop.f32.mrf.mxu0
    %v4314 = vadd.f32 %v3039, %v4313
    %4315 = vmatmul.bf16.gmra.mxu0 %v2902
    %v4316 = vpop.f32.mrf.mxu0
    %v4317 = vadd.f32 %v3039, %v4316
    %v4318 = vpop.f32.mrf.mxu0
    %v4319 = vadd.f32 %v3039, %v4318
    %4320 = vdwg.mxu0
    %4321 = vmatpush.bf16.msra.mxu0 %v3491
    %4322 = vmatpush.bf16.msra.mxu0 %v3487
    %4323 = vmatpush.bf16.msra.mxu0 %v3483
    %4324 = vmatpush.bf16.msra.mxu0 %v3479
    %4325 = vmatpush.bf16.msra.mxu0 %v3475
    %4326 = vmatpush.bf16.msra.mxu0 %v3471
    %4327 = vmatpush.bf16.msra.mxu0 %v3467
    %4328 = vmatpush.bf16.msra.mxu0 %v3463
    %4329 = vmatmul.bf16.gmra.mxu0 %v2875
    %v4330 = vpop.f32.mrf.mxu0
    %v4331 = vadd.f32 %v4282, %v4330
    %v4332 = vpop.f32.mrf.mxu0
    %v4333 = vadd.f32 %v4284, %v4332
    %4334 = vmatmul.bf16.gmra.mxu0 %v2879
    %v4335 = vpop.f32.mrf.mxu0
    %v4336 = vadd.f32 %v4287, %v4335
    %v4337 = vpop.f32.mrf.mxu0
    %v4338 = vadd.f32 %v4289, %v4337
    %4339 = vmatmul.bf16.gmra.mxu0 %v2883
    %v4340 = vpop.f32.mrf.mxu0
    %v4341 = vadd.f32 %v4292, %v4340
    %v4342 = vpop.f32.mrf.mxu0
    %v4343 = vadd.f32 %v4294, %v4342
    %4344 = vmatmul.bf16.gmra.mxu0 %v2887
    %v4345 = vpop.f32.mrf.mxu0
    %v4346 = vadd.f32 %v4297, %v4345
    %v4347 = vpop.f32.mrf.mxu0
    %v4348 = vadd.f32 %v4299, %v4347
    %4349 = vmatmul.bf16.gmra.mxu0 %v2891
    %v4350 = vpop.f32.mrf.mxu0
    %v4351 = vadd.f32 %v4302, %v4350
    %v4352 = vpop.f32.mrf.mxu0
    %v4353 = vadd.f32 %v4304, %v4352
    %4354 = vmatmul.bf16.gmra.mxu0 %v2895
    %v4355 = vpop.f32.mrf.mxu0
    %v4356 = vadd.f32 %v4307, %v4355
    %v4357 = vpop.f32.mrf.mxu0
    %v4358 = vadd.f32 %v4309, %v4357
    %4359 = vmatmul.bf16.gmra.mxu0 %v2899
    %v4360 = vpop.f32.mrf.mxu0
    %v4361 = vadd.f32 %v4312, %v4360
    %v4362 = vpop.f32.mrf.mxu0
    %v4363 = vadd.f32 %v4314, %v4362
    %4364 = vmatmul.bf16.gmra.mxu0 %v2903
    %v4365 = vpop.f32.mrf.mxu0
    %v4366 = vadd.f32 %v4317, %v4365
    %v4367 = vpop.f32.mrf.mxu0
    %v4368 = vadd.f32 %v4319, %v4367
    %4369 = vdwg.mxu0
    %4370 = vmatpush.bf16.msra.mxu0 %v3523
    %4371 = vmatpush.bf16.msra.mxu0 %v3519
    %4372 = vmatpush.bf16.msra.mxu0 %v3515
    %4373 = vmatpush.bf16.msra.mxu0 %v3511
    %4374 = vmatpush.bf16.msra.mxu0 %v3507
    %4375 = vmatpush.bf16.msra.mxu0 %v3503
    %4376 = vmatpush.bf16.msra.mxu0 %v3499
    %4377 = vmatpush.bf16.msra.mxu0 %v3495
    %4378 = vmatmul.bf16.gmra.mxu0 %v2876
    %v4379 = vpop.f32.mrf.mxu0
    %v4380 = vadd.f32 %v4331, %v4379
    %v4381 = vpop.f32.mrf.mxu0
    %v4382 = vadd.f32 %v4333, %v4381
    %4383 = vmatmul.bf16.gmra.mxu0 %v2880
    %v4384 = vpop.f32.mrf.mxu0
    %v4385 = vadd.f32 %v4336, %v4384
    %v4386 = vpop.f32.mrf.mxu0
    %v4387 = vadd.f32 %v4338, %v4386
    %4388 = vmatmul.bf16.gmra.mxu0 %v2884
    %v4389 = vpop.f32.mrf.mxu0
    %v4390 = vadd.f32 %v4341, %v4389
    %v4391 = vpop.f32.mrf.mxu0
    %v4392 = vadd.f32 %v4343, %v4391
    %4393 = vmatmul.bf16.gmra.mxu0 %v2888
    %v4394 = vpop.f32.mrf.mxu0
    %v4395 = vadd.f32 %v4346, %v4394
    %v4396 = vpop.f32.mrf.mxu0
    %v4397 = vadd.f32 %v4348, %v4396
    %4398 = vmatmul.bf16.gmra.mxu0 %v2892
    %v4399 = vpop.f32.mrf.mxu0
    %v4400 = vadd.f32 %v4351, %v4399
    %v4401 = vpop.f32.mrf.mxu0
    %v4402 = vadd.f32 %v4353, %v4401
    %4403 = vmatmul.bf16.gmra.mxu0 %v2896
    %v4404 = vpop.f32.mrf.mxu0
    %v4405 = vadd.f32 %v4356, %v4404
    %v4406 = vpop.f32.mrf.mxu0
    %v4407 = vadd.f32 %v4358, %v4406
    %4408 = vmatmul.bf16.gmra.mxu0 %v2900
    %v4409 = vpop.f32.mrf.mxu0
    %v4410 = vadd.f32 %v4361, %v4409
    %v4411 = vpop.f32.mrf.mxu0
    %v4412 = vadd.f32 %v4363, %v4411
    %4413 = vmatmul.bf16.gmra.mxu0 %v2904
    %v4414 = vpop.f32.mrf.mxu0
    %v4415 = vadd.f32 %v4366, %v4414
    %v4416 = vpop.f32.mrf.mxu0
    %v4417 = vadd.f32 %v4368, %v4416
    %4418 = vdwg.mxu0
    %4419 = vmatpush.bf16.msra.mxu0 %v3555
    %4420 = vmatpush.bf16.msra.mxu0 %v3551
    %4421 = vmatpush.bf16.msra.mxu0 %v3547
    %4422 = vmatpush.bf16.msra.mxu0 %v3543
    %4423 = vmatpush.bf16.msra.mxu0 %v3539
    %4424 = vmatpush.bf16.msra.mxu0 %v3535
    %4425 = vmatpush.bf16.msra.mxu0 %v3531
    %4426 = vmatpush.bf16.msra.mxu0 %v3527
    %4427 = vmatmul.bf16.gmra.mxu0 %v2877
    %v4428 = vpop.f32.mrf.mxu0
    %v4429 = vadd.f32 %v4380, %v4428
    %v4430 = vpop.f32.mrf.mxu0
    %v4431 = vadd.f32 %v4382, %v4430
    %4432 = vmatmul.bf16.gmra.mxu0 %v2881
    %v4433 = vpop.f32.mrf.mxu0
    %v4434 = vadd.f32 %v4385, %v4433
    %v4435 = vpop.f32.mrf.mxu0
    %v4436 = vadd.f32 %v4387, %v4435
    %4437 = vmatmul.bf16.gmra.mxu0 %v2885
    %v4438 = vpop.f32.mrf.mxu0
    %v4439 = vadd.f32 %v4390, %v4438
    %v4440 = vpop.f32.mrf.mxu0
    %v4441 = vadd.f32 %v4392, %v4440
    %4442 = vmatmul.bf16.gmra.mxu0 %v2889
    %v4443 = vpop.f32.mrf.mxu0
    %v4444 = vadd.f32 %v4395, %v4443
    %v4445 = vpop.f32.mrf.mxu0
    %v4446 = vadd.f32 %v4397, %v4445
    %4447 = vmatmul.bf16.gmra.mxu0 %v2893
    %v4448 = vpop.f32.mrf.mxu0
    %v4449 = vadd.f32 %v4400, %v4448
    %v4450 = vpop.f32.mrf.mxu0
    %v4451 = vadd.f32 %v4402, %v4450
    %4452 = vmatmul.bf16.gmra.mxu0 %v2897
    %v4453 = vpop.f32.mrf.mxu0
    %v4454 = vadd.f32 %v4405, %v4453
    %v4455 = vpop.f32.mrf.mxu0
    %v4456 = vadd.f32 %v4407, %v4455
    %4457 = vmatmul.bf16.gmra.mxu0 %v2901
    %v4458 = vpop.f32.mrf.mxu0
    %v4459 = vadd.f32 %v4410, %v4458
    %v4460 = vpop.f32.mrf.mxu0
    %v4461 = vadd.f32 %v4412, %v4460
    %4462 = vmatmul.bf16.gmra.mxu0 %v2905
    %v4463 = vpop.f32.mrf.mxu0
    %v4464 = vadd.f32 %v4415, %v4463
    %v4465 = vpop.f32.mrf.mxu0
    %v4466 = vadd.f32 %v4417, %v4465
    %4467 = vdwg.mxu0
    %v4468 = vmax.f32 %v3841, 0.0
    %v4469 = vmax.f32 %v4037, 0.0
    %v4470 = vmax.f32 %v4233, 0.0
    %v4471 = vmax.f32 %v4429, 0.0
    %v4472 = vmax.f32 %v3843, 0.0
    %v4473 = vmax.f32 %v4039, 0.0
    %v4474 = vmax.f32 %v4235, 0.0
    %v4475 = vmax.f32 %v4431, 0.0
    %v4476 = vmax.f32 %v3846, 0.0
    %v4477 = vmax.f32 %v4042, 0.0
    %v4478 = vmax.f32 %v4238, 0.0
    %v4479 = vmax.f32 %v4434, 0.0
    %v4480 = vmax.f32 %v3848, 0.0
    %v4481 = vmax.f32 %v4044, 0.0
    %v4482 = vmax.f32 %v4240, 0.0
    %v4483 = vmax.f32 %v4436, 0.0
    %v4484 = vmax.f32 %v3851, 0.0
    %v4485 = vmax.f32 %v4047, 0.0
    %v4486 = vmax.f32 %v4243, 0.0
    %v4487 = vmax.f32 %v4439, 0.0
    %v4488 = vmax.f32 %v3853, 0.0
    %v4489 = vmax.f32 %v4049, 0.0
    %v4490 = vmax.f32 %v4245, 0.0
    %v4491 = vmax.f32 %v4441, 0.0
    %v4492 = vmax.f32 %v3856, 0.0
    %v4493 = vmax.f32 %v4052, 0.0
    %v4494 = vmax.f32 %v4248, 0.0
    %v4495 = vmax.f32 %v4444, 0.0
    %v4496 = vmax.f32 %v3858, 0.0
    %v4497 = vmax.f32 %v4054, 0.0
    %v4498 = vmax.f32 %v4250, 0.0
    %v4499 = vmax.f32 %v4446, 0.0
    %v4500 = vmax.f32 %v3861, 0.0
    %v4501 = vmax.f32 %v4057, 0.0
    %v4502 = vmax.f32 %v4253, 0.0
    %v4503 = vmax.f32 %v4449, 0.0
    %v4504 = vmax.f32 %v3863, 0.0
    %v4505 = vmax.f32 %v4059, 0.0
    %v4506 = vmax.f32 %v4255, 0.0
    %v4507 = vmax.f32 %v4451, 0.0
    %v4508 = vmax.f32 %v3866, 0.0
    %v4509 = vmax.f32 %v4062, 0.0
    %v4510 = vmax.f32 %v4258, 0.0
    %v4511 = vmax.f32 %v4454, 0.0
    %v4512 = vmax.f32 %v3868, 0.0
    %v4513 = vmax.f32 %v4064, 0.0
    %v4514 = vmax.f32 %v4260, 0.0
    %v4515 = vmax.f32 %v4456, 0.0
    %v4516 = vmax.f32 %v3871, 0.0
    %v4517 = vmax.f32 %v4067, 0.0
    %v4518 = vmax.f32 %v4263, 0.0
    %v4519 = vmax.f32 %v4459, 0.0
    %v4520 = vmax.f32 %v3873, 0.0
    %v4521 = vmax.f32 %v4069, 0.0
    %v4522 = vmax.f32 %v4265, 0.0
    %v4523 = vmax.f32 %v4461, 0.0
    %v4524 = vmax.f32 %v3876, 0.0
    %v4525 = vmax.f32 %v4072, 0.0
    %v4526 = vmax.f32 %v4268, 0.0
    %v4527 = vmax.f32 %v4464, 0.0
    %v4528 = vmax.f32 %v3878, 0.0
    %v4529 = vmax.f32 %v4074, 0.0
    %v4530 = vmax.f32 %v4270, 0.0
    %v4531 = vmax.f32 %v4466, 0.0
    %v4532 = vpack.c.bf16 %v4472, %v4468
    %v4533 = vpack.c.bf16 %v4473, %v4469
    %v4534 = vpack.c.bf16 %v4474, %v4470
    %v4535 = vpack.c.bf16 %v4475, %v4471
    %v4536 = vpack.c.bf16 %v4480, %v4476
    %v4537 = vpack.c.bf16 %v4481, %v4477
    %v4538 = vpack.c.bf16 %v4482, %v4478
    %v4539 = vpack.c.bf16 %v4483, %v4479
    %v4540 = vpack.c.bf16 %v4488, %v4484
    %v4541 = vpack.c.bf16 %v4489, %v4485
    %v4542 = vpack.c.bf16 %v4490, %v4486
    %v4543 = vpack.c.bf16 %v4491, %v4487
    %v4544 = vpack.c.bf16 %v4496, %v4492
    %v4545 = vpack.c.bf16 %v4497, %v4493
    %v4546 = vpack.c.bf16 %v4498, %v4494
    %v4547 = vpack.c.bf16 %v4499, %v4495
    %v4548 = vpack.c.bf16 %v4504, %v4500
    %v4549 = vpack.c.bf16 %v4505, %v4501
    %v4550 = vpack.c.bf16 %v4506, %v4502
    %v4551 = vpack.c.bf16 %v4507, %v4503
    %v4552 = vpack.c.bf16 %v4512, %v4508
    %v4553 = vpack.c.bf16 %v4513, %v4509
    %v4554 = vpack.c.bf16 %v4514, %v4510
    %v4555 = vpack.c.bf16 %v4515, %v4511
    %v4556 = vpack.c.bf16 %v4520, %v4516
    %v4557 = vpack.c.bf16 %v4521, %v4517
    %v4558 = vpack.c.bf16 %v4522, %v4518
    %v4559 = vpack.c.bf16 %v4523, %v4519
    %v4560 = vpack.c.bf16 %v4528, %v4524
    %v4561 = vpack.c.bf16 %v4529, %v4525
    %v4562 = vpack.c.bf16 %v4530, %v4526
    %v4563 = vpack.c.bf16 %v4531, %v4527
    %v4564 = vld [vmem:[#allocation4] sm:$0xf]
    %v4565 = vld [vmem:[#allocation4 + $0x4] sm:$0xf]
    %v4566 = vld [vmem:[#allocation4 + $0x8] sm:$0xf]
    %v4567 = vld [vmem:[#allocation4 + $0xc] sm:$0xf]
    %v4568 = vld [vmem:[#allocation4 + $0x10] sm:$0xf]
    %v4569 = vld [vmem:[#allocation4 + $0x14] sm:$0xf]
    %v4570 = vld [vmem:[#allocation4 + $0x18] sm:$0xf]
    %v4571 = vld [vmem:[#allocation4 + $0x1c] sm:$0xf]
    %v4572 = vld [vmem:[#allocation4 + $0x20] sm:$0xf]
    %v4573 = vld [vmem:[#allocation4 + $0x24] sm:$0xf]
    %v4574 = vld [vmem:[#allocation4 + $0x28] sm:$0xf]
    %v4575 = vld [vmem:[#allocation4 + $0x2c] sm:$0xf]
    %v4576 = vld [vmem:[#allocation4 + $0x30] sm:$0xf]
    %v4577 = vld [vmem:[#allocation4 + $0x34] sm:$0xf]
    %v4578 = vld [vmem:[#allocation4 + $0x38] sm:$0xf]
    %v4579 = vld [vmem:[#allocation4 + $0x3c] sm:$0xf]
    %v4580 = vld [vmem:[#allocation4 + $0x40] sm:$0xf]
    %v4581 = vld [vmem:[#allocation4 + $0x44] sm:$0xf]
    %v4582 = vld [vmem:[#allocation4 + $0x48] sm:$0xf]
    %v4583 = vld [vmem:[#allocation4 + $0x4c] sm:$0xf]
    %v4584 = vld [vmem:[#allocation4 + $0x50] sm:$0xf]
    %v4585 = vld [vmem:[#allocation4 + $0x54] sm:$0xf]
    %v4586 = vld [vmem:[#allocation4 + $0x58] sm:$0xf]
    %v4587 = vld [vmem:[#allocation4 + $0x5c] sm:$0xf]
    %v4588 = vld [vmem:[#allocation4 + $0x60] sm:$0xf]
    %v4589 = vld [vmem:[#allocation4 + $0x64] sm:$0xf]
    %v4590 = vld [vmem:[#allocation4 + $0x68] sm:$0xf]
    %v4591 = vld [vmem:[#allocation4 + $0x6c] sm:$0xf]
    %v4592 = vld [vmem:[#allocation4 + $0x70] sm:$0xf]
    %v4593 = vld [vmem:[#allocation4 + $0x74] sm:$0xf]
    %v4594 = vld [vmem:[#allocation4 + $0x78] sm:$0xf]
    %v4595 = vld [vmem:[#allocation4 + $0x7c] sm:$0xf]
    %v4596 = vld [vmem:[#allocation4 + $0x80] sm:$0xf]
    %v4597 = vld [vmem:[#allocation4 + $0x84] sm:$0xf]
    %v4598 = vld [vmem:[#allocation4 + $0x88] sm:$0xf]
    %v4599 = vld [vmem:[#allocation4 + $0x8c] sm:$0xf]
    %v4600 = vld [vmem:[#allocation4 + $0x90] sm:$0xf]
    %v4601 = vld [vmem:[#allocation4 + $0x94] sm:$0xf]
    %v4602 = vld [vmem:[#allocation4 + $0x98] sm:$0xf]
    %v4603 = vld [vmem:[#allocation4 + $0x9c] sm:$0xf]
    %v4604 = vld [vmem:[#allocation4 + $0xa0] sm:$0xf]
    %v4605 = vld [vmem:[#allocation4 + $0xa4] sm:$0xf]
    %v4606 = vld [vmem:[#allocation4 + $0xa8] sm:$0xf]
    %v4607 = vld [vmem:[#allocation4 + $0xac] sm:$0xf]
    %v4608 = vld [vmem:[#allocation4 + $0xb0] sm:$0xf]
    %v4609 = vld [vmem:[#allocation4 + $0xb4] sm:$0xf]
    %v4610 = vld [vmem:[#allocation4 + $0xb8] sm:$0xf]
    %v4611 = vld [vmem:[#allocation4 + $0xbc] sm:$0xf]
    %v4612 = vld [vmem:[#allocation4 + $0xc0] sm:$0xf]
    %v4613 = vld [vmem:[#allocation4 + $0xc4] sm:$0xf]
    %v4614 = vld [vmem:[#allocation4 + $0xc8] sm:$0xf]
    %v4615 = vld [vmem:[#allocation4 + $0xcc] sm:$0xf]
    %v4616 = vld [vmem:[#allocation4 + $0xd0] sm:$0xf]
    %v4617 = vld [vmem:[#allocation4 + $0xd4] sm:$0xf]
    %v4618 = vld [vmem:[#allocation4 + $0xd8] sm:$0xf]
    %v4619 = vld [vmem:[#allocation4 + $0xdc] sm:$0xf]
    %v4620 = vld [vmem:[#allocation4 + $0xe0] sm:$0xf]
    %v4621 = vld [vmem:[#allocation4 + $0xe4] sm:$0xf]
    %v4622 = vld [vmem:[#allocation4 + $0xe8] sm:$0xf]
    %v4623 = vld [vmem:[#allocation4 + $0xec] sm:$0xf]
    %v4624 = vld [vmem:[#allocation4 + $0xf0] sm:$0xf]
    %v4625 = vld [vmem:[#allocation4 + $0xf4] sm:$0xf]
    %v4626 = vld [vmem:[#allocation4 + $0xf8] sm:$0xf]
    %v4627 = vld [vmem:[#allocation4 + $0xfc] sm:$0xf]
    %v4628 = vld [vmem:[%s6] sm:$0x1]
    %v4630 = vperm.slane %v4628, 0
    %v4696 = vunpack.c.l.b16 %v4564
    %v4697 = vunpack.c.l.b16 %v4565
    %v4698 = vunpack.c.l.b16 %v4566
    %v4699 = vunpack.c.l.b16 %v4567
    %v4700 = vunpack.c.l.b16 %v4568
    %v4701 = vunpack.c.l.b16 %v4569
    %v4702 = vunpack.c.l.b16 %v4570
    %v4703 = vunpack.c.l.b16 %v4571
    %v4704 = vunpack.c.l.b16 %v4572
    %v4705 = vunpack.c.l.b16 %v4573
    %v4706 = vunpack.c.l.b16 %v4574
    %v4707 = vunpack.c.l.b16 %v4575
    %v4708 = vunpack.c.l.b16 %v4576
    %v4709 = vunpack.c.l.b16 %v4577
    %v4710 = vunpack.c.l.b16 %v4578
    %v4711 = vunpack.c.l.b16 %v4579
    %v4712 = vunpack.c.l.b16 %v4580
    %v4713 = vunpack.c.l.b16 %v4581
    %v4714 = vunpack.c.l.b16 %v4582
    %v4715 = vunpack.c.l.b16 %v4583
    %v4716 = vunpack.c.l.b16 %v4584
    %v4717 = vunpack.c.l.b16 %v4585
    %v4718 = vunpack.c.l.b16 %v4586
    %v4719 = vunpack.c.l.b16 %v4587
    %v4720 = vunpack.c.l.b16 %v4588
    %v4721 = vunpack.c.l.b16 %v4589
    %v4722 = vunpack.c.l.b16 %v4590
    %v4723 = vunpack.c.l.b16 %v4591
    %v4724 = vunpack.c.l.b16 %v4592
    %v4725 = vunpack.c.l.b16 %v4593
    %v4726 = vunpack.c.l.b16 %v4594
    %v4727 = vunpack.c.l.b16 %v4595
    %v4728 = vunpack.c.l.b16 %v4596
    %v4729 = vunpack.c.l.b16 %v4597
    %v4730 = vunpack.c.l.b16 %v4598
    %v4731 = vunpack.c.l.b16 %v4599
    %v4732 = vunpack.c.l.b16 %v4600
    %v4733 = vunpack.c.l.b16 %v4601
    %v4734 = vunpack.c.l.b16 %v4602
    %v4735 = vunpack.c.l.b16 %v4603
    %v4736 = vunpack.c.l.b16 %v4604
    %v4737 = vunpack.c.l.b16 %v4605
    %v4738 = vunpack.c.l.b16 %v4606
    %v4739 = vunpack.c.l.b16 %v4607
    %v4740 = vunpack.c.l.b16 %v4608
    %v4741 = vunpack.c.l.b16 %v4609
    %v4742 = vunpack.c.l.b16 %v4610
    %v4743 = vunpack.c.l.b16 %v4611
    %v4744 = vunpack.c.l.b16 %v4612
    %v4745 = vunpack.c.l.b16 %v4613
    %v4746 = vunpack.c.l.b16 %v4614
    %v4747 = vunpack.c.l.b16 %v4615
    %v4748 = vunpack.c.l.b16 %v4616
    %v4749 = vunpack.c.l.b16 %v4617
    %v4750 = vunpack.c.l.b16 %v4618
    %v4751 = vunpack.c.l.b16 %v4619
    %v4752 = vunpack.c.l.b16 %v4620
    %v4753 = vunpack.c.l.b16 %v4621
    %v4754 = vunpack.c.l.b16 %v4622
    %v4755 = vunpack.c.l.b16 %v4623
    %v4756 = vunpack.c.l.b16 %v4624
    %v4757 = vunpack.c.l.b16 %v4625
    %v4758 = vunpack.c.l.b16 %v4626
    %v4759 = vunpack.c.l.b16 %v4627
    %v4760 = vpack.c.b16 %v4697, %v4696
    %v4761 = vpack.c.b16 %v4699, %v4698
    %v4762 = vpack.c.b16 %v4701, %v4700
    %v4763 = vpack.c.b16 %v4703, %v4702
    %v4764 = vpack.c.b16 %v4705, %v4704
    %v4765 = vpack.c.b16 %v4707, %v4706
    %v4766 = vpack.c.b16 %v4709, %v4708
    %v4767 = vpack.c.b16 %v4711, %v4710
    %v4768 = vpack.c.b16 %v4713, %v4712
    %v4769 = vpack.c.b16 %v4715, %v4714
    %v4770 = vpack.c.b16 %v4717, %v4716
    %v4771 = vpack.c.b16 %v4719, %v4718
    %v4772 = vpack.c.b16 %v4721, %v4720
    %v4773 = vpack.c.b16 %v4723, %v4722
    %v4774 = vpack.c.b16 %v4725, %v4724
    %v4775 = vpack.c.b16 %v4727, %v4726
    %v4776 = vpack.c.b16 %v4729, %v4728
    %v4777 = vpack.c.b16 %v4731, %v4730
    %v4778 = vpack.c.b16 %v4733, %v4732
    %v4779 = vpack.c.b16 %v4735, %v4734
    %v4780 = vpack.c.b16 %v4737, %v4736
    %v4781 = vpack.c.b16 %v4739, %v4738
    %v4782 = vpack.c.b16 %v4741, %v4740
    %v4783 = vpack.c.b16 %v4743, %v4742
    %v4784 = vpack.c.b16 %v4745, %v4744
    %v4785 = vpack.c.b16 %v4747, %v4746
    %v4786 = vpack.c.b16 %v4749, %v4748
    %v4787 = vpack.c.b16 %v4751, %v4750
    %v4788 = vpack.c.b16 %v4753, %v4752
    %v4789 = vpack.c.b16 %v4755, %v4754
    %v4790 = vpack.c.b16 %v4757, %v4756
    %v4791 = vpack.c.b16 %v4759, %v4758
    %4824 = vmatpush.bf16.msra.mxu0 %v4767
    %4825 = vmatpush.bf16.msra.mxu0 %v4766
    %4826 = vmatpush.bf16.msra.mxu0 %v4765
    %4827 = vmatpush.bf16.msra.mxu0 %v4764
    %4828 = vmatpush.bf16.msra.mxu0 %v4763
    %4829 = vmatpush.bf16.msra.mxu0 %v4762
    %4830 = vmatpush.bf16.msra.mxu0 %v4761
    %4831 = vmatpush.bf16.msra.mxu0 %v4760
    %4832 = vmatmul.bf16.gmra.mxu0 %v4532
    %v4833 = vpop.f32.mrf.mxu0
    %v4834 = vadd.f32 %v4630, %v4833
    %v4835 = vpop.f32.mrf.mxu0
    %v4836 = vadd.f32 %v4630, %v4835
    %4837 = vmatmul.bf16.gmra.mxu0 %v4536
    %v4838 = vpop.f32.mrf.mxu0
    %v4839 = vadd.f32 %v4630, %v4838
    %v4840 = vpop.f32.mrf.mxu0
    %v4841 = vadd.f32 %v4630, %v4840
    %4842 = vmatmul.bf16.gmra.mxu0 %v4540
    %v4843 = vpop.f32.mrf.mxu0
    %v4844 = vadd.f32 %v4630, %v4843
    %v4845 = vpop.f32.mrf.mxu0
    %v4846 = vadd.f32 %v4630, %v4845
    %4847 = vmatmul.bf16.gmra.mxu0 %v4544
    %v4848 = vpop.f32.mrf.mxu0
    %v4849 = vadd.f32 %v4630, %v4848
    %v4850 = vpop.f32.mrf.mxu0
    %v4851 = vadd.f32 %v4630, %v4850
    %4852 = vmatmul.bf16.gmra.mxu0 %v4548
    %v4853 = vpop.f32.mrf.mxu0
    %v4854 = vadd.f32 %v4630, %v4853
    %v4855 = vpop.f32.mrf.mxu0
    %v4856 = vadd.f32 %v4630, %v4855
    %4857 = vmatmul.bf16.gmra.mxu0 %v4552
    %v4858 = vpop.f32.mrf.mxu0
    %v4859 = vadd.f32 %v4630, %v4858
    %v4860 = vpop.f32.mrf.mxu0
    %v4861 = vadd.f32 %v4630, %v4860
    %4862 = vmatmul.bf16.gmra.mxu0 %v4556
    %v4863 = vpop.f32.mrf.mxu0
    %v4864 = vadd.f32 %v4630, %v4863
    %v4865 = vpop.f32.mrf.mxu0
    %v4866 = vadd.f32 %v4630, %v4865
    %4867 = vmatmul.bf16.gmra.mxu0 %v4560
    %v4868 = vpop.f32.mrf.mxu0
    %v4869 = vadd.f32 %v4630, %v4868
    %v4870 = vpop.f32.mrf.mxu0
    %v4871 = vadd.f32 %v4630, %v4870
    %4872 = vdwg.mxu0
    %4873 = vmatpush.bf16.msra.mxu0 %v4775
    %4874 = vmatpush.bf16.msra.mxu0 %v4774
    %4875 = vmatpush.bf16.msra.mxu0 %v4773
    %4876 = vmatpush.bf16.msra.mxu0 %v4772
    %4877 = vmatpush.bf16.msra.mxu0 %v4771
    %4878 = vmatpush.bf16.msra.mxu0 %v4770
    %4879 = vmatpush.bf16.msra.mxu0 %v4769
    %4880 = vmatpush.bf16.msra.mxu0 %v4768
    %4881 = vmatmul.bf16.gmra.mxu0 %v4533
    %v4882 = vpop.f32.mrf.mxu0
    %v4883 = vadd.f32 %v4834, %v4882
    %v4884 = vpop.f32.mrf.mxu0
    %v4885 = vadd.f32 %v4836, %v4884
    %4886 = vmatmul.bf16.gmra.mxu0 %v4537
    %v4887 = vpop.f32.mrf.mxu0
    %v4888 = vadd.f32 %v4839, %v4887
    %v4889 = vpop.f32.mrf.mxu0
    %v4890 = vadd.f32 %v4841, %v4889
    %4891 = vmatmul.bf16.gmra.mxu0 %v4541
    %v4892 = vpop.f32.mrf.mxu0
    %v4893 = vadd.f32 %v4844, %v4892
    %v4894 = vpop.f32.mrf.mxu0
    %v4895 = vadd.f32 %v4846, %v4894
    %4896 = vmatmul.bf16.gmra.mxu0 %v4545
    %v4897 = vpop.f32.mrf.mxu0
    %v4898 = vadd.f32 %v4849, %v4897
    %v4899 = vpop.f32.mrf.mxu0
    %v4900 = vadd.f32 %v4851, %v4899
    %4901 = vmatmul.bf16.gmra.mxu0 %v4549
    %v4902 = vpop.f32.mrf.mxu0
    %v4903 = vadd.f32 %v4854, %v4902
    %v4904 = vpop.f32.mrf.mxu0
    %v4905 = vadd.f32 %v4856, %v4904
    %4906 = vmatmul.bf16.gmra.mxu0 %v4553
    %v4907 = vpop.f32.mrf.mxu0
    %v4908 = vadd.f32 %v4859, %v4907
    %v4909 = vpop.f32.mrf.mxu0
    %v4910 = vadd.f32 %v4861, %v4909
    %4911 = vmatmul.bf16.gmra.mxu0 %v4557
    %v4912 = vpop.f32.mrf.mxu0
    %v4913 = vadd.f32 %v4864, %v4912
    %v4914 = vpop.f32.mrf.mxu0
    %v4915 = vadd.f32 %v4866, %v4914
    %4916 = vmatmul.bf16.gmra.mxu0 %v4561
    %v4917 = vpop.f32.mrf.mxu0
    %v4918 = vadd.f32 %v4869, %v4917
    %v4919 = vpop.f32.mrf.mxu0
    %v4920 = vadd.f32 %v4871, %v4919
    %4921 = vdwg.mxu0
    %4922 = vmatpush.bf16.msra.mxu0 %v4783
    %4923 = vmatpush.bf16.msra.mxu0 %v4782
    %4924 = vmatpush.bf16.msra.mxu0 %v4781
    %4925 = vmatpush.bf16.msra.mxu0 %v4780
    %4926 = vmatpush.bf16.msra.mxu0 %v4779
    %4927 = vmatpush.bf16.msra.mxu0 %v4778
    %4928 = vmatpush.bf16.msra.mxu0 %v4777
    %4929 = vmatpush.bf16.msra.mxu0 %v4776
    %4930 = vmatmul.bf16.gmra.mxu0 %v4534
    %v4931 = vpop.f32.mrf.mxu0
    %v4932 = vadd.f32 %v4883, %v4931
    %v4933 = vpop.f32.mrf.mxu0
    %v4934 = vadd.f32 %v4885, %v4933
    %4935 = vmatmul.bf16.gmra.mxu0 %v4538
    %v4936 = vpop.f32.mrf.mxu0
    %v4937 = vadd.f32 %v4888, %v4936
    %v4938 = vpop.f32.mrf.mxu0
    %v4939 = vadd.f32 %v4890, %v4938
    %4940 = vmatmul.bf16.gmra.mxu0 %v4542
    %v4941 = vpop.f32.mrf.mxu0
    %v4942 = vadd.f32 %v4893, %v4941
    %v4943 = vpop.f32.mrf.mxu0
    %v4944 = vadd.f32 %v4895, %v4943
    %4945 = vmatmul.bf16.gmra.mxu0 %v4546
    %v4946 = vpop.f32.mrf.mxu0
    %v4947 = vadd.f32 %v4898, %v4946
    %v4948 = vpop.f32.mrf.mxu0
    %v4949 = vadd.f32 %v4900, %v4948
    %4950 = vmatmul.bf16.gmra.mxu0 %v4550
    %v4951 = vpop.f32.mrf.mxu0
    %v4952 = vadd.f32 %v4903, %v4951
    %v4953 = vpop.f32.mrf.mxu0
    %v4954 = vadd.f32 %v4905, %v4953
    %4955 = vmatmul.bf16.gmra.mxu0 %v4554
    %v4956 = vpop.f32.mrf.mxu0
    %v4957 = vadd.f32 %v4908, %v4956
    %v4958 = vpop.f32.mrf.mxu0
    %v4959 = vadd.f32 %v4910, %v4958
    %4960 = vmatmul.bf16.gmra.mxu0 %v4558
    %v4961 = vpop.f32.mrf.mxu0
    %v4962 = vadd.f32 %v4913, %v4961
    %v4963 = vpop.f32.mrf.mxu0
    %v4964 = vadd.f32 %v4915, %v4963
    %4965 = vmatmul.bf16.gmra.mxu0 %v4562
    %v4966 = vpop.f32.mrf.mxu0
    %v4967 = vadd.f32 %v4918, %v4966
    %v4968 = vpop.f32.mrf.mxu0
    %v4969 = vadd.f32 %v4920, %v4968
    %4970 = vdwg.mxu0
    %4971 = vmatpush.bf16.msra.mxu0 %v4791
    %4972 = vmatpush.bf16.msra.mxu0 %v4790
    %4973 = vmatpush.bf16.msra.mxu0 %v4789
    %4974 = vmatpush.bf16.msra.mxu0 %v4788
    %4975 = vmatpush.bf16.msra.mxu0 %v4787
    %4976 = vmatpush.bf16.msra.mxu0 %v4786
    %4977 = vmatpush.bf16.msra.mxu0 %v4785
    %4978 = vmatpush.bf16.msra.mxu0 %v4784
    %4979 = vmatmul.bf16.gmra.mxu0 %v4535
    %v4980 = vpop.f32.mrf.mxu0
    %v4981 = vadd.f32 %v4932, %v4980
    %v4982 = vpop.f32.mrf.mxu0
    %v4983 = vadd.f32 %v4934, %v4982
    %4984 = vmatmul.bf16.gmra.mxu0 %v4539
    %v4985 = vpop.f32.mrf.mxu0
    %v4986 = vadd.f32 %v4937, %v4985
    %v4987 = vpop.f32.mrf.mxu0
    %v4988 = vadd.f32 %v4939, %v4987
    %4989 = vmatmul.bf16.gmra.mxu0 %v4543
    %v4990 = vpop.f32.mrf.mxu0
    %v4991 = vadd.f32 %v4942, %v4990
    %v4992 = vpop.f32.mrf.mxu0
    %v4993 = vadd.f32 %v4944, %v4992
    %4994 = vmatmul.bf16.gmra.mxu0 %v4547
    %v4995 = vpop.f32.mrf.mxu0
    %v4996 = vadd.f32 %v4947, %v4995
    %v4997 = vpop.f32.mrf.mxu0
    %v4998 = vadd.f32 %v4949, %v4997
    %4999 = vmatmul.bf16.gmra.mxu0 %v4551
    %v5000 = vpop.f32.mrf.mxu0
    %v5001 = vadd.f32 %v4952, %v5000
    %v5002 = vpop.f32.mrf.mxu0
    %v5003 = vadd.f32 %v4954, %v5002
    %5004 = vmatmul.bf16.gmra.mxu0 %v4555
    %v5005 = vpop.f32.mrf.mxu0
    %v5006 = vadd.f32 %v4957, %v5005
    %v5007 = vpop.f32.mrf.mxu0
    %v5008 = vadd.f32 %v4959, %v5007
    %5009 = vmatmul.bf16.gmra.mxu0 %v4559
    %v5010 = vpop.f32.mrf.mxu0
    %v5011 = vadd.f32 %v4962, %v5010
    %v5012 = vpop.f32.mrf.mxu0
    %v5013 = vadd.f32 %v4964, %v5012
    %5014 = vmatmul.bf16.gmra.mxu0 %v4563
    %v5015 = vpop.f32.mrf.mxu0
    %v5016 = vadd.f32 %v4967, %v5015
    %v5017 = vpop.f32.mrf.mxu0
    %v5018 = vadd.f32 %v4969, %v5017
    %5019 = vdwg.mxu0
    %v5020 = vpack.c.bf16 %v4981, %v4981
    %v5021 = vpack.c.bf16 %v4983, %v4983
    %v5022 = vpack.c.bf16 %v4986, %v4986
    %v5023 = vpack.c.bf16 %v4988, %v4988
    %v5024 = vpack.c.bf16 %v4991, %v4991
    %v5025 = vpack.c.bf16 %v4993, %v4993
    %v5026 = vpack.c.bf16 %v4996, %v4996
    %v5027 = vpack.c.bf16 %v4998, %v4998
    %v5028 = vpack.c.bf16 %v5001, %v5001
    %v5029 = vpack.c.bf16 %v5003, %v5003
    %v5030 = vpack.c.bf16 %v5006, %v5006
    %v5031 = vpack.c.bf16 %v5008, %v5008
    %v5032 = vpack.c.bf16 %v5011, %v5011
    %v5033 = vpack.c.bf16 %v5013, %v5013
    %v5034 = vpack.c.bf16 %v5016, %v5016
    %v5035 = vpack.c.bf16 %v5018, %v5018
    %5036 = vst [vmem:[%s7] sm:$0xf] %v5020
    %5037 = vst [vmem:[%s7 + $0x4] sm:$0xf] %v5021
    %5038 = vst [vmem:[%s7 + $0x8] sm:$0xf] %v5022
    %5039 = vst [vmem:[%s7 + $0xc] sm:$0xf] %v5023
    %5040 = vst [vmem:[%s7 + $0x10] sm:$0xf] %v5024
    %5041 = vst [vmem:[%s7 + $0x14] sm:$0xf] %v5025
    %5042 = vst [vmem:[%s7 + $0x18] sm:$0xf] %v5026
    %5043 = vst [vmem:[%s7 + $0x1c] sm:$0xf] %v5027
    %5044 = vst [vmem:[%s7 + $0x20] sm:$0xf] %v5028
    %5045 = vst [vmem:[%s7 + $0x24] sm:$0xf] %v5029
    %5046 = vst [vmem:[%s7 + $0x28] sm:$0xf] %v5030
    %5047 = vst [vmem:[%s7 + $0x2c] sm:$0xf] %v5031
    %5048 = vst [vmem:[%s7 + $0x30] sm:$0xf] %v5032
    %5049 = vst [vmem:[%s7 + $0x34] sm:$0xf] %v5033
    %5050 = vst [vmem:[%s7 + $0x38] sm:$0xf] %v5034
    %5051 = vst [vmem:[%s7 + $0x3c] sm:$0xf] %v5035
    // Predicated region
    $region38: #{mlp_forward.1} parent=1 // pred_check
      _
    $region39: #{mlp_forward.1} parent=1 // pred_check_branch
      %5053 = sbr.rel (0) target = $region41
    $region40: #{mlp_forward.1} parent=1 // pred_region
      _
    $region41: #{mlp_forward.1} parent=1 // pred_fallthru
      _
    // Predicated region
    $region42: #{mlp_forward.1} parent=1 // pred_check
      _
    $region43: #{mlp_forward.1} parent=1 // pred_check_branch
      %5055 = sbr.rel (0) target = $region45
    $region44: #{mlp_forward.1} parent=1 // pred_region
      _
    $region45: #{mlp_forward.1} parent=1 // pred_fallthru
      _
    %5056 = vsyncpa [#allocation3], 1
    %5057 = vsyncpa [#allocation5], 1

</llo_original>
